<compile_context>
chip_gen: v7x
topology: tpu7x:2x2x1
jax: 0.10.0
libtpu: 0.0.40
codegen_flags: <defaults>
</compile_context>

<pallas_src>
import math
from functools import partial

import jax
import jax.numpy as jnp
from jax import lax
from jax.experimental import pallas as pl
from jax.experimental.pallas import tpu as pltpu


# --------------------------------------------------------------------------------------
# Fused Pallas kernel (one grid step == block_images images; everything stays in VMEM)
# --------------------------------------------------------------------------------------

def _make_fused_kernel(bblk, hwo, c3):
    """bblk: images per grid step; hwo: surviving spatial positions (8*8); c3: final channels."""

    def kernel(x_ref, wf_ref, fcw_ref, fcb_ref, o_ref):
        # ---- fused conv1(3x3,p1) -> down12(1x1,s2) -> down23(1x1,s2) as ONE matmul.
        #      The residual stacks are identity, so only conv1 outputs at stride-4
        #      positions are ever consumed; the wrapper packed exactly those positions'
        #      27 conv taps along the lane axis and pre-multiplied the three weights.
        y = jnp.dot(x_ref[...], wf_ref[...],
                    preferred_element_type=jnp.float32)            # (bblk*hwo, c3)
        y3 = y.reshape(bblk, hwo, c3)                               # per-image view

        # ---- head (f32): InstanceNorm2d(affine=False, eps=1e-5) -> ReLU ->
        #      AvgPool2d(8, stride=1) on the 8x8 map (== global spatial mean) -> Linear
        mean = jnp.mean(y3, axis=1, keepdims=True)                  # (bblk, 1, c3)
        msq = jnp.mean(y3 * y3, axis=1, keepdims=True)              # single data pass
        var = jnp.maximum(msq - mean * mean, 0.0)                   # biased variance, clamped
        xn = (y3 - mean) * lax.rsqrt(var + 1e-5)                    # rsqrt -> EUP slot
        xr = jnp.maximum(xn, 0.0)
        pooled = jnp.mean(xr, axis=1)                               # (bblk, c3)
        logits = jnp.dot(pooled, fcw_ref[...],
                         preferred_element_type=jnp.float32) + fcb_ref[...]
        o_ref[...] = logits.astype(o_ref.dtype)                     # (bblk, 128) lane-dense

    return kernel


# --------------------------------------------------------------------------------------
# Wrapper (layout plumbing + tiny f32 weight fusion; all activation FLOPs in the kernel)
# --------------------------------------------------------------------------------------

def _pack_conv_taps(x_nhwc, ho, wo):
    """Emit only the 9 used conv taps at the stride-4 surviving output positions.

    Returns (N, ho*wo, 9*C) with
        out[n, p*wo + q, (kh*3 + kw)*C + c] == padded_x[n, 4*p + kh, 4*q + kw, c]
    so the fused (27 -> 64) matmul consumes a lane-dense contraction axis.
    """
    n, h, w, c = x_nhwc.shape
    xp = jnp.pad(x_nhwc, ((0, 0), (1, 3), (1, 3), (0, 0)))   # 1 = conv pad; extra zeros unread
    xb = xp.reshape(n, (h + 4) // 4, 4, (w + 4) // 4, 4, c)
    xb = xb[:, :ho, :3, :wo, :3, :]                           # (n, ho, 3, wo, 3, c)
    return xb.transpose(0, 1, 3, 2, 4, 5).reshape(n, ho * wo, 9 * c)


@partial(jax.jit, static_argnames=("matmul_dtype", "block_images"))
def wtii_preact_resnet_forward(x_nchw, params, *, matmul_dtype=jnp.bfloat16,
                               block_images=32):
    n = x_nchw.shape[0]
    h, w = x_nchw.shape[2], x_nchw.shape[3]
    assert h == 32 and w == 32, "AvgPool2d(8) requires a 32x32 input (8x8 final map)"

    cin = params['conv1'].shape[1]
    c1 = params['conv1'].shape[0]
    c2 = params['down12'].shape[0]
    c3 = params['down23'].shape[0]
    nc = params['fc_w'].shape[0]
    ho, wo = h // 4, w // 4
    hwo = ho * wo
    kdim = 9 * cin                                   # 27 conv taps packed along lanes

    bblk = int(block_images)
    assert bblk % 8 == 0, "block_images must keep the output sublane dim a multiple of 8"
    n_pad = pl.cdiv(n, bblk) * bblk
    grid = n_pad // bblk

    # ---- inputs: NCHW -> NHWC, pad batch to a multiple of the image block, pack taps
    x = jnp.transpose(x_nchw, (0, 2, 3, 1)).astype(jnp.float32)
    if n_pad != n:
        x = jnp.pad(x, ((0, n_pad - n), (0, 0), (0, 0), (0, 0)))
    xps = _pack_conv_taps(x, ho, wo).reshape(n_pad * hwo, kdim).astype(matmul_dtype)

    # ---- pre-fuse conv1 -> down12 -> down23 in f32 (identity stacks, no nonlinearity
    #      between the linear stages), cast once to the matmul dtype.
    w1 = jnp.transpose(params['conv1'], (2, 3, 1, 0)).reshape(kdim, c1)
    w12 = params['down12'].reshape(c2, c1).T
    w23 = params['down23'].reshape(c3, c2).T
    wf = (w1 @ w12 @ w23).astype(matmul_dtype)                       # (27, c3)

    # ---- lane-dense FC: zero-pad outputs to 128 lanes, slice back in the wrapper
    ncp = 128
    assert nc <= ncp
    fcw = jnp.zeros((c3, ncp), jnp.float32).at[:, :nc].set(params['fc_w'].T)
    fcb = jnp.zeros((1, ncp), jnp.float32).at[:, :nc].set(params['fc_b'][None, :])

    out = pl.pallas_call(
        _make_fused_kernel(bblk, hwo, c3),
        out_shape=jax.ShapeDtypeStruct((n_pad, ncp), jnp.float32),
        grid=(grid,),
        in_specs=[
            pl.BlockSpec((bblk * hwo, kdim), lambda i: (i, 0)),
            pl.BlockSpec((kdim, c3), lambda i: (0, 0)),
            pl.BlockSpec((c3, ncp), lambda i: (0, 0)),
            pl.BlockSpec((1, ncp), lambda i: (0, 0)),
        ],
        out_specs=pl.BlockSpec((bblk, ncp), lambda i: (i, 0)),
        compiler_params=pltpu.CompilerParams(
            dimension_semantics=("parallel",)),      # v7x: image blocks on both TCs
    )(xps, wf, fcw, fcb)
    return out[:n, :nc]


# --------------------------------------------------------------------------------------
# Params + pure-JAX reference
# --------------------------------------------------------------------------------------

def build_params(key, inplanes=16, num_classes=10):
    ks = jax.random.split(key, 5)
    # conv weights ~ N(0, sqrt(2 / (k*k*out_channels)))  (matches the module's init)
    conv1 = jax.random.normal(ks[0], (inplanes, 3, 3, 3), jnp.float32) * math.sqrt(
        2.0 / (3 * 3 * inplanes))
    down12 = jax.random.normal(ks[1], (2 * inplanes, inplanes, 1, 1), jnp.float32) * math.sqrt(
        2.0 / (2 * inplanes))
    down23 = jax.random.normal(ks[2], (4 * inplanes, 2 * inplanes, 1, 1), jnp.float32) * math.sqrt(
        2.0 / (4 * inplanes))
    bound = 1.0 / math.sqrt(4 * inplanes)
    fc_w = jax.random.uniform(ks[3], (num_classes, 4 * inplanes), jnp.float32, -bound, bound)
    fc_b = jax.random.uniform(ks[4], (num_classes,), jnp.float32, -bound, bound)
    return dict(conv1=conv1, down12=down12, down23=down23, fc_w=fc_w, fc_b=fc_b)


def reference_forward(x_nchw, params):
    """Pure-JAX f32 reference (HIGHEST precision) of the same semantics."""
    dn = ('NCHW', 'OIHW', 'NCHW')
    hp = lax.Precision.HIGHEST
    y = lax.conv_general_dilated(x_nchw, params['conv1'], (1, 1), ((1, 1), (1, 1)),
                                 dimension_numbers=dn, precision=hp)
    y = lax.conv_general_dilated(y, params['down12'], (2, 2), 'VALID',
                                 dimension_numbers=dn, precision=hp)
    y = lax.conv_general_dilated(y, params['down23'], (2, 2), 'VALID',
                                 dimension_numbers=dn, precision=hp)
    mean = y.mean(axis=(2, 3), keepdims=True)
    var = ((y - mean) ** 2).mean(axis=(2, 3), keepdims=True)
    y = jnp.maximum((y - mean) * lax.rsqrt(var + 1e-5), 0.0)
    pooled = y.mean(axis=(2, 3))
    return jnp.matmul(pooled, params['fc_w'].T, precision=hp) + params['fc_b']


if __name__ == "__main__":
    key = jax.random.PRNGKey(0)
    kp, kx = jax.random.split(key)
    params = build_params(kp)

    # CIFAR-style input: 32x32 so AvgPool2d(8) sees an 8x8 map after the two /2 stages.
    x = jax.random.normal(kx, (2, 3, 32, 32), jnp.float32)
    ref = reference_forward(x, params)

    # All-f32 matmul path: tight tolerance (catches tap packing / stride folding /
    # weight-fusion bugs; batch-padding path is exercised since 2 < block_images).
    out_f32 = jax.block_until_ready(
        wtii_preact_resnet_forward(x, params, matmul_dtype=jnp.float32))
    assert out_f32.shape == (2, 10), out_f32.shape
    assert jnp.allclose(out_f32, ref, atol=1e-3, rtol=1e-3), (out_f32, ref)

    # Default bf16-matmul path (MXU-native on v5e/v6e/v7x), larger odd batch so multiple
    # grid steps AND tail padding are both exercised.
    x_big = jax.random.normal(kx, (37, 3, 32, 32), jnp.float32)
    ref_big = reference_forward(x_big, params)
    out_big = jax.block_until_ready(
        wtii_preact_resnet_forward(x_big, params, block_images=16))
    assert out_big.shape == (37, 10), out_big.shape
    assert jnp.allclose(out_big, ref_big, atol=3e-2, rtol=3e-2), (out_big, ref_big)

    print("KERNEL_OK")
</pallas_src>

<mosaic_0001>
module attributes {stable_mosaic.version = 11 : i64} {
  func.func @kernel(%arg0: i32, %arg1: memref<2048x27xf32, #tpu.memory_space<vmem>>, %arg2: memref<27x64xf32, #tpu.memory_space<vmem>>, %arg3: memref<64x128xf32, #tpu.memory_space<vmem>>, %arg4: memref<1x128xf32, #tpu.memory_space<vmem>>, %arg5: memref<32x128xf32, #tpu.memory_space<vmem>>) attributes {dimension_semantics = [#tpu.dimension_semantics<parallel>], iteration_bounds = array<i64: 1>, scalar_prefetch = 0 : i64, scratch_operands = 0 : i64, tpu.core_type = #tpu.core_type<tc>, window_params = [{transform_indices = @transform_0, window_bounds = array<i64: 2048, 27>}, {pipeline_mode = #tpu.pipeline_mode<synchronous>, transform_indices = @transform_1, window_bounds = array<i64: 27, 64>}, {pipeline_mode = #tpu.pipeline_mode<synchronous>, transform_indices = @transform_2, window_bounds = array<i64: 64, 128>}, {pipeline_mode = #tpu.pipeline_mode<synchronous>, transform_indices = @transform_3, window_bounds = array<i64: 1, 128>}, {transform_indices = @transform_4, window_bounds = array<i64: 32, 128>}]} {
    %c0 = arith.constant 0 : index
    %c0_0 = arith.constant 0 : index
    %0 = vector.load %arg1[%c0, %c0_0] : memref<2048x27xf32, #tpu.memory_space<vmem>>, vector<2048x27xf32>
    %c0_1 = arith.constant 0 : index
    %c0_2 = arith.constant 0 : index
    %1 = vector.load %arg2[%c0_1, %c0_2] : memref<27x64xf32, #tpu.memory_space<vmem>>, vector<27x64xf32>
    %cst = arith.constant dense<0.000000e+00> : vector<2048x64xf32>
    %2 = tpu.matmul %0, %1, %cst {dimension_numbers = #tpu.dot_dimension_numbers<[1], [0], [0], [1], [0, 0, 1, 1], [], []>} : vector<2048x27xf32>, vector<27x64xf32>, vector<2048x64xf32> -> vector<2048x64xf32>
    %3 = vector.shape_cast %2 : vector<2048x64xf32> to vector<32x64x64xf32>
    %cst_3 = arith.constant dense<0.000000e+00> : vector<32x64xf32>
    %4 = vector.multi_reduction <add>, %3, %cst_3 [1] : vector<32x64x64xf32> to vector<32x64xf32>
    %5 = vector.shape_cast %4 : vector<32x64xf32> to vector<32x1x64xf32>
    %cst_4 = arith.constant 6.400000e+01 : f32
    %6 = vector.broadcast %cst_4 : f32 to vector<32x1x64xf32>
    %7 = arith.divf %5, %6 : vector<32x1x64xf32>
    %8 = arith.mulf %3, %3 : vector<32x64x64xf32>
    %cst_5 = arith.constant dense<0.000000e+00> : vector<32x64xf32>
    %9 = vector.multi_reduction <add>, %8, %cst_5 [1] : vector<32x64x64xf32> to vector<32x64xf32>
    %10 = vector.shape_cast %9 : vector<32x64xf32> to vector<32x1x64xf32>
    %cst_6 = arith.constant 6.400000e+01 : f32
    %11 = vector.broadcast %cst_6 : f32 to vector<32x1x64xf32>
    %12 = arith.divf %10, %11 : vector<32x1x64xf32>
    %13 = arith.mulf %7, %7 : vector<32x1x64xf32>
    %14 = arith.subf %12, %13 : vector<32x1x64xf32>
    %cst_7 = arith.constant 0.000000e+00 : f32
    %15 = vector.broadcast %cst_7 : f32 to vector<32x1x64xf32>
    %16 = arith.maximumf %14, %15 : vector<32x1x64xf32>
    %17 = vector.broadcast %7 : vector<32x1x64xf32> to vector<32x64x64xf32>
    %18 = arith.subf %3, %17 : vector<32x64x64xf32>
    %cst_8 = arith.constant 9.99999974E-6 : f32
    %19 = vector.broadcast %cst_8 : f32 to vector<32x1x64xf32>
    %20 = arith.addf %16, %19 : vector<32x1x64xf32>
    %21 = math.rsqrt %20 : vector<32x1x64xf32>
    %22 = vector.broadcast %21 : vector<32x1x64xf32> to vector<32x64x64xf32>
    %23 = arith.mulf %18, %22 : vector<32x64x64xf32>
    %cst_9 = arith.constant 0.000000e+00 : f32
    %24 = vector.broadcast %cst_9 : f32 to vector<32x64x64xf32>
    %25 = arith.maximumf %23, %24 : vector<32x64x64xf32>
    %cst_10 = arith.constant dense<0.000000e+00> : vector<32x64xf32>
    %26 = vector.multi_reduction <add>, %25, %cst_10 [1] : vector<32x64x64xf32> to vector<32x64xf32>
    %cst_11 = arith.constant 6.400000e+01 : f32
    %27 = vector.broadcast %cst_11 : f32 to vector<32x64xf32>
    %28 = arith.divf %26, %27 : vector<32x64xf32>
    %c0_12 = arith.constant 0 : index
    %c0_13 = arith.constant 0 : index
    %29 = vector.load %arg3[%c0_12, %c0_13] : memref<64x128xf32, #tpu.memory_space<vmem>>, vector<64x128xf32>
    %cst_14 = arith.constant dense<0.000000e+00> : vector<32x128xf32>
    %30 = tpu.matmul %28, %29, %cst_14 {dimension_numbers = #tpu.dot_dimension_numbers<[1], [0], [0], [1], [0, 0, 1, 1], [], []>} : vector<32x64xf32>, vector<64x128xf32>, vector<32x128xf32> -> vector<32x128xf32>
    %c0_15 = arith.constant 0 : index
    %c0_16 = arith.constant 0 : index
    %31 = vector.load %arg4[%c0_15, %c0_16] : memref<1x128xf32, #tpu.memory_space<vmem>>, vector<1x128xf32>
    %32 = vector.broadcast %31 : vector<1x128xf32> to vector<32x128xf32>
    %33 = arith.addf %30, %32 : vector<32x128xf32>
    %c0_17 = arith.constant 0 : index
    %c0_18 = arith.constant 0 : index
    %34 = vector.load %arg5[%c0_17, %c0_18] : memref<32x128xf32, #tpu.memory_space<vmem>>, vector<32x128xf32>
    tpu.vector_store %arg5[%c0_17, %c0_18], %33 {strides = array<i32>} : memref<32x128xf32, #tpu.memory_space<vmem>>, vector<32x128xf32>,
    return
  }
  func.func @transform_0(%arg0: i32) -> (i32, i32) {
    %c0_i32 = arith.constant 0 : i32
    %c0_i32_0 = arith.constant 0 : i32
    return %arg0, %c0_i32 : i32, i32
  }
  func.func @transform_1(%arg0: i32) -> (i32, i32) {
    %c0_i32 = arith.constant 0 : i32
    %c0_i32_0 = arith.constant 0 : i32
    %c0_i32_1 = arith.constant 0 : i32
    return %c0_i32, %c0_i32_0 : i32, i32
  }
  func.func @transform_2(%arg0: i32) -> (i32, i32) {
    %c0_i32 = arith.constant 0 : i32
    %c0_i32_0 = arith.constant 0 : i32
    %c0_i32_1 = arith.constant 0 : i32
    return %c0_i32, %c0_i32_0 : i32, i32
  }
  func.func @transform_3(%arg0: i32) -> (i32, i32) {
    %c0_i32 = arith.constant 0 : i32
    %c0_i32_0 = arith.constant 0 : i32
    %c0_i32_1 = arith.constant 0 : i32
    return %c0_i32, %c0_i32_0 : i32, i32
  }
  func.func @transform_4(%arg0: i32) -> (i32, i32) {
    %c0_i32 = arith.constant 0 : i32
    %c0_i32_0 = arith.constant 0 : i32
    return %arg0, %c0_i32 : i32, i32
  }
}

</mosaic_0001>

<llo_original>
// kernel: wtii_preact_resnet_forward.1
$region0: #{wtii_preact_resnet_forward.1}
  #allocation0 [shape = 'u32[]', space=smem, size = 0x4, offset = 0x4, fixed_abs, tag = 'smem constant byte address 0x4 - core index']
  #allocation1 [shape = 'u32[144,128]{1,0:T(1,128)}', space=vmem, size = 0x12000, scoped, tag = 'internal scratch']
  %s0 = inlined_call_operand.vmem [shape: f32[2048,27], index: 0, kind: input, shape index: {}]
  %s1 = inlined_call_operand.vmem [shape: f32[27,64], index: 1, kind: input, shape index: {}]
  %s2 = inlined_call_operand.vmem [shape: f32[64,128], index: 2, kind: input, shape index: {}]
  %s3 = inlined_call_operand.vmem [shape: f32[1,128], index: 3, kind: input, shape index: {}]
  %s4 = inlined_call_operand.vmem [shape: f32[32,128], index: 4, kind: output, shape index: {}]
  %s5 = sld [smem:[#allocation0]]
  $region26: #{wtii_preact_resnet_forward.1} parent=0
    _
  %s7 = ssub.s32 1, %s5
  %s8 = scalar_select 0, %s7, %s5
  // Predicated region
  $region2: #{wtii_preact_resnet_forward.1} parent=0 // pred_check
    _
  $region3: #{wtii_preact_resnet_forward.1} parent=0 // pred_check_branch
    %10 = sbr.rel (0) target = $region5
  $region4: #{wtii_preact_resnet_forward.1} parent=0 // pred_region
    _
  $region5: #{wtii_preact_resnet_forward.1} parent=0 // pred_fallthru
    _
  // Predicated region
  $region6: #{wtii_preact_resnet_forward.1} parent=0 // pred_check
    _
  $region7: #{wtii_preact_resnet_forward.1} parent=0 // pred_check_branch
    %12 = sbr.rel (0) target = $region9
  $region8: #{wtii_preact_resnet_forward.1} parent=0 // pred_region
    _
  $region9: #{wtii_preact_resnet_forward.1} parent=0 // pred_fallthru
    _
  // Predicated region
  $region10: #{wtii_preact_resnet_forward.1} parent=0 // pred_check
    _
  $region11: #{wtii_preact_resnet_forward.1} parent=0 // pred_check_branch
    %14 = sbr.rel (0) target = $region13
  $region12: #{wtii_preact_resnet_forward.1} parent=0 // pred_region
    _
  $region13: #{wtii_preact_resnet_forward.1} parent=0 // pred_fallthru
    _
  // Predicated region
  $region14: #{wtii_preact_resnet_forward.1} parent=0 // pred_check
    _
  $region15: #{wtii_preact_resnet_forward.1} parent=0 // pred_check_branch
    %16 = sbr.rel (0) target = $region17
  $region16: #{wtii_preact_resnet_forward.1} parent=0 // pred_region
    _
  $region17: #{wtii_preact_resnet_forward.1} parent=0 // pred_fallthru
    _
  %v17 = vld [vmem:[%s0] sm:$0xff]
  %v18 = vld [vmem:[%s0 + $0x8] sm:$0xff]
  %v19 = vld [vmem:[%s0 + $0x10] sm:$0xff]
  %v20 = vld [vmem:[%s0 + $0x18] sm:$0xff]
  %v21 = vld [vmem:[%s0 + $0x20] sm:$0xff]
  %v22 = vld [vmem:[%s0 + $0x28] sm:$0xff]
  %v23 = vld [vmem:[%s0 + $0x30] sm:$0xff]
  %v24 = vld [vmem:[%s0 + $0x38] sm:$0xff]
  %v25 = vld [vmem:[%s0 + $0x40] sm:$0xff]
  %v26 = vld [vmem:[%s0 + $0x48] sm:$0xff]
  %v27 = vld [vmem:[%s0 + $0x50] sm:$0xff]
  %v28 = vld [vmem:[%s0 + $0x58] sm:$0xff]
  %v29 = vld [vmem:[%s0 + $0x60] sm:$0xff]
  %v30 = vld [vmem:[%s0 + $0x68] sm:$0xff]
  %v31 = vld [vmem:[%s0 + $0x70] sm:$0xff]
  %v32 = vld [vmem:[%s0 + $0x78] sm:$0xff]
  %v33 = vld [vmem:[%s0 + $0x80] sm:$0xff]
  %v34 = vld [vmem:[%s0 + $0x88] sm:$0xff]
  %v35 = vld [vmem:[%s0 + $0x90] sm:$0xff]
  %v36 = vld [vmem:[%s0 + $0x98] sm:$0xff]
  %v37 = vld [vmem:[%s0 + $0xa0] sm:$0xff]
  %v38 = vld [vmem:[%s0 + $0xa8] sm:$0xff]
  %v39 = vld [vmem:[%s0 + $0xb0] sm:$0xff]
  %v40 = vld [vmem:[%s0 + $0xb8] sm:$0xff]
  %v41 = vld [vmem:[%s0 + $0xc0] sm:$0xff]
  %v42 = vld [vmem:[%s0 + $0xc8] sm:$0xff]
  %v43 = vld [vmem:[%s0 + $0xd0] sm:$0xff]
  %v44 = vld [vmem:[%s0 + $0xd8] sm:$0xff]
  %v45 = vld [vmem:[%s0 + $0xe0] sm:$0xff]
  %v46 = vld [vmem:[%s0 + $0xe8] sm:$0xff]
  %v47 = vld [vmem:[%s0 + $0xf0] sm:$0xff]
  %v48 = vld [vmem:[%s0 + $0xf8] sm:$0xff]
  %v49 = vld [vmem:[%s0 + $0x100] sm:$0xff]
  %v50 = vld [vmem:[%s0 + $0x108] sm:$0xff]
  %v51 = vld [vmem:[%s0 + $0x110] sm:$0xff]
  %v52 = vld [vmem:[%s0 + $0x118] sm:$0xff]
  %v53 = vld [vmem:[%s0 + $0x120] sm:$0xff]
  %v54 = vld [vmem:[%s0 + $0x128] sm:$0xff]
  %v55 = vld [vmem:[%s0 + $0x130] sm:$0xff]
  %v56 = vld [vmem:[%s0 + $0x138] sm:$0xff]
  %v57 = vld [vmem:[%s0 + $0x140] sm:$0xff]
  %v58 = vld [vmem:[%s0 + $0x148] sm:$0xff]
  %v59 = vld [vmem:[%s0 + $0x150] sm:$0xff]
  %v60 = vld [vmem:[%s0 + $0x158] sm:$0xff]
  %v61 = vld [vmem:[%s0 + $0x160] sm:$0xff]
  %v62 = vld [vmem:[%s0 + $0x168] sm:$0xff]
  %v63 = vld [vmem:[%s0 + $0x170] sm:$0xff]
  %v64 = vld [vmem:[%s0 + $0x178] sm:$0xff]
  %v65 = vld [vmem:[%s0 + $0x180] sm:$0xff]
  %v66 = vld [vmem:[%s0 + $0x188] sm:$0xff]
  %v67 = vld [vmem:[%s0 + $0x190] sm:$0xff]
  %v68 = vld [vmem:[%s0 + $0x198] sm:$0xff]
  %v69 = vld [vmem:[%s0 + $0x1a0] sm:$0xff]
  %v70 = vld [vmem:[%s0 + $0x1a8] sm:$0xff]
  %v71 = vld [vmem:[%s0 + $0x1b0] sm:$0xff]
  %v72 = vld [vmem:[%s0 + $0x1b8] sm:$0xff]
  %v73 = vld [vmem:[%s0 + $0x1c0] sm:$0xff]
  %v74 = vld [vmem:[%s0 + $0x1c8] sm:$0xff]
  %v75 = vld [vmem:[%s0 + $0x1d0] sm:$0xff]
  %v76 = vld [vmem:[%s0 + $0x1d8] sm:$0xff]
  %v77 = vld [vmem:[%s0 + $0x1e0] sm:$0xff]
  %v78 = vld [vmem:[%s0 + $0x1e8] sm:$0xff]
  %v79 = vld [vmem:[%s0 + $0x1f0] sm:$0xff]
  %v80 = vld [vmem:[%s0 + $0x1f8] sm:$0xff]
  %v81 = vld [vmem:[%s0 + $0x200] sm:$0xff]
  %v82 = vld [vmem:[%s0 + $0x208] sm:$0xff]
  %v83 = vld [vmem:[%s0 + $0x210] sm:$0xff]
  %v84 = vld [vmem:[%s0 + $0x218] sm:$0xff]
  %v85 = vld [vmem:[%s0 + $0x220] sm:$0xff]
  %v86 = vld [vmem:[%s0 + $0x228] sm:$0xff]
  %v87 = vld [vmem:[%s0 + $0x230] sm:$0xff]
  %v88 = vld [vmem:[%s0 + $0x238] sm:$0xff]
  %v89 = vld [vmem:[%s0 + $0x240] sm:$0xff]
  %v90 = vld [vmem:[%s0 + $0x248] sm:$0xff]
  %v91 = vld [vmem:[%s0 + $0x250] sm:$0xff]
  %v92 = vld [vmem:[%s0 + $0x258] sm:$0xff]
  %v93 = vld [vmem:[%s0 + $0x260] sm:$0xff]
  %v94 = vld [vmem:[%s0 + $0x268] sm:$0xff]
  %v95 = vld [vmem:[%s0 + $0x270] sm:$0xff]
  %v96 = vld [vmem:[%s0 + $0x278] sm:$0xff]
  %v97 = vld [vmem:[%s0 + $0x280] sm:$0xff]
  %v98 = vld [vmem:[%s0 + $0x288] sm:$0xff]
  %v99 = vld [vmem:[%s0 + $0x290] sm:$0xff]
  %v100 = vld [vmem:[%s0 + $0x298] sm:$0xff]
  %v101 = vld [vmem:[%s0 + $0x2a0] sm:$0xff]
  %v102 = vld [vmem:[%s0 + $0x2a8] sm:$0xff]
  %v103 = vld [vmem:[%s0 + $0x2b0] sm:$0xff]
  %v104 = vld [vmem:[%s0 + $0x2b8] sm:$0xff]
  %v105 = vld [vmem:[%s0 + $0x2c0] sm:$0xff]
  %v106 = vld [vmem:[%s0 + $0x2c8] sm:$0xff]
  %v107 = vld [vmem:[%s0 + $0x2d0] sm:$0xff]
  %v108 = vld [vmem:[%s0 + $0x2d8] sm:$0xff]
  %v109 = vld [vmem:[%s0 + $0x2e0] sm:$0xff]
  %v110 = vld [vmem:[%s0 + $0x2e8] sm:$0xff]
  %v111 = vld [vmem:[%s0 + $0x2f0] sm:$0xff]
  %v112 = vld [vmem:[%s0 + $0x2f8] sm:$0xff]
  %v113 = vld [vmem:[%s0 + $0x300] sm:$0xff]
  %v114 = vld [vmem:[%s0 + $0x308] sm:$0xff]
  %v115 = vld [vmem:[%s0 + $0x310] sm:$0xff]
  %v116 = vld [vmem:[%s0 + $0x318] sm:$0xff]
  %v117 = vld [vmem:[%s0 + $0x320] sm:$0xff]
  %v118 = vld [vmem:[%s0 + $0x328] sm:$0xff]
  %v119 = vld [vmem:[%s0 + $0x330] sm:$0xff]
  %v120 = vld [vmem:[%s0 + $0x338] sm:$0xff]
  %v121 = vld [vmem:[%s0 + $0x340] sm:$0xff]
  %v122 = vld [vmem:[%s0 + $0x348] sm:$0xff]
  %v123 = vld [vmem:[%s0 + $0x350] sm:$0xff]
  %v124 = vld [vmem:[%s0 + $0x358] sm:$0xff]
  %v125 = vld [vmem:[%s0 + $0x360] sm:$0xff]
  %v126 = vld [vmem:[%s0 + $0x368] sm:$0xff]
  %v127 = vld [vmem:[%s0 + $0x370] sm:$0xff]
  %v128 = vld [vmem:[%s0 + $0x378] sm:$0xff]
  %v129 = vld [vmem:[%s0 + $0x380] sm:$0xff]
  %v130 = vld [vmem:[%s0 + $0x388] sm:$0xff]
  %v131 = vld [vmem:[%s0 + $0x390] sm:$0xff]
  %v132 = vld [vmem:[%s0 + $0x398] sm:$0xff]
  %v133 = vld [vmem:[%s0 + $0x3a0] sm:$0xff]
  %v134 = vld [vmem:[%s0 + $0x3a8] sm:$0xff]
  %v135 = vld [vmem:[%s0 + $0x3b0] sm:$0xff]
  %v136 = vld [vmem:[%s0 + $0x3b8] sm:$0xff]
  %v137 = vld [vmem:[%s0 + $0x3c0] sm:$0xff]
  %v138 = vld [vmem:[%s0 + $0x3c8] sm:$0xff]
  %v139 = vld [vmem:[%s0 + $0x3d0] sm:$0xff]
  %v140 = vld [vmem:[%s0 + $0x3d8] sm:$0xff]
  %v141 = vld [vmem:[%s0 + $0x3e0] sm:$0xff]
  %v142 = vld [vmem:[%s0 + $0x3e8] sm:$0xff]
  %v143 = vld [vmem:[%s0 + $0x3f0] sm:$0xff]
  %v144 = vld [vmem:[%s0 + $0x3f8] sm:$0xff]
  %v145 = vld [vmem:[%s0 + $0x400] sm:$0xff]
  %v146 = vld [vmem:[%s0 + $0x408] sm:$0xff]
  %v147 = vld [vmem:[%s0 + $0x410] sm:$0xff]
  %v148 = vld [vmem:[%s0 + $0x418] sm:$0xff]
  %v149 = vld [vmem:[%s0 + $0x420] sm:$0xff]
  %v150 = vld [vmem:[%s0 + $0x428] sm:$0xff]
  %v151 = vld [vmem:[%s0 + $0x430] sm:$0xff]
  %v152 = vld [vmem:[%s0 + $0x438] sm:$0xff]
  %v153 = vld [vmem:[%s0 + $0x440] sm:$0xff]
  %v154 = vld [vmem:[%s0 + $0x448] sm:$0xff]
  %v155 = vld [vmem:[%s0 + $0x450] sm:$0xff]
  %v156 = vld [vmem:[%s0 + $0x458] sm:$0xff]
  %v157 = vld [vmem:[%s0 + $0x460] sm:$0xff]
  %v158 = vld [vmem:[%s0 + $0x468] sm:$0xff]
  %v159 = vld [vmem:[%s0 + $0x470] sm:$0xff]
  %v160 = vld [vmem:[%s0 + $0x478] sm:$0xff]
  %v161 = vld [vmem:[%s0 + $0x480] sm:$0xff]
  %v162 = vld [vmem:[%s0 + $0x488] sm:$0xff]
  %v163 = vld [vmem:[%s0 + $0x490] sm:$0xff]
  %v164 = vld [vmem:[%s0 + $0x498] sm:$0xff]
  %v165 = vld [vmem:[%s0 + $0x4a0] sm:$0xff]
  %v166 = vld [vmem:[%s0 + $0x4a8] sm:$0xff]
  %v167 = vld [vmem:[%s0 + $0x4b0] sm:$0xff]
  %v168 = vld [vmem:[%s0 + $0x4b8] sm:$0xff]
  %v169 = vld [vmem:[%s0 + $0x4c0] sm:$0xff]
  %v170 = vld [vmem:[%s0 + $0x4c8] sm:$0xff]
  %v171 = vld [vmem:[%s0 + $0x4d0] sm:$0xff]
  %v172 = vld [vmem:[%s0 + $0x4d8] sm:$0xff]
  %v173 = vld [vmem:[%s0 + $0x4e0] sm:$0xff]
  %v174 = vld [vmem:[%s0 + $0x4e8] sm:$0xff]
  %v175 = vld [vmem:[%s0 + $0x4f0] sm:$0xff]
  %v176 = vld [vmem:[%s0 + $0x4f8] sm:$0xff]
  %v177 = vld [vmem:[%s0 + $0x500] sm:$0xff]
  %v178 = vld [vmem:[%s0 + $0x508] sm:$0xff]
  %v179 = vld [vmem:[%s0 + $0x510] sm:$0xff]
  %v180 = vld [vmem:[%s0 + $0x518] sm:$0xff]
  %v181 = vld [vmem:[%s0 + $0x520] sm:$0xff]
  %v182 = vld [vmem:[%s0 + $0x528] sm:$0xff]
  %v183 = vld [vmem:[%s0 + $0x530] sm:$0xff]
  %v184 = vld [vmem:[%s0 + $0x538] sm:$0xff]
  %v185 = vld [vmem:[%s0 + $0x540] sm:$0xff]
  %v186 = vld [vmem:[%s0 + $0x548] sm:$0xff]
  %v187 = vld [vmem:[%s0 + $0x550] sm:$0xff]
  %v188 = vld [vmem:[%s0 + $0x558] sm:$0xff]
  %v189 = vld [vmem:[%s0 + $0x560] sm:$0xff]
  %v190 = vld [vmem:[%s0 + $0x568] sm:$0xff]
  %v191 = vld [vmem:[%s0 + $0x570] sm:$0xff]
  %v192 = vld [vmem:[%s0 + $0x578] sm:$0xff]
  %v193 = vld [vmem:[%s0 + $0x580] sm:$0xff]
  %v194 = vld [vmem:[%s0 + $0x588] sm:$0xff]
  %v195 = vld [vmem:[%s0 + $0x590] sm:$0xff]
  %v196 = vld [vmem:[%s0 + $0x598] sm:$0xff]
  %v197 = vld [vmem:[%s0 + $0x5a0] sm:$0xff]
  %v198 = vld [vmem:[%s0 + $0x5a8] sm:$0xff]
  %v199 = vld [vmem:[%s0 + $0x5b0] sm:$0xff]
  %v200 = vld [vmem:[%s0 + $0x5b8] sm:$0xff]
  %v201 = vld [vmem:[%s0 + $0x5c0] sm:$0xff]
  %v202 = vld [vmem:[%s0 + $0x5c8] sm:$0xff]
  %v203 = vld [vmem:[%s0 + $0x5d0] sm:$0xff]
  %v204 = vld [vmem:[%s0 + $0x5d8] sm:$0xff]
  %v205 = vld [vmem:[%s0 + $0x5e0] sm:$0xff]
  %v206 = vld [vmem:[%s0 + $0x5e8] sm:$0xff]
  %v207 = vld [vmem:[%s0 + $0x5f0] sm:$0xff]
  %v208 = vld [vmem:[%s0 + $0x5f8] sm:$0xff]
  %v209 = vld [vmem:[%s0 + $0x600] sm:$0xff]
  %v210 = vld [vmem:[%s0 + $0x608] sm:$0xff]
  %v211 = vld [vmem:[%s0 + $0x610] sm:$0xff]
  %v212 = vld [vmem:[%s0 + $0x618] sm:$0xff]
  %v213 = vld [vmem:[%s0 + $0x620] sm:$0xff]
  %v214 = vld [vmem:[%s0 + $0x628] sm:$0xff]
  %v215 = vld [vmem:[%s0 + $0x630] sm:$0xff]
  %v216 = vld [vmem:[%s0 + $0x638] sm:$0xff]
  %v217 = vld [vmem:[%s0 + $0x640] sm:$0xff]
  %v218 = vld [vmem:[%s0 + $0x648] sm:$0xff]
  %v219 = vld [vmem:[%s0 + $0x650] sm:$0xff]
  %v220 = vld [vmem:[%s0 + $0x658] sm:$0xff]
  %v221 = vld [vmem:[%s0 + $0x660] sm:$0xff]
  %v222 = vld [vmem:[%s0 + $0x668] sm:$0xff]
  %v223 = vld [vmem:[%s0 + $0x670] sm:$0xff]
  %v224 = vld [vmem:[%s0 + $0x678] sm:$0xff]
  %v225 = vld [vmem:[%s0 + $0x680] sm:$0xff]
  %v226 = vld [vmem:[%s0 + $0x688] sm:$0xff]
  %v227 = vld [vmem:[%s0 + $0x690] sm:$0xff]
  %v228 = vld [vmem:[%s0 + $0x698] sm:$0xff]
  %v229 = vld [vmem:[%s0 + $0x6a0] sm:$0xff]
  %v230 = vld [vmem:[%s0 + $0x6a8] sm:$0xff]
  %v231 = vld [vmem:[%s0 + $0x6b0] sm:$0xff]
  %v232 = vld [vmem:[%s0 + $0x6b8] sm:$0xff]
  %v233 = vld [vmem:[%s0 + $0x6c0] sm:$0xff]
  %v234 = vld [vmem:[%s0 + $0x6c8] sm:$0xff]
  %v235 = vld [vmem:[%s0 + $0x6d0] sm:$0xff]
  %v236 = vld [vmem:[%s0 + $0x6d8] sm:$0xff]
  %v237 = vld [vmem:[%s0 + $0x6e0] sm:$0xff]
  %v238 = vld [vmem:[%s0 + $0x6e8] sm:$0xff]
  %v239 = vld [vmem:[%s0 + $0x6f0] sm:$0xff]
  %v240 = vld [vmem:[%s0 + $0x6f8] sm:$0xff]
  %v241 = vld [vmem:[%s0 + $0x700] sm:$0xff]
  %v242 = vld [vmem:[%s0 + $0x708] sm:$0xff]
  %v243 = vld [vmem:[%s0 + $0x710] sm:$0xff]
  %v244 = vld [vmem:[%s0 + $0x718] sm:$0xff]
  %v245 = vld [vmem:[%s0 + $0x720] sm:$0xff]
  %v246 = vld [vmem:[%s0 + $0x728] sm:$0xff]
  %v247 = vld [vmem:[%s0 + $0x730] sm:$0xff]
  %v248 = vld [vmem:[%s0 + $0x738] sm:$0xff]
  %v249 = vld [vmem:[%s0 + $0x740] sm:$0xff]
  %v250 = vld [vmem:[%s0 + $0x748] sm:$0xff]
  %v251 = vld [vmem:[%s0 + $0x750] sm:$0xff]
  %v252 = vld [vmem:[%s0 + $0x758] sm:$0xff]
  %v253 = vld [vmem:[%s0 + $0x760] sm:$0xff]
  %v254 = vld [vmem:[%s0 + $0x768] sm:$0xff]
  %v255 = vld [vmem:[%s0 + $0x770] sm:$0xff]
  %v256 = vld [vmem:[%s0 + $0x778] sm:$0xff]
  %v257 = vld [vmem:[%s0 + $0x780] sm:$0xff]
  %v258 = vld [vmem:[%s0 + $0x788] sm:$0xff]
  %v259 = vld [vmem:[%s0 + $0x790] sm:$0xff]
  %v260 = vld [vmem:[%s0 + $0x798] sm:$0xff]
  %v261 = vld [vmem:[%s0 + $0x7a0] sm:$0xff]
  %v262 = vld [vmem:[%s0 + $0x7a8] sm:$0xff]
  %v263 = vld [vmem:[%s0 + $0x7b0] sm:$0xff]
  %v264 = vld [vmem:[%s0 + $0x7b8] sm:$0xff]
  %v265 = vld [vmem:[%s0 + $0x7c0] sm:$0xff]
  %v266 = vld [vmem:[%s0 + $0x7c8] sm:$0xff]
  %v267 = vld [vmem:[%s0 + $0x7d0] sm:$0xff]
  %v268 = vld [vmem:[%s0 + $0x7d8] sm:$0xff]
  %v269 = vld [vmem:[%s0 + $0x7e0] sm:$0xff]
  %v270 = vld [vmem:[%s0 + $0x7e8] sm:$0xff]
  %v271 = vld [vmem:[%s0 + $0x7f0] sm:$0xff]
  %v272 = vld [vmem:[%s0 + $0x7f8] sm:$0xff]
  %v273 = vld [vmem:[%s1] sm:$0xff]
  %v274 = vld [vmem:[%s1 + $0x8] sm:$0xff]
  %v275 = vld [vmem:[%s1 + $0x10] sm:$0xff]
  %v276 = vld [vmem:[%s1 + $0x18] sm:$0x7]
  %vm277 = vcmask 220160
  %v279 = vsel %vm277, %v17, 0
  %v282 = vsel %vm277, %v18, 0
  %v285 = vsel %vm277, %v19, 0
  %v288 = vsel %vm277, %v20, 0
  %v291 = vsel %vm277, %v21, 0
  %v294 = vsel %vm277, %v22, 0
  %v297 = vsel %vm277, %v23, 0
  %v300 = vsel %vm277, %v24, 0
  %v303 = vsel %vm277, %v25, 0
  %v306 = vsel %vm277, %v26, 0
  %v309 = vsel %vm277, %v27, 0
  %v312 = vsel %vm277, %v28, 0
  %v315 = vsel %vm277, %v29, 0
  %v318 = vsel %vm277, %v30, 0
  %v321 = vsel %vm277, %v31, 0
  %v324 = vsel %vm277, %v32, 0
  %v327 = vsel %vm277, %v33, 0
  %v330 = vsel %vm277, %v34, 0
  %v333 = vsel %vm277, %v35, 0
  %v336 = vsel %vm277, %v36, 0
  %v339 = vsel %vm277, %v37, 0
  %v342 = vsel %vm277, %v38, 0
  %v345 = vsel %vm277, %v39, 0
  %v348 = vsel %vm277, %v40, 0
  %v351 = vsel %vm277, %v41, 0
  %v354 = vsel %vm277, %v42, 0
  %v357 = vsel %vm277, %v43, 0
  %v360 = vsel %vm277, %v44, 0
  %v363 = vsel %vm277, %v45, 0
  %v366 = vsel %vm277, %v46, 0
  %v369 = vsel %vm277, %v47, 0
  %v372 = vsel %vm277, %v48, 0
  %v375 = vsel %vm277, %v49, 0
  %v378 = vsel %vm277, %v50, 0
  %v381 = vsel %vm277, %v51, 0
  %v384 = vsel %vm277, %v52, 0
  %v387 = vsel %vm277, %v53, 0
  %v390 = vsel %vm277, %v54, 0
  %v393 = vsel %vm277, %v55, 0
  %v396 = vsel %vm277, %v56, 0
  %v399 = vsel %vm277, %v57, 0
  %v402 = vsel %vm277, %v58, 0
  %v405 = vsel %vm277, %v59, 0
  %v408 = vsel %vm277, %v60, 0
  %v411 = vsel %vm277, %v61, 0
  %v414 = vsel %vm277, %v62, 0
  %v417 = vsel %vm277, %v63, 0
  %v420 = vsel %vm277, %v64, 0
  %v423 = vsel %vm277, %v65, 0
  %v426 = vsel %vm277, %v66, 0
  %v429 = vsel %vm277, %v67, 0
  %v432 = vsel %vm277, %v68, 0
  %v435 = vsel %vm277, %v69, 0
  %v438 = vsel %vm277, %v70, 0
  %v441 = vsel %vm277, %v71, 0
  %v444 = vsel %vm277, %v72, 0
  %v447 = vsel %vm277, %v73, 0
  %v450 = vsel %vm277, %v74, 0
  %v453 = vsel %vm277, %v75, 0
  %v456 = vsel %vm277, %v76, 0
  %v459 = vsel %vm277, %v77, 0
  %v462 = vsel %vm277, %v78, 0
  %v465 = vsel %vm277, %v79, 0
  %v468 = vsel %vm277, %v80, 0
  %v471 = vsel %vm277, %v81, 0
  %v474 = vsel %vm277, %v82, 0
  %v477 = vsel %vm277, %v83, 0
  %v480 = vsel %vm277, %v84, 0
  %v483 = vsel %vm277, %v85, 0
  %v486 = vsel %vm277, %v86, 0
  %v489 = vsel %vm277, %v87, 0
  %v492 = vsel %vm277, %v88, 0
  %v495 = vsel %vm277, %v89, 0
  %v498 = vsel %vm277, %v90, 0
  %v501 = vsel %vm277, %v91, 0
  %v504 = vsel %vm277, %v92, 0
  %v507 = vsel %vm277, %v93, 0
  %v510 = vsel %vm277, %v94, 0
  %v513 = vsel %vm277, %v95, 0
  %v516 = vsel %vm277, %v96, 0
  %v519 = vsel %vm277, %v97, 0
  %v522 = vsel %vm277, %v98, 0
  %v525 = vsel %vm277, %v99, 0
  %v528 = vsel %vm277, %v100, 0
  %v531 = vsel %vm277, %v101, 0
  %v534 = vsel %vm277, %v102, 0
  %v537 = vsel %vm277, %v103, 0
  %v540 = vsel %vm277, %v104, 0
  %v543 = vsel %vm277, %v105, 0
  %v546 = vsel %vm277, %v106, 0
  %v549 = vsel %vm277, %v107, 0
  %v552 = vsel %vm277, %v108, 0
  %v555 = vsel %vm277, %v109, 0
  %v558 = vsel %vm277, %v110, 0
  %v561 = vsel %vm277, %v111, 0
  %v564 = vsel %vm277, %v112, 0
  %v567 = vsel %vm277, %v113, 0
  %v570 = vsel %vm277, %v114, 0
  %v573 = vsel %vm277, %v115, 0
  %v576 = vsel %vm277, %v116, 0
  %v579 = vsel %vm277, %v117, 0
  %v582 = vsel %vm277, %v118, 0
  %v585 = vsel %vm277, %v119, 0
  %v588 = vsel %vm277, %v120, 0
  %v591 = vsel %vm277, %v121, 0
  %v594 = vsel %vm277, %v122, 0
  %v597 = vsel %vm277, %v123, 0
  %v600 = vsel %vm277, %v124, 0
  %v603 = vsel %vm277, %v125, 0
  %v606 = vsel %vm277, %v126, 0
  %v609 = vsel %vm277, %v127, 0
  %v612 = vsel %vm277, %v128, 0
  %v615 = vsel %vm277, %v129, 0
  %v618 = vsel %vm277, %v130, 0
  %v621 = vsel %vm277, %v131, 0
  %v624 = vsel %vm277, %v132, 0
  %v627 = vsel %vm277, %v133, 0
  %v630 = vsel %vm277, %v134, 0
  %v633 = vsel %vm277, %v135, 0
  %v636 = vsel %vm277, %v136, 0
  %v639 = vsel %vm277, %v137, 0
  %v642 = vsel %vm277, %v138, 0
  %v645 = vsel %vm277, %v139, 0
  %v648 = vsel %vm277, %v140, 0
  %v651 = vsel %vm277, %v141, 0
  %v654 = vsel %vm277, %v142, 0
  %v657 = vsel %vm277, %v143, 0
  %v660 = vsel %vm277, %v144, 0
  %v663 = vsel %vm277, %v145, 0
  %v666 = vsel %vm277, %v146, 0
  %v669 = vsel %vm277, %v147, 0
  %v672 = vsel %vm277, %v148, 0
  %v675 = vsel %vm277, %v149, 0
  %v678 = vsel %vm277, %v150, 0
  %v681 = vsel %vm277, %v151, 0
  %v684 = vsel %vm277, %v152, 0
  %v687 = vsel %vm277, %v153, 0
  %v690 = vsel %vm277, %v154, 0
  %v693 = vsel %vm277, %v155, 0
  %v696 = vsel %vm277, %v156, 0
  %v699 = vsel %vm277, %v157, 0
  %v702 = vsel %vm277, %v158, 0
  %v705 = vsel %vm277, %v159, 0
  %v708 = vsel %vm277, %v160, 0
  %v711 = vsel %vm277, %v161, 0
  %v714 = vsel %vm277, %v162, 0
  %v717 = vsel %vm277, %v163, 0
  %v720 = vsel %vm277, %v164, 0
  %v723 = vsel %vm277, %v165, 0
  %v726 = vsel %vm277, %v166, 0
  %v729 = vsel %vm277, %v167, 0
  %v732 = vsel %vm277, %v168, 0
  %v735 = vsel %vm277, %v169, 0
  %v738 = vsel %vm277, %v170, 0
  %v741 = vsel %vm277, %v171, 0
  %v744 = vsel %vm277, %v172, 0
  %v747 = vsel %vm277, %v173, 0
  %v750 = vsel %vm277, %v174, 0
  %v753 = vsel %vm277, %v175, 0
  %v756 = vsel %vm277, %v176, 0
  %v759 = vsel %vm277, %v177, 0
  %v762 = vsel %vm277, %v178, 0
  %v765 = vsel %vm277, %v179, 0
  %v768 = vsel %vm277, %v180, 0
  %v771 = vsel %vm277, %v181, 0
  %v774 = vsel %vm277, %v182, 0
  %v777 = vsel %vm277, %v183, 0
  %v780 = vsel %vm277, %v184, 0
  %v783 = vsel %vm277, %v185, 0
  %v786 = vsel %vm277, %v186, 0
  %v789 = vsel %vm277, %v187, 0
  %v792 = vsel %vm277, %v188, 0
  %v795 = vsel %vm277, %v189, 0
  %v798 = vsel %vm277, %v190, 0
  %v801 = vsel %vm277, %v191, 0
  %v804 = vsel %vm277, %v192, 0
  %v807 = vsel %vm277, %v193, 0
  %v810 = vsel %vm277, %v194, 0
  %v813 = vsel %vm277, %v195, 0
  %v816 = vsel %vm277, %v196, 0
  %v819 = vsel %vm277, %v197, 0
  %v822 = vsel %vm277, %v198, 0
  %v825 = vsel %vm277, %v199, 0
  %v828 = vsel %vm277, %v200, 0
  %v831 = vsel %vm277, %v201, 0
  %v834 = vsel %vm277, %v202, 0
  %v837 = vsel %vm277, %v203, 0
  %v840 = vsel %vm277, %v204, 0
  %v843 = vsel %vm277, %v205, 0
  %v846 = vsel %vm277, %v206, 0
  %v849 = vsel %vm277, %v207, 0
  %v852 = vsel %vm277, %v208, 0
  %v855 = vsel %vm277, %v209, 0
  %v858 = vsel %vm277, %v210, 0
  %v861 = vsel %vm277, %v211, 0
  %v864 = vsel %vm277, %v212, 0
  %v867 = vsel %vm277, %v213, 0
  %v870 = vsel %vm277, %v214, 0
  %v873 = vsel %vm277, %v215, 0
  %v876 = vsel %vm277, %v216, 0
  %v879 = vsel %vm277, %v217, 0
  %v882 = vsel %vm277, %v218, 0
  %v885 = vsel %vm277, %v219, 0
  %v888 = vsel %vm277, %v220, 0
  %v891 = vsel %vm277, %v221, 0
  %v894 = vsel %vm277, %v222, 0
  %v897 = vsel %vm277, %v223, 0
  %v900 = vsel %vm277, %v224, 0
  %v903 = vsel %vm277, %v225, 0
  %v906 = vsel %vm277, %v226, 0
  %v909 = vsel %vm277, %v227, 0
  %v912 = vsel %vm277, %v228, 0
  %v915 = vsel %vm277, %v229, 0
  %v918 = vsel %vm277, %v230, 0
  %v921 = vsel %vm277, %v231, 0
  %v924 = vsel %vm277, %v232, 0
  %v927 = vsel %vm277, %v233, 0
  %v930 = vsel %vm277, %v234, 0
  %v933 = vsel %vm277, %v235, 0
  %v936 = vsel %vm277, %v236, 0
  %v939 = vsel %vm277, %v237, 0
  %v942 = vsel %vm277, %v238, 0
  %v945 = vsel %vm277, %v239, 0
  %v948 = vsel %vm277, %v240, 0
  %v951 = vsel %vm277, %v241, 0
  %v954 = vsel %vm277, %v242, 0
  %v957 = vsel %vm277, %v243, 0
  %v960 = vsel %vm277, %v244, 0
  %v963 = vsel %vm277, %v245, 0
  %v966 = vsel %vm277, %v246, 0
  %v969 = vsel %vm277, %v247, 0
  %v972 = vsel %vm277, %v248, 0
  %v975 = vsel %vm277, %v249, 0
  %v978 = vsel %vm277, %v250, 0
  %v981 = vsel %vm277, %v251, 0
  %v984 = vsel %vm277, %v252, 0
  %v987 = vsel %vm277, %v253, 0
  %v990 = vsel %vm277, %v254, 0
  %v993 = vsel %vm277, %v255, 0
  %v996 = vsel %vm277, %v256, 0
  %v999 = vsel %vm277, %v257, 0
  %v1002 = vsel %vm277, %v258, 0
  %v1005 = vsel %vm277, %v259, 0
  %v1008 = vsel %vm277, %v260, 0
  %v1011 = vsel %vm277, %v261, 0
  %v1014 = vsel %vm277, %v262, 0
  %v1017 = vsel %vm277, %v263, 0
  %v1020 = vsel %vm277, %v264, 0
  %v1023 = vsel %vm277, %v265, 0
  %v1026 = vsel %vm277, %v266, 0
  %v1029 = vsel %vm277, %v267, 0
  %v1032 = vsel %vm277, %v268, 0
  %v1035 = vsel %vm277, %v269, 0
  %v1038 = vsel %vm277, %v270, 0
  %v1041 = vsel %vm277, %v271, 0
  %v1044 = vsel %vm277, %v272, 0
  %vm1046 = vcmask 1042432
  %v1048 = vsel %vm1046, %v276, 0
  %1050 = vmatprep.subr.mxu0 0.0
  %1051 = vmatpush1.msra.mxu0 %v273
  %1052 = vmatprep.subr.mxu0 0.0
  %1053 = vmatpush1.msra.mxu0 %v274
  %1054 = vmatprep.subr.mxu0 0.0
  %1055 = vmatpush1.msra.mxu0 %v275
  %1056 = vmatprep.subr.mxu0 0.0
  %1057 = vmatpush1.msra.mxu0 %v1048
  %1058 = vmatprep.subr.mxu0 0.0
  %1059 = vmatpush1.msra.mxu0 0.0
  %1060 = vmatprep.subr.mxu0 0.0
  %1061 = vmatpush1.msra.mxu0 0.0
  %1062 = vmatprep.subr.mxu0 0.0
  %1063 = vmatpush1.msra.mxu0 0.0
  %1064 = vmatprep.subr.mxu0 0.0
  %1065 = vmatpush1.msra.mxu0 0.0
  %1066 = vmatprep.subr.mxu0 0.0
  %1067 = vmatpush1.msra.mxu0 0.0
  %1068 = vmatprep.subr.mxu0 0.0
  %1069 = vmatpush1.msra.mxu0 0.0
  %1070 = vmatprep.subr.mxu0 0.0
  %1071 = vmatpush1.msra.mxu0 0.0
  %1072 = vmatprep.subr.mxu0 0.0
  %1073 = vmatpush1.msra.mxu0 0.0
  %1074 = vmatprep.subr.mxu0 0.0
  %1075 = vmatpush1.msra.mxu0 0.0
  %1076 = vmatprep.subr.mxu0 0.0
  %1077 = vmatpush1.msra.mxu0 0.0
  %1078 = vmatprep.subr.mxu0 0.0
  %1079 = vmatpush1.msra.mxu0 0.0
  %1080 = vmatprep.subr.mxu0 0.0
  %1081 = vmatpush1.msra.mxu0 0.0
  %1082 = vmatprep.subr.mxu0 0.0
  %1083 = vmatpush1.msra.mxu0 0.0
  %1084 = vmatprep.subr.mxu0 0.0
  %1085 = vmatpush1.msra.mxu0 0.0
  %1086 = vmatprep.subr.mxu0 0.0
  %1087 = vmatpush1.msra.mxu0 0.0
  %1088 = vmatprep.subr.mxu0 0.0
  %1089 = vmatpush1.msra.mxu0 0.0
  %1090 = vmatprep.subr.mxu0 0.0
  %1091 = vmatpush1.msra.mxu0 0.0
  %1092 = vmatprep.subr.mxu0 0.0
  %1093 = vmatpush1.msra.mxu0 0.0
  %1094 = vmatprep.subr.mxu0 0.0
  %1095 = vmatpush1.msra.mxu0 0.0
  %1096 = vmatprep.subr.mxu0 0.0
  %1097 = vmatpush1.msra.mxu0 0.0
  %1098 = vmatprep.subr.mxu0 0.0
  %1099 = vmatpush1.msra.mxu0 0.0
  %1100 = vmatprep.subr.mxu0 0.0
  %1101 = vmatpush1.msra.mxu0 0.0
  %1102 = vmatprep.subr.mxu0 0.0
  %1103 = vmatpush1.msra.mxu0 0.0
  %1104 = vmatprep.subr.mxu0 0.0
  %1105 = vmatpush1.msra.mxu0 0.0
  %1106 = vmatprep.subr.mxu0 0.0
  %1107 = vmatpush1.msra.mxu0 0.0
  %1108 = vmatprep.subr.mxu0 0.0
  %1109 = vmatpush1.msra.mxu0 0.0
  %1110 = vmatprep.subr.mxu0 0.0
  %1111 = vmatpush1.msra.mxu0 0.0
  %1112 = vmatprep.subr.mxu0 0.0
  %1113 = vmatpush1.msra.mxu0 0.0
  %1114 = vmatprep.mubr.f32.mxu0 0.0
  %1115 = vmatmul.mubr.f32.gmra.mrb[0].mxu0 %v279
  %v1116 = vpop.f32.mrb[0].mxu0
  %v1117 = vadd.f32 0.0, %v1116
  %v1118 = vpop.f32.mrb[0].mxu0
  %1119 = vmatprep.mubr.f32.mxu0 0.0
  %1120 = vmatmul.mubr.f32.gmra.mrb[0].mxu0 %v282
  %v1121 = vpop.f32.mrb[0].mxu0
  %v1122 = vadd.f32 0.0, %v1121
  %v1123 = vpop.f32.mrb[0].mxu0
  %1124 = vmatprep.mubr.f32.mxu0 0.0
  %1125 = vmatmul.mubr.f32.gmra.mrb[0].mxu0 %v285
  %v1126 = vpop.f32.mrb[0].mxu0
  %v1127 = vadd.f32 0.0, %v1126
  %v1128 = vpop.f32.mrb[0].mxu0
  %1129 = vmatprep.mubr.f32.mxu0 0.0
  %1130 = vmatmul.mubr.f32.gmra.mrb[0].mxu0 %v288
  %v1131 = vpop.f32.mrb[0].mxu0
  %v1132 = vadd.f32 0.0, %v1131
  %v1133 = vpop.f32.mrb[0].mxu0
  %1134 = vmatprep.mubr.f32.mxu0 0.0
  %1135 = vmatmul.mubr.f32.gmra.mrb[0].mxu0 %v291
  %v1136 = vpop.f32.mrb[0].mxu0
  %v1137 = vadd.f32 0.0, %v1136
  %v1138 = vpop.f32.mrb[0].mxu0
  %1139 = vmatprep.mubr.f32.mxu0 0.0
  %1140 = vmatmul.mubr.f32.gmra.mrb[0].mxu0 %v294
  %v1141 = vpop.f32.mrb[0].mxu0
  %v1142 = vadd.f32 0.0, %v1141
  %v1143 = vpop.f32.mrb[0].mxu0
  %1144 = vmatprep.mubr.f32.mxu0 0.0
  %1145 = vmatmul.mubr.f32.gmra.mrb[0].mxu0 %v297
  %v1146 = vpop.f32.mrb[0].mxu0
  %v1147 = vadd.f32 0.0, %v1146
  %v1148 = vpop.f32.mrb[0].mxu0
  %1149 = vmatprep.mubr.f32.mxu0 0.0
  %1150 = vmatmul.mubr.f32.gmra.mrb[0].mxu0 %v300
  %v1151 = vpop.f32.mrb[0].mxu0
  %v1152 = vadd.f32 0.0, %v1151
  %v1153 = vpop.f32.mrb[0].mxu0
  %1154 = vmatprep.mubr.f32.mxu0 0.0
  %1155 = vmatmul.mubr.f32.gmra.mrb[0].mxu0 %v303
  %v1156 = vpop.f32.mrb[0].mxu0
  %v1157 = vadd.f32 0.0, %v1156
  %v1158 = vpop.f32.mrb[0].mxu0
  %1159 = vmatprep.mubr.f32.mxu0 0.0
  %1160 = vmatmul.mubr.f32.gmra.mrb[0].mxu0 %v306
  %v1161 = vpop.f32.mrb[0].mxu0
  %v1162 = vadd.f32 0.0, %v1161
  %v1163 = vpop.f32.mrb[0].mxu0
  %1164 = vmatprep.mubr.f32.mxu0 0.0
  %1165 = vmatmul.mubr.f32.gmra.mrb[0].mxu0 %v309
  %v1166 = vpop.f32.mrb[0].mxu0
  %v1167 = vadd.f32 0.0, %v1166
  %v1168 = vpop.f32.mrb[0].mxu0
  %1169 = vmatprep.mubr.f32.mxu0 0.0
  %1170 = vmatmul.mubr.f32.gmra.mrb[0].mxu0 %v312
  %v1171 = vpop.f32.mrb[0].mxu0
  %v1172 = vadd.f32 0.0, %v1171
  %v1173 = vpop.f32.mrb[0].mxu0
  %1174 = vmatprep.mubr.f32.mxu0 0.0
  %1175 = vmatmul.mubr.f32.gmra.mrb[0].mxu0 %v315
  %v1176 = vpop.f32.mrb[0].mxu0
  %v1177 = vadd.f32 0.0, %v1176
  %v1178 = vpop.f32.mrb[0].mxu0
  %1179 = vmatprep.mubr.f32.mxu0 0.0
  %1180 = vmatmul.mubr.f32.gmra.mrb[0].mxu0 %v318
  %v1181 = vpop.f32.mrb[0].mxu0
  %v1182 = vadd.f32 0.0, %v1181
  %v1183 = vpop.f32.mrb[0].mxu0
  %1184 = vmatprep.mubr.f32.mxu0 0.0
  %1185 = vmatmul.mubr.f32.gmra.mrb[0].mxu0 %v321
  %v1186 = vpop.f32.mrb[0].mxu0
  %v1187 = vadd.f32 0.0, %v1186
  %v1188 = vpop.f32.mrb[0].mxu0
  %1189 = vmatprep.mubr.f32.mxu0 0.0
  %1190 = vmatmul.mubr.f32.gmra.mrb[0].mxu0 %v324
  %v1191 = vpop.f32.mrb[0].mxu0
  %v1192 = vadd.f32 0.0, %v1191
  %v1193 = vpop.f32.mrb[0].mxu0
  %1194 = vmatprep.mubr.f32.mxu0 0.0
  %1195 = vmatmul.mubr.f32.gmra.mrb[0].mxu0 %v327
  %v1196 = vpop.f32.mrb[0].mxu0
  %v1197 = vadd.f32 0.0, %v1196
  %v1198 = vpop.f32.mrb[0].mxu0
  %1199 = vmatprep.mubr.f32.mxu0 0.0
  %1200 = vmatmul.mubr.f32.gmra.mrb[0].mxu0 %v330
  %v1201 = vpop.f32.mrb[0].mxu0
  %v1202 = vadd.f32 0.0, %v1201
  %v1203 = vpop.f32.mrb[0].mxu0
  %1204 = vmatprep.mubr.f32.mxu0 0.0
  %1205 = vmatmul.mubr.f32.gmra.mrb[0].mxu0 %v333
  %v1206 = vpop.f32.mrb[0].mxu0
  %v1207 = vadd.f32 0.0, %v1206
  %v1208 = vpop.f32.mrb[0].mxu0
  %1209 = vmatprep.mubr.f32.mxu0 0.0
  %1210 = vmatmul.mubr.f32.gmra.mrb[0].mxu0 %v336
  %v1211 = vpop.f32.mrb[0].mxu0
  %v1212 = vadd.f32 0.0, %v1211
  %v1213 = vpop.f32.mrb[0].mxu0
  %1214 = vmatprep.mubr.f32.mxu0 0.0
  %1215 = vmatmul.mubr.f32.gmra.mrb[0].mxu0 %v339
  %v1216 = vpop.f32.mrb[0].mxu0
  %v1217 = vadd.f32 0.0, %v1216
  %v1218 = vpop.f32.mrb[0].mxu0
  %1219 = vmatprep.mubr.f32.mxu0 0.0
  %1220 = vmatmul.mubr.f32.gmra.mrb[0].mxu0 %v342
  %v1221 = vpop.f32.mrb[0].mxu0
  %v1222 = vadd.f32 0.0, %v1221
  %v1223 = vpop.f32.mrb[0].mxu0
  %1224 = vmatprep.mubr.f32.mxu0 0.0
  %1225 = vmatmul.mubr.f32.gmra.mrb[0].mxu0 %v345
  %v1226 = vpop.f32.mrb[0].mxu0
  %v1227 = vadd.f32 0.0, %v1226
  %v1228 = vpop.f32.mrb[0].mxu0
  %1229 = vmatprep.mubr.f32.mxu0 0.0
  %1230 = vmatmul.mubr.f32.gmra.mrb[0].mxu0 %v348
  %v1231 = vpop.f32.mrb[0].mxu0
  %v1232 = vadd.f32 0.0, %v1231
  %v1233 = vpop.f32.mrb[0].mxu0
  %1234 = vmatprep.mubr.f32.mxu0 0.0
  %1235 = vmatmul.mubr.f32.gmra.mrb[0].mxu0 %v351
  %v1236 = vpop.f32.mrb[0].mxu0
  %v1237 = vadd.f32 0.0, %v1236
  %v1238 = vpop.f32.mrb[0].mxu0
  %1239 = vmatprep.mubr.f32.mxu0 0.0
  %1240 = vmatmul.mubr.f32.gmra.mrb[0].mxu0 %v354
  %v1241 = vpop.f32.mrb[0].mxu0
  %v1242 = vadd.f32 0.0, %v1241
  %v1243 = vpop.f32.mrb[0].mxu0
  %1244 = vmatprep.mubr.f32.mxu0 0.0
  %1245 = vmatmul.mubr.f32.gmra.mrb[0].mxu0 %v357
  %v1246 = vpop.f32.mrb[0].mxu0
  %v1247 = vadd.f32 0.0, %v1246
  %v1248 = vpop.f32.mrb[0].mxu0
  %1249 = vmatprep.mubr.f32.mxu0 0.0
  %1250 = vmatmul.mubr.f32.gmra.mrb[0].mxu0 %v360
  %v1251 = vpop.f32.mrb[0].mxu0
  %v1252 = vadd.f32 0.0, %v1251
  %v1253 = vpop.f32.mrb[0].mxu0
  %1254 = vmatprep.mubr.f32.mxu0 0.0
  %1255 = vmatmul.mubr.f32.gmra.mrb[0].mxu0 %v363
  %v1256 = vpop.f32.mrb[0].mxu0
  %v1257 = vadd.f32 0.0, %v1256
  %v1258 = vpop.f32.mrb[0].mxu0
  %1259 = vmatprep.mubr.f32.mxu0 0.0
  %1260 = vmatmul.mubr.f32.gmra.mrb[0].mxu0 %v366
  %v1261 = vpop.f32.mrb[0].mxu0
  %v1262 = vadd.f32 0.0, %v1261
  %v1263 = vpop.f32.mrb[0].mxu0
  %1264 = vmatprep.mubr.f32.mxu0 0.0
  %1265 = vmatmul.mubr.f32.gmra.mrb[0].mxu0 %v369
  %v1266 = vpop.f32.mrb[0].mxu0
  %v1267 = vadd.f32 0.0, %v1266
  %v1268 = vpop.f32.mrb[0].mxu0
  %1269 = vmatprep.mubr.f32.mxu0 0.0
  %1270 = vmatmul.mubr.f32.gmra.mrb[0].mxu0 %v372
  %v1271 = vpop.f32.mrb[0].mxu0
  %v1272 = vadd.f32 0.0, %v1271
  %v1273 = vpop.f32.mrb[0].mxu0
  %1274 = vmatprep.mubr.f32.mxu0 0.0
  %1275 = vmatmul.mubr.f32.gmra.mrb[0].mxu0 %v375
  %v1276 = vpop.f32.mrb[0].mxu0
  %v1277 = vadd.f32 0.0, %v1276
  %v1278 = vpop.f32.mrb[0].mxu0
  %1279 = vmatprep.mubr.f32.mxu0 0.0
  %1280 = vmatmul.mubr.f32.gmra.mrb[0].mxu0 %v378
  %v1281 = vpop.f32.mrb[0].mxu0
  %v1282 = vadd.f32 0.0, %v1281
  %v1283 = vpop.f32.mrb[0].mxu0
  %1284 = vmatprep.mubr.f32.mxu0 0.0
  %1285 = vmatmul.mubr.f32.gmra.mrb[0].mxu0 %v381
  %v1286 = vpop.f32.mrb[0].mxu0
  %v1287 = vadd.f32 0.0, %v1286
  %v1288 = vpop.f32.mrb[0].mxu0
  %1289 = vmatprep.mubr.f32.mxu0 0.0
  %1290 = vmatmul.mubr.f32.gmra.mrb[0].mxu0 %v384
  %v1291 = vpop.f32.mrb[0].mxu0
  %v1292 = vadd.f32 0.0, %v1291
  %v1293 = vpop.f32.mrb[0].mxu0
  %1294 = vmatprep.mubr.f32.mxu0 0.0
  %1295 = vmatmul.mubr.f32.gmra.mrb[0].mxu0 %v387
  %v1296 = vpop.f32.mrb[0].mxu0
  %v1297 = vadd.f32 0.0, %v1296
  %v1298 = vpop.f32.mrb[0].mxu0
  %1299 = vmatprep.mubr.f32.mxu0 0.0
  %1300 = vmatmul.mubr.f32.gmra.mrb[0].mxu0 %v390
  %v1301 = vpop.f32.mrb[0].mxu0
  %v1302 = vadd.f32 0.0, %v1301
  %v1303 = vpop.f32.mrb[0].mxu0
  %1304 = vmatprep.mubr.f32.mxu0 0.0
  %1305 = vmatmul.mubr.f32.gmra.mrb[0].mxu0 %v393
  %v1306 = vpop.f32.mrb[0].mxu0
  %v1307 = vadd.f32 0.0, %v1306
  %v1308 = vpop.f32.mrb[0].mxu0
  %1309 = vmatprep.mubr.f32.mxu0 0.0
  %1310 = vmatmul.mubr.f32.gmra.mrb[0].mxu0 %v396
  %v1311 = vpop.f32.mrb[0].mxu0
  %v1312 = vadd.f32 0.0, %v1311
  %v1313 = vpop.f32.mrb[0].mxu0
  %1314 = vmatprep.mubr.f32.mxu0 0.0
  %1315 = vmatmul.mubr.f32.gmra.mrb[0].mxu0 %v399
  %v1316 = vpop.f32.mrb[0].mxu0
  %v1317 = vadd.f32 0.0, %v1316
  %v1318 = vpop.f32.mrb[0].mxu0
  %1319 = vmatprep.mubr.f32.mxu0 0.0
  %1320 = vmatmul.mubr.f32.gmra.mrb[0].mxu0 %v402
  %v1321 = vpop.f32.mrb[0].mxu0
  %v1322 = vadd.f32 0.0, %v1321
  %v1323 = vpop.f32.mrb[0].mxu0
  %1324 = vmatprep.mubr.f32.mxu0 0.0
  %1325 = vmatmul.mubr.f32.gmra.mrb[0].mxu0 %v405
  %v1326 = vpop.f32.mrb[0].mxu0
  %v1327 = vadd.f32 0.0, %v1326
  %v1328 = vpop.f32.mrb[0].mxu0
  %1329 = vmatprep.mubr.f32.mxu0 0.0
  %1330 = vmatmul.mubr.f32.gmra.mrb[0].mxu0 %v408
  %v1331 = vpop.f32.mrb[0].mxu0
  %v1332 = vadd.f32 0.0, %v1331
  %v1333 = vpop.f32.mrb[0].mxu0
  %1334 = vmatprep.mubr.f32.mxu0 0.0
  %1335 = vmatmul.mubr.f32.gmra.mrb[0].mxu0 %v411
  %v1336 = vpop.f32.mrb[0].mxu0
  %v1337 = vadd.f32 0.0, %v1336
  %v1338 = vpop.f32.mrb[0].mxu0
  %1339 = vmatprep.mubr.f32.mxu0 0.0
  %1340 = vmatmul.mubr.f32.gmra.mrb[0].mxu0 %v414
  %v1341 = vpop.f32.mrb[0].mxu0
  %v1342 = vadd.f32 0.0, %v1341
  %v1343 = vpop.f32.mrb[0].mxu0
  %1344 = vmatprep.mubr.f32.mxu0 0.0
  %1345 = vmatmul.mubr.f32.gmra.mrb[0].mxu0 %v417
  %v1346 = vpop.f32.mrb[0].mxu0
  %v1347 = vadd.f32 0.0, %v1346
  %v1348 = vpop.f32.mrb[0].mxu0
  %1349 = vmatprep.mubr.f32.mxu0 0.0
  %1350 = vmatmul.mubr.f32.gmra.mrb[0].mxu0 %v420
  %v1351 = vpop.f32.mrb[0].mxu0
  %v1352 = vadd.f32 0.0, %v1351
  %v1353 = vpop.f32.mrb[0].mxu0
  %1354 = vmatprep.mubr.f32.mxu0 0.0
  %1355 = vmatmul.mubr.f32.gmra.mrb[0].mxu0 %v423
  %v1356 = vpop.f32.mrb[0].mxu0
  %v1357 = vadd.f32 0.0, %v1356
  %v1358 = vpop.f32.mrb[0].mxu0
  %1359 = vmatprep.mubr.f32.mxu0 0.0
  %1360 = vmatmul.mubr.f32.gmra.mrb[0].mxu0 %v426
  %v1361 = vpop.f32.mrb[0].mxu0
  %v1362 = vadd.f32 0.0, %v1361
  %v1363 = vpop.f32.mrb[0].mxu0
  %1364 = vmatprep.mubr.f32.mxu0 0.0
  %1365 = vmatmul.mubr.f32.gmra.mrb[0].mxu0 %v429
  %v1366 = vpop.f32.mrb[0].mxu0
  %v1367 = vadd.f32 0.0, %v1366
  %v1368 = vpop.f32.mrb[0].mxu0
  %1369 = vmatprep.mubr.f32.mxu0 0.0
  %1370 = vmatmul.mubr.f32.gmra.mrb[0].mxu0 %v432
  %v1371 = vpop.f32.mrb[0].mxu0
  %v1372 = vadd.f32 0.0, %v1371
  %v1373 = vpop.f32.mrb[0].mxu0
  %1374 = vmatprep.mubr.f32.mxu0 0.0
  %1375 = vmatmul.mubr.f32.gmra.mrb[0].mxu0 %v435
  %v1376 = vpop.f32.mrb[0].mxu0
  %v1377 = vadd.f32 0.0, %v1376
  %v1378 = vpop.f32.mrb[0].mxu0
  %1379 = vmatprep.mubr.f32.mxu0 0.0
  %1380 = vmatmul.mubr.f32.gmra.mrb[0].mxu0 %v438
  %v1381 = vpop.f32.mrb[0].mxu0
  %v1382 = vadd.f32 0.0, %v1381
  %v1383 = vpop.f32.mrb[0].mxu0
  %1384 = vmatprep.mubr.f32.mxu0 0.0
  %1385 = vmatmul.mubr.f32.gmra.mrb[0].mxu0 %v441
  %v1386 = vpop.f32.mrb[0].mxu0
  %v1387 = vadd.f32 0.0, %v1386
  %v1388 = vpop.f32.mrb[0].mxu0
  %1389 = vmatprep.mubr.f32.mxu0 0.0
  %1390 = vmatmul.mubr.f32.gmra.mrb[0].mxu0 %v444
  %v1391 = vpop.f32.mrb[0].mxu0
  %v1392 = vadd.f32 0.0, %v1391
  %v1393 = vpop.f32.mrb[0].mxu0
  %1394 = vmatprep.mubr.f32.mxu0 0.0
  %1395 = vmatmul.mubr.f32.gmra.mrb[0].mxu0 %v447
  %v1396 = vpop.f32.mrb[0].mxu0
  %v1397 = vadd.f32 0.0, %v1396
  %v1398 = vpop.f32.mrb[0].mxu0
  %1399 = vmatprep.mubr.f32.mxu0 0.0
  %1400 = vmatmul.mubr.f32.gmra.mrb[0].mxu0 %v450
  %v1401 = vpop.f32.mrb[0].mxu0
  %v1402 = vadd.f32 0.0, %v1401
  %v1403 = vpop.f32.mrb[0].mxu0
  %1404 = vmatprep.mubr.f32.mxu0 0.0
  %1405 = vmatmul.mubr.f32.gmra.mrb[0].mxu0 %v453
  %v1406 = vpop.f32.mrb[0].mxu0
  %v1407 = vadd.f32 0.0, %v1406
  %v1408 = vpop.f32.mrb[0].mxu0
  %1409 = vmatprep.mubr.f32.mxu0 0.0
  %1410 = vmatmul.mubr.f32.gmra.mrb[0].mxu0 %v456
  %v1411 = vpop.f32.mrb[0].mxu0
  %v1412 = vadd.f32 0.0, %v1411
  %v1413 = vpop.f32.mrb[0].mxu0
  %1414 = vmatprep.mubr.f32.mxu0 0.0
  %1415 = vmatmul.mubr.f32.gmra.mrb[0].mxu0 %v459
  %v1416 = vpop.f32.mrb[0].mxu0
  %v1417 = vadd.f32 0.0, %v1416
  %v1418 = vpop.f32.mrb[0].mxu0
  %1419 = vmatprep.mubr.f32.mxu0 0.0
  %1420 = vmatmul.mubr.f32.gmra.mrb[0].mxu0 %v462
  %v1421 = vpop.f32.mrb[0].mxu0
  %v1422 = vadd.f32 0.0, %v1421
  %v1423 = vpop.f32.mrb[0].mxu0
  %1424 = vmatprep.mubr.f32.mxu0 0.0
  %1425 = vmatmul.mubr.f32.gmra.mrb[0].mxu0 %v465
  %v1426 = vpop.f32.mrb[0].mxu0
  %v1427 = vadd.f32 0.0, %v1426
  %v1428 = vpop.f32.mrb[0].mxu0
  %1429 = vmatprep.mubr.f32.mxu0 0.0
  %1430 = vmatmul.mubr.f32.gmra.mrb[0].mxu0 %v468
  %v1431 = vpop.f32.mrb[0].mxu0
  %v1432 = vadd.f32 0.0, %v1431
  %v1433 = vpop.f32.mrb[0].mxu0
  %1434 = vmatprep.mubr.f32.mxu0 0.0
  %1435 = vmatmul.mubr.f32.gmra.mrb[0].mxu0 %v471
  %v1436 = vpop.f32.mrb[0].mxu0
  %v1437 = vadd.f32 0.0, %v1436
  %v1438 = vpop.f32.mrb[0].mxu0
  %1439 = vmatprep.mubr.f32.mxu0 0.0
  %1440 = vmatmul.mubr.f32.gmra.mrb[0].mxu0 %v474
  %v1441 = vpop.f32.mrb[0].mxu0
  %v1442 = vadd.f32 0.0, %v1441
  %v1443 = vpop.f32.mrb[0].mxu0
  %1444 = vmatprep.mubr.f32.mxu0 0.0
  %1445 = vmatmul.mubr.f32.gmra.mrb[0].mxu0 %v477
  %v1446 = vpop.f32.mrb[0].mxu0
  %v1447 = vadd.f32 0.0, %v1446
  %v1448 = vpop.f32.mrb[0].mxu0
  %1449 = vmatprep.mubr.f32.mxu0 0.0
  %1450 = vmatmul.mubr.f32.gmra.mrb[0].mxu0 %v480
  %v1451 = vpop.f32.mrb[0].mxu0
  %v1452 = vadd.f32 0.0, %v1451
  %v1453 = vpop.f32.mrb[0].mxu0
  %1454 = vmatprep.mubr.f32.mxu0 0.0
  %1455 = vmatmul.mubr.f32.gmra.mrb[0].mxu0 %v483
  %v1456 = vpop.f32.mrb[0].mxu0
  %v1457 = vadd.f32 0.0, %v1456
  %v1458 = vpop.f32.mrb[0].mxu0
  %1459 = vmatprep.mubr.f32.mxu0 0.0
  %1460 = vmatmul.mubr.f32.gmra.mrb[0].mxu0 %v486
  %v1461 = vpop.f32.mrb[0].mxu0
  %v1462 = vadd.f32 0.0, %v1461
  %v1463 = vpop.f32.mrb[0].mxu0
  %1464 = vmatprep.mubr.f32.mxu0 0.0
  %1465 = vmatmul.mubr.f32.gmra.mrb[0].mxu0 %v489
  %v1466 = vpop.f32.mrb[0].mxu0
  %v1467 = vadd.f32 0.0, %v1466
  %v1468 = vpop.f32.mrb[0].mxu0
  %1469 = vmatprep.mubr.f32.mxu0 0.0
  %1470 = vmatmul.mubr.f32.gmra.mrb[0].mxu0 %v492
  %v1471 = vpop.f32.mrb[0].mxu0
  %v1472 = vadd.f32 0.0, %v1471
  %v1473 = vpop.f32.mrb[0].mxu0
  %1474 = vmatprep.mubr.f32.mxu0 0.0
  %1475 = vmatmul.mubr.f32.gmra.mrb[0].mxu0 %v495
  %v1476 = vpop.f32.mrb[0].mxu0
  %v1477 = vadd.f32 0.0, %v1476
  %v1478 = vpop.f32.mrb[0].mxu0
  %1479 = vmatprep.mubr.f32.mxu0 0.0
  %1480 = vmatmul.mubr.f32.gmra.mrb[0].mxu0 %v498
  %v1481 = vpop.f32.mrb[0].mxu0
  %v1482 = vadd.f32 0.0, %v1481
  %v1483 = vpop.f32.mrb[0].mxu0
  %1484 = vmatprep.mubr.f32.mxu0 0.0
  %1485 = vmatmul.mubr.f32.gmra.mrb[0].mxu0 %v501
  %v1486 = vpop.f32.mrb[0].mxu0
  %v1487 = vadd.f32 0.0, %v1486
  %v1488 = vpop.f32.mrb[0].mxu0
  %1489 = vmatprep.mubr.f32.mxu0 0.0
  %1490 = vmatmul.mubr.f32.gmra.mrb[0].mxu0 %v504
  %v1491 = vpop.f32.mrb[0].mxu0
  %v1492 = vadd.f32 0.0, %v1491
  %v1493 = vpop.f32.mrb[0].mxu0
  %1494 = vmatprep.mubr.f32.mxu0 0.0
  %1495 = vmatmul.mubr.f32.gmra.mrb[0].mxu0 %v507
  %v1496 = vpop.f32.mrb[0].mxu0
  %v1497 = vadd.f32 0.0, %v1496
  %v1498 = vpop.f32.mrb[0].mxu0
  %1499 = vmatprep.mubr.f32.mxu0 0.0
  %1500 = vmatmul.mubr.f32.gmra.mrb[0].mxu0 %v510
  %v1501 = vpop.f32.mrb[0].mxu0
  %v1502 = vadd.f32 0.0, %v1501
  %v1503 = vpop.f32.mrb[0].mxu0
  %1504 = vmatprep.mubr.f32.mxu0 0.0
  %1505 = vmatmul.mubr.f32.gmra.mrb[0].mxu0 %v513
  %v1506 = vpop.f32.mrb[0].mxu0
  %v1507 = vadd.f32 0.0, %v1506
  %v1508 = vpop.f32.mrb[0].mxu0
  %1509 = vmatprep.mubr.f32.mxu0 0.0
  %1510 = vmatmul.mubr.f32.gmra.mrb[0].mxu0 %v516
  %v1511 = vpop.f32.mrb[0].mxu0
  %v1512 = vadd.f32 0.0, %v1511
  %v1513 = vpop.f32.mrb[0].mxu0
  %1514 = vmatprep.mubr.f32.mxu0 0.0
  %1515 = vmatmul.mubr.f32.gmra.mrb[0].mxu0 %v519
  %v1516 = vpop.f32.mrb[0].mxu0
  %v1517 = vadd.f32 0.0, %v1516
  %v1518 = vpop.f32.mrb[0].mxu0
  %1519 = vmatprep.mubr.f32.mxu0 0.0
  %1520 = vmatmul.mubr.f32.gmra.mrb[0].mxu0 %v522
  %v1521 = vpop.f32.mrb[0].mxu0
  %v1522 = vadd.f32 0.0, %v1521
  %v1523 = vpop.f32.mrb[0].mxu0
  %1524 = vmatprep.mubr.f32.mxu0 0.0
  %1525 = vmatmul.mubr.f32.gmra.mrb[0].mxu0 %v525
  %v1526 = vpop.f32.mrb[0].mxu0
  %v1527 = vadd.f32 0.0, %v1526
  %v1528 = vpop.f32.mrb[0].mxu0
  %1529 = vmatprep.mubr.f32.mxu0 0.0
  %1530 = vmatmul.mubr.f32.gmra.mrb[0].mxu0 %v528
  %v1531 = vpop.f32.mrb[0].mxu0
  %v1532 = vadd.f32 0.0, %v1531
  %v1533 = vpop.f32.mrb[0].mxu0
  %1534 = vmatprep.mubr.f32.mxu0 0.0
  %1535 = vmatmul.mubr.f32.gmra.mrb[0].mxu0 %v531
  %v1536 = vpop.f32.mrb[0].mxu0
  %v1537 = vadd.f32 0.0, %v1536
  %v1538 = vpop.f32.mrb[0].mxu0
  %1539 = vmatprep.mubr.f32.mxu0 0.0
  %1540 = vmatmul.mubr.f32.gmra.mrb[0].mxu0 %v534
  %v1541 = vpop.f32.mrb[0].mxu0
  %v1542 = vadd.f32 0.0, %v1541
  %v1543 = vpop.f32.mrb[0].mxu0
  %1544 = vmatprep.mubr.f32.mxu0 0.0
  %1545 = vmatmul.mubr.f32.gmra.mrb[0].mxu0 %v537
  %v1546 = vpop.f32.mrb[0].mxu0
  %v1547 = vadd.f32 0.0, %v1546
  %v1548 = vpop.f32.mrb[0].mxu0
  %1549 = vmatprep.mubr.f32.mxu0 0.0
  %1550 = vmatmul.mubr.f32.gmra.mrb[0].mxu0 %v540
  %v1551 = vpop.f32.mrb[0].mxu0
  %v1552 = vadd.f32 0.0, %v1551
  %v1553 = vpop.f32.mrb[0].mxu0
  %1554 = vmatprep.mubr.f32.mxu0 0.0
  %1555 = vmatmul.mubr.f32.gmra.mrb[0].mxu0 %v543
  %v1556 = vpop.f32.mrb[0].mxu0
  %v1557 = vadd.f32 0.0, %v1556
  %v1558 = vpop.f32.mrb[0].mxu0
  %1559 = vmatprep.mubr.f32.mxu0 0.0
  %1560 = vmatmul.mubr.f32.gmra.mrb[0].mxu0 %v546
  %v1561 = vpop.f32.mrb[0].mxu0
  %v1562 = vadd.f32 0.0, %v1561
  %v1563 = vpop.f32.mrb[0].mxu0
  %1564 = vmatprep.mubr.f32.mxu0 0.0
  %1565 = vmatmul.mubr.f32.gmra.mrb[0].mxu0 %v549
  %v1566 = vpop.f32.mrb[0].mxu0
  %v1567 = vadd.f32 0.0, %v1566
  %v1568 = vpop.f32.mrb[0].mxu0
  %1569 = vmatprep.mubr.f32.mxu0 0.0
  %1570 = vmatmul.mubr.f32.gmra.mrb[0].mxu0 %v552
  %v1571 = vpop.f32.mrb[0].mxu0
  %v1572 = vadd.f32 0.0, %v1571
  %v1573 = vpop.f32.mrb[0].mxu0
  %1574 = vmatprep.mubr.f32.mxu0 0.0
  %1575 = vmatmul.mubr.f32.gmra.mrb[0].mxu0 %v555
  %v1576 = vpop.f32.mrb[0].mxu0
  %v1577 = vadd.f32 0.0, %v1576
  %v1578 = vpop.f32.mrb[0].mxu0
  %1579 = vmatprep.mubr.f32.mxu0 0.0
  %1580 = vmatmul.mubr.f32.gmra.mrb[0].mxu0 %v558
  %v1581 = vpop.f32.mrb[0].mxu0
  %v1582 = vadd.f32 0.0, %v1581
  %v1583 = vpop.f32.mrb[0].mxu0
  %1584 = vmatprep.mubr.f32.mxu0 0.0
  %1585 = vmatmul.mubr.f32.gmra.mrb[0].mxu0 %v561
  %v1586 = vpop.f32.mrb[0].mxu0
  %v1587 = vadd.f32 0.0, %v1586
  %v1588 = vpop.f32.mrb[0].mxu0
  %1589 = vmatprep.mubr.f32.mxu0 0.0
  %1590 = vmatmul.mubr.f32.gmra.mrb[0].mxu0 %v564
  %v1591 = vpop.f32.mrb[0].mxu0
  %v1592 = vadd.f32 0.0, %v1591
  %v1593 = vpop.f32.mrb[0].mxu0
  %1594 = vmatprep.mubr.f32.mxu0 0.0
  %1595 = vmatmul.mubr.f32.gmra.mrb[0].mxu0 %v567
  %v1596 = vpop.f32.mrb[0].mxu0
  %v1597 = vadd.f32 0.0, %v1596
  %v1598 = vpop.f32.mrb[0].mxu0
  %1599 = vmatprep.mubr.f32.mxu0 0.0
  %1600 = vmatmul.mubr.f32.gmra.mrb[0].mxu0 %v570
  %v1601 = vpop.f32.mrb[0].mxu0
  %v1602 = vadd.f32 0.0, %v1601
  %v1603 = vpop.f32.mrb[0].mxu0
  %1604 = vmatprep.mubr.f32.mxu0 0.0
  %1605 = vmatmul.mubr.f32.gmra.mrb[0].mxu0 %v573
  %v1606 = vpop.f32.mrb[0].mxu0
  %v1607 = vadd.f32 0.0, %v1606
  %v1608 = vpop.f32.mrb[0].mxu0
  %1609 = vmatprep.mubr.f32.mxu0 0.0
  %1610 = vmatmul.mubr.f32.gmra.mrb[0].mxu0 %v576
  %v1611 = vpop.f32.mrb[0].mxu0
  %v1612 = vadd.f32 0.0, %v1611
  %v1613 = vpop.f32.mrb[0].mxu0
  %1614 = vmatprep.mubr.f32.mxu0 0.0
  %1615 = vmatmul.mubr.f32.gmra.mrb[0].mxu0 %v579
  %v1616 = vpop.f32.mrb[0].mxu0
  %v1617 = vadd.f32 0.0, %v1616
  %v1618 = vpop.f32.mrb[0].mxu0
  %1619 = vmatprep.mubr.f32.mxu0 0.0
  %1620 = vmatmul.mubr.f32.gmra.mrb[0].mxu0 %v582
  %v1621 = vpop.f32.mrb[0].mxu0
  %v1622 = vadd.f32 0.0, %v1621
  %v1623 = vpop.f32.mrb[0].mxu0
  %1624 = vmatprep.mubr.f32.mxu0 0.0
  %1625 = vmatmul.mubr.f32.gmra.mrb[0].mxu0 %v585
  %v1626 = vpop.f32.mrb[0].mxu0
  %v1627 = vadd.f32 0.0, %v1626
  %v1628 = vpop.f32.mrb[0].mxu0
  %1629 = vmatprep.mubr.f32.mxu0 0.0
  %1630 = vmatmul.mubr.f32.gmra.mrb[0].mxu0 %v588
  %v1631 = vpop.f32.mrb[0].mxu0
  %v1632 = vadd.f32 0.0, %v1631
  %v1633 = vpop.f32.mrb[0].mxu0
  %1634 = vmatprep.mubr.f32.mxu0 0.0
  %1635 = vmatmul.mubr.f32.gmra.mrb[0].mxu0 %v591
  %v1636 = vpop.f32.mrb[0].mxu0
  %v1637 = vadd.f32 0.0, %v1636
  %v1638 = vpop.f32.mrb[0].mxu0
  %1639 = vmatprep.mubr.f32.mxu0 0.0
  %1640 = vmatmul.mubr.f32.gmra.mrb[0].mxu0 %v594
  %v1641 = vpop.f32.mrb[0].mxu0
  %v1642 = vadd.f32 0.0, %v1641
  %v1643 = vpop.f32.mrb[0].mxu0
  %1644 = vmatprep.mubr.f32.mxu0 0.0
  %1645 = vmatmul.mubr.f32.gmra.mrb[0].mxu0 %v597
  %v1646 = vpop.f32.mrb[0].mxu0
  %v1647 = vadd.f32 0.0, %v1646
  %v1648 = vpop.f32.mrb[0].mxu0
  %1649 = vmatprep.mubr.f32.mxu0 0.0
  %1650 = vmatmul.mubr.f32.gmra.mrb[0].mxu0 %v600
  %v1651 = vpop.f32.mrb[0].mxu0
  %v1652 = vadd.f32 0.0, %v1651
  %v1653 = vpop.f32.mrb[0].mxu0
  %1654 = vmatprep.mubr.f32.mxu0 0.0
  %1655 = vmatmul.mubr.f32.gmra.mrb[0].mxu0 %v603
  %v1656 = vpop.f32.mrb[0].mxu0
  %v1657 = vadd.f32 0.0, %v1656
  %v1658 = vpop.f32.mrb[0].mxu0
  %1659 = vmatprep.mubr.f32.mxu0 0.0
  %1660 = vmatmul.mubr.f32.gmra.mrb[0].mxu0 %v606
  %v1661 = vpop.f32.mrb[0].mxu0
  %v1662 = vadd.f32 0.0, %v1661
  %v1663 = vpop.f32.mrb[0].mxu0
  %1664 = vmatprep.mubr.f32.mxu0 0.0
  %1665 = vmatmul.mubr.f32.gmra.mrb[0].mxu0 %v609
  %v1666 = vpop.f32.mrb[0].mxu0
  %v1667 = vadd.f32 0.0, %v1666
  %v1668 = vpop.f32.mrb[0].mxu0
  %1669 = vmatprep.mubr.f32.mxu0 0.0
  %1670 = vmatmul.mubr.f32.gmra.mrb[0].mxu0 %v612
  %v1671 = vpop.f32.mrb[0].mxu0
  %v1672 = vadd.f32 0.0, %v1671
  %v1673 = vpop.f32.mrb[0].mxu0
  %1674 = vmatprep.mubr.f32.mxu0 0.0
  %1675 = vmatmul.mubr.f32.gmra.mrb[0].mxu0 %v615
  %v1676 = vpop.f32.mrb[0].mxu0
  %v1677 = vadd.f32 0.0, %v1676
  %v1678 = vpop.f32.mrb[0].mxu0
  %1679 = vmatprep.mubr.f32.mxu0 0.0
  %1680 = vmatmul.mubr.f32.gmra.mrb[0].mxu0 %v618
  %v1681 = vpop.f32.mrb[0].mxu0
  %v1682 = vadd.f32 0.0, %v1681
  %v1683 = vpop.f32.mrb[0].mxu0
  %1684 = vmatprep.mubr.f32.mxu0 0.0
  %1685 = vmatmul.mubr.f32.gmra.mrb[0].mxu0 %v621
  %v1686 = vpop.f32.mrb[0].mxu0
  %v1687 = vadd.f32 0.0, %v1686
  %v1688 = vpop.f32.mrb[0].mxu0
  %1689 = vmatprep.mubr.f32.mxu0 0.0
  %1690 = vmatmul.mubr.f32.gmra.mrb[0].mxu0 %v624
  %v1691 = vpop.f32.mrb[0].mxu0
  %v1692 = vadd.f32 0.0, %v1691
  %v1693 = vpop.f32.mrb[0].mxu0
  %1694 = vmatprep.mubr.f32.mxu0 0.0
  %1695 = vmatmul.mubr.f32.gmra.mrb[0].mxu0 %v627
  %v1696 = vpop.f32.mrb[0].mxu0
  %v1697 = vadd.f32 0.0, %v1696
  %v1698 = vpop.f32.mrb[0].mxu0
  %1699 = vmatprep.mubr.f32.mxu0 0.0
  %1700 = vmatmul.mubr.f32.gmra.mrb[0].mxu0 %v630
  %v1701 = vpop.f32.mrb[0].mxu0
  %v1702 = vadd.f32 0.0, %v1701
  %v1703 = vpop.f32.mrb[0].mxu0
  %1704 = vmatprep.mubr.f32.mxu0 0.0
  %1705 = vmatmul.mubr.f32.gmra.mrb[0].mxu0 %v633
  %v1706 = vpop.f32.mrb[0].mxu0
  %v1707 = vadd.f32 0.0, %v1706
  %v1708 = vpop.f32.mrb[0].mxu0
  %1709 = vmatprep.mubr.f32.mxu0 0.0
  %1710 = vmatmul.mubr.f32.gmra.mrb[0].mxu0 %v636
  %v1711 = vpop.f32.mrb[0].mxu0
  %v1712 = vadd.f32 0.0, %v1711
  %v1713 = vpop.f32.mrb[0].mxu0
  %1714 = vmatprep.mubr.f32.mxu0 0.0
  %1715 = vmatmul.mubr.f32.gmra.mrb[0].mxu0 %v639
  %v1716 = vpop.f32.mrb[0].mxu0
  %v1717 = vadd.f32 0.0, %v1716
  %v1718 = vpop.f32.mrb[0].mxu0
  %1719 = vmatprep.mubr.f32.mxu0 0.0
  %1720 = vmatmul.mubr.f32.gmra.mrb[0].mxu0 %v642
  %v1721 = vpop.f32.mrb[0].mxu0
  %v1722 = vadd.f32 0.0, %v1721
  %v1723 = vpop.f32.mrb[0].mxu0
  %1724 = vmatprep.mubr.f32.mxu0 0.0
  %1725 = vmatmul.mubr.f32.gmra.mrb[0].mxu0 %v645
  %v1726 = vpop.f32.mrb[0].mxu0
  %v1727 = vadd.f32 0.0, %v1726
  %v1728 = vpop.f32.mrb[0].mxu0
  %1729 = vmatprep.mubr.f32.mxu0 0.0
  %1730 = vmatmul.mubr.f32.gmra.mrb[0].mxu0 %v648
  %v1731 = vpop.f32.mrb[0].mxu0
  %v1732 = vadd.f32 0.0, %v1731
  %v1733 = vpop.f32.mrb[0].mxu0
  %1734 = vmatprep.mubr.f32.mxu0 0.0
  %1735 = vmatmul.mubr.f32.gmra.mrb[0].mxu0 %v651
  %v1736 = vpop.f32.mrb[0].mxu0
  %v1737 = vadd.f32 0.0, %v1736
  %v1738 = vpop.f32.mrb[0].mxu0
  %1739 = vmatprep.mubr.f32.mxu0 0.0
  %1740 = vmatmul.mubr.f32.gmra.mrb[0].mxu0 %v654
  %v1741 = vpop.f32.mrb[0].mxu0
  %v1742 = vadd.f32 0.0, %v1741
  %v1743 = vpop.f32.mrb[0].mxu0
  %1744 = vmatprep.mubr.f32.mxu0 0.0
  %1745 = vmatmul.mubr.f32.gmra.mrb[0].mxu0 %v657
  %v1746 = vpop.f32.mrb[0].mxu0
  %v1747 = vadd.f32 0.0, %v1746
  %v1748 = vpop.f32.mrb[0].mxu0
  %1749 = vmatprep.mubr.f32.mxu0 0.0
  %1750 = vmatmul.mubr.f32.gmra.mrb[0].mxu0 %v660
  %v1751 = vpop.f32.mrb[0].mxu0
  %v1752 = vadd.f32 0.0, %v1751
  %v1753 = vpop.f32.mrb[0].mxu0
  %1754 = vmatprep.mubr.f32.mxu0 0.0
  %1755 = vmatmul.mubr.f32.gmra.mrb[0].mxu0 %v663
  %v1756 = vpop.f32.mrb[0].mxu0
  %v1757 = vadd.f32 0.0, %v1756
  %v1758 = vpop.f32.mrb[0].mxu0
  %1759 = vmatprep.mubr.f32.mxu0 0.0
  %1760 = vmatmul.mubr.f32.gmra.mrb[0].mxu0 %v666
  %v1761 = vpop.f32.mrb[0].mxu0
  %v1762 = vadd.f32 0.0, %v1761
  %v1763 = vpop.f32.mrb[0].mxu0
  %1764 = vmatprep.mubr.f32.mxu0 0.0
  %1765 = vmatmul.mubr.f32.gmra.mrb[0].mxu0 %v669
  %v1766 = vpop.f32.mrb[0].mxu0
  %v1767 = vadd.f32 0.0, %v1766
  %v1768 = vpop.f32.mrb[0].mxu0
  %1769 = vmatprep.mubr.f32.mxu0 0.0
  %1770 = vmatmul.mubr.f32.gmra.mrb[0].mxu0 %v672
  %v1771 = vpop.f32.mrb[0].mxu0
  %v1772 = vadd.f32 0.0, %v1771
  %v1773 = vpop.f32.mrb[0].mxu0
  %1774 = vmatprep.mubr.f32.mxu0 0.0
  %1775 = vmatmul.mubr.f32.gmra.mrb[0].mxu0 %v675
  %v1776 = vpop.f32.mrb[0].mxu0
  %v1777 = vadd.f32 0.0, %v1776
  %v1778 = vpop.f32.mrb[0].mxu0
  %1779 = vmatprep.mubr.f32.mxu0 0.0
  %1780 = vmatmul.mubr.f32.gmra.mrb[0].mxu0 %v678
  %v1781 = vpop.f32.mrb[0].mxu0
  %v1782 = vadd.f32 0.0, %v1781
  %v1783 = vpop.f32.mrb[0].mxu0
  %1784 = vmatprep.mubr.f32.mxu0 0.0
  %1785 = vmatmul.mubr.f32.gmra.mrb[0].mxu0 %v681
  %v1786 = vpop.f32.mrb[0].mxu0
  %v1787 = vadd.f32 0.0, %v1786
  %v1788 = vpop.f32.mrb[0].mxu0
  %1789 = vmatprep.mubr.f32.mxu0 0.0
  %1790 = vmatmul.mubr.f32.gmra.mrb[0].mxu0 %v684
  %v1791 = vpop.f32.mrb[0].mxu0
  %v1792 = vadd.f32 0.0, %v1791
  %v1793 = vpop.f32.mrb[0].mxu0
  %1794 = vmatprep.mubr.f32.mxu0 0.0
  %1795 = vmatmul.mubr.f32.gmra.mrb[0].mxu0 %v687
  %v1796 = vpop.f32.mrb[0].mxu0
  %v1797 = vadd.f32 0.0, %v1796
  %v1798 = vpop.f32.mrb[0].mxu0
  %1799 = vmatprep.mubr.f32.mxu0 0.0
  %1800 = vmatmul.mubr.f32.gmra.mrb[0].mxu0 %v690
  %v1801 = vpop.f32.mrb[0].mxu0
  %v1802 = vadd.f32 0.0, %v1801
  %v1803 = vpop.f32.mrb[0].mxu0
  %1804 = vmatprep.mubr.f32.mxu0 0.0
  %1805 = vmatmul.mubr.f32.gmra.mrb[0].mxu0 %v693
  %v1806 = vpop.f32.mrb[0].mxu0
  %v1807 = vadd.f32 0.0, %v1806
  %v1808 = vpop.f32.mrb[0].mxu0
  %1809 = vmatprep.mubr.f32.mxu0 0.0
  %1810 = vmatmul.mubr.f32.gmra.mrb[0].mxu0 %v696
  %v1811 = vpop.f32.mrb[0].mxu0
  %v1812 = vadd.f32 0.0, %v1811
  %v1813 = vpop.f32.mrb[0].mxu0
  %1814 = vmatprep.mubr.f32.mxu0 0.0
  %1815 = vmatmul.mubr.f32.gmra.mrb[0].mxu0 %v699
  %v1816 = vpop.f32.mrb[0].mxu0
  %v1817 = vadd.f32 0.0, %v1816
  %v1818 = vpop.f32.mrb[0].mxu0
  %1819 = vmatprep.mubr.f32.mxu0 0.0
  %1820 = vmatmul.mubr.f32.gmra.mrb[0].mxu0 %v702
  %v1821 = vpop.f32.mrb[0].mxu0
  %v1822 = vadd.f32 0.0, %v1821
  %v1823 = vpop.f32.mrb[0].mxu0
  %1824 = vmatprep.mubr.f32.mxu0 0.0
  %1825 = vmatmul.mubr.f32.gmra.mrb[0].mxu0 %v705
  %v1826 = vpop.f32.mrb[0].mxu0
  %v1827 = vadd.f32 0.0, %v1826
  %v1828 = vpop.f32.mrb[0].mxu0
  %1829 = vmatprep.mubr.f32.mxu0 0.0
  %1830 = vmatmul.mubr.f32.gmra.mrb[0].mxu0 %v708
  %v1831 = vpop.f32.mrb[0].mxu0
  %v1832 = vadd.f32 0.0, %v1831
  %v1833 = vpop.f32.mrb[0].mxu0
  %1834 = vmatprep.mubr.f32.mxu0 0.0
  %1835 = vmatmul.mubr.f32.gmra.mrb[0].mxu0 %v711
  %v1836 = vpop.f32.mrb[0].mxu0
  %v1837 = vadd.f32 0.0, %v1836
  %v1838 = vpop.f32.mrb[0].mxu0
  %1839 = vmatprep.mubr.f32.mxu0 0.0
  %1840 = vmatmul.mubr.f32.gmra.mrb[0].mxu0 %v714
  %v1841 = vpop.f32.mrb[0].mxu0
  %v1842 = vadd.f32 0.0, %v1841
  %v1843 = vpop.f32.mrb[0].mxu0
  %1844 = vmatprep.mubr.f32.mxu0 0.0
  %1845 = vmatmul.mubr.f32.gmra.mrb[0].mxu0 %v717
  %v1846 = vpop.f32.mrb[0].mxu0
  %v1847 = vadd.f32 0.0, %v1846
  %v1848 = vpop.f32.mrb[0].mxu0
  %1849 = vmatprep.mubr.f32.mxu0 0.0
  %1850 = vmatmul.mubr.f32.gmra.mrb[0].mxu0 %v720
  %v1851 = vpop.f32.mrb[0].mxu0
  %v1852 = vadd.f32 0.0, %v1851
  %v1853 = vpop.f32.mrb[0].mxu0
  %1854 = vmatprep.mubr.f32.mxu0 0.0
  %1855 = vmatmul.mubr.f32.gmra.mrb[0].mxu0 %v723
  %v1856 = vpop.f32.mrb[0].mxu0
  %v1857 = vadd.f32 0.0, %v1856
  %v1858 = vpop.f32.mrb[0].mxu0
  %1859 = vmatprep.mubr.f32.mxu0 0.0
  %1860 = vmatmul.mubr.f32.gmra.mrb[0].mxu0 %v726
  %v1861 = vpop.f32.mrb[0].mxu0
  %v1862 = vadd.f32 0.0, %v1861
  %v1863 = vpop.f32.mrb[0].mxu0
  %1864 = vmatprep.mubr.f32.mxu0 0.0
  %1865 = vmatmul.mubr.f32.gmra.mrb[0].mxu0 %v729
  %v1866 = vpop.f32.mrb[0].mxu0
  %v1867 = vadd.f32 0.0, %v1866
  %v1868 = vpop.f32.mrb[0].mxu0
  %1869 = vmatprep.mubr.f32.mxu0 0.0
  %1870 = vmatmul.mubr.f32.gmra.mrb[0].mxu0 %v732
  %v1871 = vpop.f32.mrb[0].mxu0
  %v1872 = vadd.f32 0.0, %v1871
  %v1873 = vpop.f32.mrb[0].mxu0
  %1874 = vmatprep.mubr.f32.mxu0 0.0
  %1875 = vmatmul.mubr.f32.gmra.mrb[0].mxu0 %v735
  %v1876 = vpop.f32.mrb[0].mxu0
  %v1877 = vadd.f32 0.0, %v1876
  %v1878 = vpop.f32.mrb[0].mxu0
  %1879 = vmatprep.mubr.f32.mxu0 0.0
  %1880 = vmatmul.mubr.f32.gmra.mrb[0].mxu0 %v738
  %v1881 = vpop.f32.mrb[0].mxu0
  %v1882 = vadd.f32 0.0, %v1881
  %v1883 = vpop.f32.mrb[0].mxu0
  %1884 = vmatprep.mubr.f32.mxu0 0.0
  %1885 = vmatmul.mubr.f32.gmra.mrb[0].mxu0 %v741
  %v1886 = vpop.f32.mrb[0].mxu0
  %v1887 = vadd.f32 0.0, %v1886
  %v1888 = vpop.f32.mrb[0].mxu0
  %1889 = vmatprep.mubr.f32.mxu0 0.0
  %1890 = vmatmul.mubr.f32.gmra.mrb[0].mxu0 %v744
  %v1891 = vpop.f32.mrb[0].mxu0
  %v1892 = vadd.f32 0.0, %v1891
  %v1893 = vpop.f32.mrb[0].mxu0
  %1894 = vmatprep.mubr.f32.mxu0 0.0
  %1895 = vmatmul.mubr.f32.gmra.mrb[0].mxu0 %v747
  %v1896 = vpop.f32.mrb[0].mxu0
  %v1897 = vadd.f32 0.0, %v1896
  %v1898 = vpop.f32.mrb[0].mxu0
  %1899 = vmatprep.mubr.f32.mxu0 0.0
  %1900 = vmatmul.mubr.f32.gmra.mrb[0].mxu0 %v750
  %v1901 = vpop.f32.mrb[0].mxu0
  %v1902 = vadd.f32 0.0, %v1901
  %v1903 = vpop.f32.mrb[0].mxu0
  %1904 = vmatprep.mubr.f32.mxu0 0.0
  %1905 = vmatmul.mubr.f32.gmra.mrb[0].mxu0 %v753
  %v1906 = vpop.f32.mrb[0].mxu0
  %v1907 = vadd.f32 0.0, %v1906
  %v1908 = vpop.f32.mrb[0].mxu0
  %1909 = vmatprep.mubr.f32.mxu0 0.0
  %1910 = vmatmul.mubr.f32.gmra.mrb[0].mxu0 %v756
  %v1911 = vpop.f32.mrb[0].mxu0
  %v1912 = vadd.f32 0.0, %v1911
  %v1913 = vpop.f32.mrb[0].mxu0
  %1914 = vmatprep.mubr.f32.mxu0 0.0
  %1915 = vmatmul.mubr.f32.gmra.mrb[0].mxu0 %v759
  %v1916 = vpop.f32.mrb[0].mxu0
  %v1917 = vadd.f32 0.0, %v1916
  %v1918 = vpop.f32.mrb[0].mxu0
  %1919 = vmatprep.mubr.f32.mxu0 0.0
  %1920 = vmatmul.mubr.f32.gmra.mrb[0].mxu0 %v762
  %v1921 = vpop.f32.mrb[0].mxu0
  %v1922 = vadd.f32 0.0, %v1921
  %v1923 = vpop.f32.mrb[0].mxu0
  %1924 = vmatprep.mubr.f32.mxu0 0.0
  %1925 = vmatmul.mubr.f32.gmra.mrb[0].mxu0 %v765
  %v1926 = vpop.f32.mrb[0].mxu0
  %v1927 = vadd.f32 0.0, %v1926
  %v1928 = vpop.f32.mrb[0].mxu0
  %1929 = vmatprep.mubr.f32.mxu0 0.0
  %1930 = vmatmul.mubr.f32.gmra.mrb[0].mxu0 %v768
  %v1931 = vpop.f32.mrb[0].mxu0
  %v1932 = vadd.f32 0.0, %v1931
  %v1933 = vpop.f32.mrb[0].mxu0
  %1934 = vmatprep.mubr.f32.mxu0 0.0
  %1935 = vmatmul.mubr.f32.gmra.mrb[0].mxu0 %v771
  %v1936 = vpop.f32.mrb[0].mxu0
  %v1937 = vadd.f32 0.0, %v1936
  %v1938 = vpop.f32.mrb[0].mxu0
  %1939 = vmatprep.mubr.f32.mxu0 0.0
  %1940 = vmatmul.mubr.f32.gmra.mrb[0].mxu0 %v774
  %v1941 = vpop.f32.mrb[0].mxu0
  %v1942 = vadd.f32 0.0, %v1941
  %v1943 = vpop.f32.mrb[0].mxu0
  %1944 = vmatprep.mubr.f32.mxu0 0.0
  %1945 = vmatmul.mubr.f32.gmra.mrb[0].mxu0 %v777
  %v1946 = vpop.f32.mrb[0].mxu0
  %v1947 = vadd.f32 0.0, %v1946
  %v1948 = vpop.f32.mrb[0].mxu0
  %1949 = vmatprep.mubr.f32.mxu0 0.0
  %1950 = vmatmul.mubr.f32.gmra.mrb[0].mxu0 %v780
  %v1951 = vpop.f32.mrb[0].mxu0
  %v1952 = vadd.f32 0.0, %v1951
  %v1953 = vpop.f32.mrb[0].mxu0
  %1954 = vmatprep.mubr.f32.mxu0 0.0
  %1955 = vmatmul.mubr.f32.gmra.mrb[0].mxu0 %v783
  %v1956 = vpop.f32.mrb[0].mxu0
  %v1957 = vadd.f32 0.0, %v1956
  %v1958 = vpop.f32.mrb[0].mxu0
  %1959 = vmatprep.mubr.f32.mxu0 0.0
  %1960 = vmatmul.mubr.f32.gmra.mrb[0].mxu0 %v786
  %v1961 = vpop.f32.mrb[0].mxu0
  %v1962 = vadd.f32 0.0, %v1961
  %v1963 = vpop.f32.mrb[0].mxu0
  %1964 = vmatprep.mubr.f32.mxu0 0.0
  %1965 = vmatmul.mubr.f32.gmra.mrb[0].mxu0 %v789
  %v1966 = vpop.f32.mrb[0].mxu0
  %v1967 = vadd.f32 0.0, %v1966
  %v1968 = vpop.f32.mrb[0].mxu0
  %1969 = vmatprep.mubr.f32.mxu0 0.0
  %1970 = vmatmul.mubr.f32.gmra.mrb[0].mxu0 %v792
  %v1971 = vpop.f32.mrb[0].mxu0
  %v1972 = vadd.f32 0.0, %v1971
  %v1973 = vpop.f32.mrb[0].mxu0
  %1974 = vmatprep.mubr.f32.mxu0 0.0
  %1975 = vmatmul.mubr.f32.gmra.mrb[0].mxu0 %v795
  %v1976 = vpop.f32.mrb[0].mxu0
  %v1977 = vadd.f32 0.0, %v1976
  %v1978 = vpop.f32.mrb[0].mxu0
  %1979 = vmatprep.mubr.f32.mxu0 0.0
  %1980 = vmatmul.mubr.f32.gmra.mrb[0].mxu0 %v798
  %v1981 = vpop.f32.mrb[0].mxu0
  %v1982 = vadd.f32 0.0, %v1981
  %v1983 = vpop.f32.mrb[0].mxu0
  %1984 = vmatprep.mubr.f32.mxu0 0.0
  %1985 = vmatmul.mubr.f32.gmra.mrb[0].mxu0 %v801
  %v1986 = vpop.f32.mrb[0].mxu0
  %v1987 = vadd.f32 0.0, %v1986
  %v1988 = vpop.f32.mrb[0].mxu0
  %1989 = vmatprep.mubr.f32.mxu0 0.0
  %1990 = vmatmul.mubr.f32.gmra.mrb[0].mxu0 %v804
  %v1991 = vpop.f32.mrb[0].mxu0
  %v1992 = vadd.f32 0.0, %v1991
  %v1993 = vpop.f32.mrb[0].mxu0
  %1994 = vmatprep.mubr.f32.mxu0 0.0
  %1995 = vmatmul.mubr.f32.gmra.mrb[0].mxu0 %v807
  %v1996 = vpop.f32.mrb[0].mxu0
  %v1997 = vadd.f32 0.0, %v1996
  %v1998 = vpop.f32.mrb[0].mxu0
  %1999 = vmatprep.mubr.f32.mxu0 0.0
  %2000 = vmatmul.mubr.f32.gmra.mrb[0].mxu0 %v810
  %v2001 = vpop.f32.mrb[0].mxu0
  %v2002 = vadd.f32 0.0, %v2001
  %v2003 = vpop.f32.mrb[0].mxu0
  %2004 = vmatprep.mubr.f32.mxu0 0.0
  %2005 = vmatmul.mubr.f32.gmra.mrb[0].mxu0 %v813
  %v2006 = vpop.f32.mrb[0].mxu0
  %v2007 = vadd.f32 0.0, %v2006
  %v2008 = vpop.f32.mrb[0].mxu0
  %2009 = vmatprep.mubr.f32.mxu0 0.0
  %2010 = vmatmul.mubr.f32.gmra.mrb[0].mxu0 %v816
  %v2011 = vpop.f32.mrb[0].mxu0
  %v2012 = vadd.f32 0.0, %v2011
  %v2013 = vpop.f32.mrb[0].mxu0
  %2014 = vmatprep.mubr.f32.mxu0 0.0
  %2015 = vmatmul.mubr.f32.gmra.mrb[0].mxu0 %v819
  %v2016 = vpop.f32.mrb[0].mxu0
  %v2017 = vadd.f32 0.0, %v2016
  %v2018 = vpop.f32.mrb[0].mxu0
  %2019 = vmatprep.mubr.f32.mxu0 0.0
  %2020 = vmatmul.mubr.f32.gmra.mrb[0].mxu0 %v822
  %v2021 = vpop.f32.mrb[0].mxu0
  %v2022 = vadd.f32 0.0, %v2021
  %v2023 = vpop.f32.mrb[0].mxu0
  %2024 = vmatprep.mubr.f32.mxu0 0.0
  %2025 = vmatmul.mubr.f32.gmra.mrb[0].mxu0 %v825
  %v2026 = vpop.f32.mrb[0].mxu0
  %v2027 = vadd.f32 0.0, %v2026
  %v2028 = vpop.f32.mrb[0].mxu0
  %2029 = vmatprep.mubr.f32.mxu0 0.0
  %2030 = vmatmul.mubr.f32.gmra.mrb[0].mxu0 %v828
  %v2031 = vpop.f32.mrb[0].mxu0
  %v2032 = vadd.f32 0.0, %v2031
  %v2033 = vpop.f32.mrb[0].mxu0
  %2034 = vmatprep.mubr.f32.mxu0 0.0
  %2035 = vmatmul.mubr.f32.gmra.mrb[0].mxu0 %v831
  %v2036 = vpop.f32.mrb[0].mxu0
  %v2037 = vadd.f32 0.0, %v2036
  %v2038 = vpop.f32.mrb[0].mxu0
  %2039 = vmatprep.mubr.f32.mxu0 0.0
  %2040 = vmatmul.mubr.f32.gmra.mrb[0].mxu0 %v834
  %v2041 = vpop.f32.mrb[0].mxu0
  %v2042 = vadd.f32 0.0, %v2041
  %v2043 = vpop.f32.mrb[0].mxu0
  %2044 = vmatprep.mubr.f32.mxu0 0.0
  %2045 = vmatmul.mubr.f32.gmra.mrb[0].mxu0 %v837
  %v2046 = vpop.f32.mrb[0].mxu0
  %v2047 = vadd.f32 0.0, %v2046
  %v2048 = vpop.f32.mrb[0].mxu0
  %2049 = vmatprep.mubr.f32.mxu0 0.0
  %2050 = vmatmul.mubr.f32.gmra.mrb[0].mxu0 %v840
  %v2051 = vpop.f32.mrb[0].mxu0
  %v2052 = vadd.f32 0.0, %v2051
  %v2053 = vpop.f32.mrb[0].mxu0
  %2054 = vmatprep.mubr.f32.mxu0 0.0
  %2055 = vmatmul.mubr.f32.gmra.mrb[0].mxu0 %v843
  %v2056 = vpop.f32.mrb[0].mxu0
  %v2057 = vadd.f32 0.0, %v2056
  %v2058 = vpop.f32.mrb[0].mxu0
  %2059 = vmatprep.mubr.f32.mxu0 0.0
  %2060 = vmatmul.mubr.f32.gmra.mrb[0].mxu0 %v846
  %v2061 = vpop.f32.mrb[0].mxu0
  %v2062 = vadd.f32 0.0, %v2061
  %v2063 = vpop.f32.mrb[0].mxu0
  %2064 = vmatprep.mubr.f32.mxu0 0.0
  %2065 = vmatmul.mubr.f32.gmra.mrb[0].mxu0 %v849
  %v2066 = vpop.f32.mrb[0].mxu0
  %v2067 = vadd.f32 0.0, %v2066
  %v2068 = vpop.f32.mrb[0].mxu0
  %2069 = vmatprep.mubr.f32.mxu0 0.0
  %2070 = vmatmul.mubr.f32.gmra.mrb[0].mxu0 %v852
  %v2071 = vpop.f32.mrb[0].mxu0
  %v2072 = vadd.f32 0.0, %v2071
  %v2073 = vpop.f32.mrb[0].mxu0
  %2074 = vmatprep.mubr.f32.mxu0 0.0
  %2075 = vmatmul.mubr.f32.gmra.mrb[0].mxu0 %v855
  %v2076 = vpop.f32.mrb[0].mxu0
  %v2077 = vadd.f32 0.0, %v2076
  %v2078 = vpop.f32.mrb[0].mxu0
  %2079 = vmatprep.mubr.f32.mxu0 0.0
  %2080 = vmatmul.mubr.f32.gmra.mrb[0].mxu0 %v858
  %v2081 = vpop.f32.mrb[0].mxu0
  %v2082 = vadd.f32 0.0, %v2081
  %v2083 = vpop.f32.mrb[0].mxu0
  %2084 = vmatprep.mubr.f32.mxu0 0.0
  %2085 = vmatmul.mubr.f32.gmra.mrb[0].mxu0 %v861
  %v2086 = vpop.f32.mrb[0].mxu0
  %v2087 = vadd.f32 0.0, %v2086
  %v2088 = vpop.f32.mrb[0].mxu0
  %2089 = vmatprep.mubr.f32.mxu0 0.0
  %2090 = vmatmul.mubr.f32.gmra.mrb[0].mxu0 %v864
  %v2091 = vpop.f32.mrb[0].mxu0
  %v2092 = vadd.f32 0.0, %v2091
  %v2093 = vpop.f32.mrb[0].mxu0
  %2094 = vmatprep.mubr.f32.mxu0 0.0
  %2095 = vmatmul.mubr.f32.gmra.mrb[0].mxu0 %v867
  %v2096 = vpop.f32.mrb[0].mxu0
  %v2097 = vadd.f32 0.0, %v2096
  %v2098 = vpop.f32.mrb[0].mxu0
  %2099 = vmatprep.mubr.f32.mxu0 0.0
  %2100 = vmatmul.mubr.f32.gmra.mrb[0].mxu0 %v870
  %v2101 = vpop.f32.mrb[0].mxu0
  %v2102 = vadd.f32 0.0, %v2101
  %v2103 = vpop.f32.mrb[0].mxu0
  %2104 = vmatprep.mubr.f32.mxu0 0.0
  %2105 = vmatmul.mubr.f32.gmra.mrb[0].mxu0 %v873
  %v2106 = vpop.f32.mrb[0].mxu0
  %v2107 = vadd.f32 0.0, %v2106
  %v2108 = vpop.f32.mrb[0].mxu0
  %2109 = vmatprep.mubr.f32.mxu0 0.0
  %2110 = vmatmul.mubr.f32.gmra.mrb[0].mxu0 %v876
  %v2111 = vpop.f32.mrb[0].mxu0
  %v2112 = vadd.f32 0.0, %v2111
  %v2113 = vpop.f32.mrb[0].mxu0
  %2114 = vmatprep.mubr.f32.mxu0 0.0
  %2115 = vmatmul.mubr.f32.gmra.mrb[0].mxu0 %v879
  %v2116 = vpop.f32.mrb[0].mxu0
  %v2117 = vadd.f32 0.0, %v2116
  %v2118 = vpop.f32.mrb[0].mxu0
  %2119 = vmatprep.mubr.f32.mxu0 0.0
  %2120 = vmatmul.mubr.f32.gmra.mrb[0].mxu0 %v882
  %v2121 = vpop.f32.mrb[0].mxu0
  %v2122 = vadd.f32 0.0, %v2121
  %v2123 = vpop.f32.mrb[0].mxu0
  %2124 = vmatprep.mubr.f32.mxu0 0.0
  %2125 = vmatmul.mubr.f32.gmra.mrb[0].mxu0 %v885
  %v2126 = vpop.f32.mrb[0].mxu0
  %v2127 = vadd.f32 0.0, %v2126
  %v2128 = vpop.f32.mrb[0].mxu0
  %2129 = vmatprep.mubr.f32.mxu0 0.0
  %2130 = vmatmul.mubr.f32.gmra.mrb[0].mxu0 %v888
  %v2131 = vpop.f32.mrb[0].mxu0
  %v2132 = vadd.f32 0.0, %v2131
  %v2133 = vpop.f32.mrb[0].mxu0
  %2134 = vmatprep.mubr.f32.mxu0 0.0
  %2135 = vmatmul.mubr.f32.gmra.mrb[0].mxu0 %v891
  %v2136 = vpop.f32.mrb[0].mxu0
  %v2137 = vadd.f32 0.0, %v2136
  %v2138 = vpop.f32.mrb[0].mxu0
  %2139 = vmatprep.mubr.f32.mxu0 0.0
  %2140 = vmatmul.mubr.f32.gmra.mrb[0].mxu0 %v894
  %v2141 = vpop.f32.mrb[0].mxu0
  %v2142 = vadd.f32 0.0, %v2141
  %v2143 = vpop.f32.mrb[0].mxu0
  %2144 = vmatprep.mubr.f32.mxu0 0.0
  %2145 = vmatmul.mubr.f32.gmra.mrb[0].mxu0 %v897
  %v2146 = vpop.f32.mrb[0].mxu0
  %v2147 = vadd.f32 0.0, %v2146
  %v2148 = vpop.f32.mrb[0].mxu0
  %2149 = vmatprep.mubr.f32.mxu0 0.0
  %2150 = vmatmul.mubr.f32.gmra.mrb[0].mxu0 %v900
  %v2151 = vpop.f32.mrb[0].mxu0
  %v2152 = vadd.f32 0.0, %v2151
  %v2153 = vpop.f32.mrb[0].mxu0
  %2154 = vmatprep.mubr.f32.mxu0 0.0
  %2155 = vmatmul.mubr.f32.gmra.mrb[0].mxu0 %v903
  %v2156 = vpop.f32.mrb[0].mxu0
  %v2157 = vadd.f32 0.0, %v2156
  %v2158 = vpop.f32.mrb[0].mxu0
  %2159 = vmatprep.mubr.f32.mxu0 0.0
  %2160 = vmatmul.mubr.f32.gmra.mrb[0].mxu0 %v906
  %v2161 = vpop.f32.mrb[0].mxu0
  %v2162 = vadd.f32 0.0, %v2161
  %v2163 = vpop.f32.mrb[0].mxu0
  %2164 = vmatprep.mubr.f32.mxu0 0.0
  %2165 = vmatmul.mubr.f32.gmra.mrb[0].mxu0 %v909
  %v2166 = vpop.f32.mrb[0].mxu0
  %v2167 = vadd.f32 0.0, %v2166
  %v2168 = vpop.f32.mrb[0].mxu0
  %2169 = vmatprep.mubr.f32.mxu0 0.0
  %2170 = vmatmul.mubr.f32.gmra.mrb[0].mxu0 %v912
  %v2171 = vpop.f32.mrb[0].mxu0
  %v2172 = vadd.f32 0.0, %v2171
  %v2173 = vpop.f32.mrb[0].mxu0
  %2174 = vmatprep.mubr.f32.mxu0 0.0
  %2175 = vmatmul.mubr.f32.gmra.mrb[0].mxu0 %v915
  %v2176 = vpop.f32.mrb[0].mxu0
  %v2177 = vadd.f32 0.0, %v2176
  %v2178 = vpop.f32.mrb[0].mxu0
  %2179 = vmatprep.mubr.f32.mxu0 0.0
  %2180 = vmatmul.mubr.f32.gmra.mrb[0].mxu0 %v918
  %v2181 = vpop.f32.mrb[0].mxu0
  %v2182 = vadd.f32 0.0, %v2181
  %v2183 = vpop.f32.mrb[0].mxu0
  %2184 = vmatprep.mubr.f32.mxu0 0.0
  %2185 = vmatmul.mubr.f32.gmra.mrb[0].mxu0 %v921
  %v2186 = vpop.f32.mrb[0].mxu0
  %v2187 = vadd.f32 0.0, %v2186
  %v2188 = vpop.f32.mrb[0].mxu0
  %2189 = vmatprep.mubr.f32.mxu0 0.0
  %2190 = vmatmul.mubr.f32.gmra.mrb[0].mxu0 %v924
  %v2191 = vpop.f32.mrb[0].mxu0
  %v2192 = vadd.f32 0.0, %v2191
  %v2193 = vpop.f32.mrb[0].mxu0
  %2194 = vmatprep.mubr.f32.mxu0 0.0
  %2195 = vmatmul.mubr.f32.gmra.mrb[0].mxu0 %v927
  %v2196 = vpop.f32.mrb[0].mxu0
  %v2197 = vadd.f32 0.0, %v2196
  %v2198 = vpop.f32.mrb[0].mxu0
  %2199 = vmatprep.mubr.f32.mxu0 0.0
  %2200 = vmatmul.mubr.f32.gmra.mrb[0].mxu0 %v930
  %v2201 = vpop.f32.mrb[0].mxu0
  %v2202 = vadd.f32 0.0, %v2201
  %v2203 = vpop.f32.mrb[0].mxu0
  %2204 = vmatprep.mubr.f32.mxu0 0.0
  %2205 = vmatmul.mubr.f32.gmra.mrb[0].mxu0 %v933
  %v2206 = vpop.f32.mrb[0].mxu0
  %v2207 = vadd.f32 0.0, %v2206
  %v2208 = vpop.f32.mrb[0].mxu0
  %2209 = vmatprep.mubr.f32.mxu0 0.0
  %2210 = vmatmul.mubr.f32.gmra.mrb[0].mxu0 %v936
  %v2211 = vpop.f32.mrb[0].mxu0
  %v2212 = vadd.f32 0.0, %v2211
  %v2213 = vpop.f32.mrb[0].mxu0
  %2214 = vmatprep.mubr.f32.mxu0 0.0
  %2215 = vmatmul.mubr.f32.gmra.mrb[0].mxu0 %v939
  %v2216 = vpop.f32.mrb[0].mxu0
  %v2217 = vadd.f32 0.0, %v2216
  %v2218 = vpop.f32.mrb[0].mxu0
  %2219 = vmatprep.mubr.f32.mxu0 0.0
  %2220 = vmatmul.mubr.f32.gmra.mrb[0].mxu0 %v942
  %v2221 = vpop.f32.mrb[0].mxu0
  %v2222 = vadd.f32 0.0, %v2221
  %v2223 = vpop.f32.mrb[0].mxu0
  %2224 = vmatprep.mubr.f32.mxu0 0.0
  %2225 = vmatmul.mubr.f32.gmra.mrb[0].mxu0 %v945
  %v2226 = vpop.f32.mrb[0].mxu0
  %v2227 = vadd.f32 0.0, %v2226
  %v2228 = vpop.f32.mrb[0].mxu0
  %2229 = vmatprep.mubr.f32.mxu0 0.0
  %2230 = vmatmul.mubr.f32.gmra.mrb[0].mxu0 %v948
  %v2231 = vpop.f32.mrb[0].mxu0
  %v2232 = vadd.f32 0.0, %v2231
  %v2233 = vpop.f32.mrb[0].mxu0
  %2234 = vmatprep.mubr.f32.mxu0 0.0
  %2235 = vmatmul.mubr.f32.gmra.mrb[0].mxu0 %v951
  %v2236 = vpop.f32.mrb[0].mxu0
  %v2237 = vadd.f32 0.0, %v2236
  %v2238 = vpop.f32.mrb[0].mxu0
  %2239 = vmatprep.mubr.f32.mxu0 0.0
  %2240 = vmatmul.mubr.f32.gmra.mrb[0].mxu0 %v954
  %v2241 = vpop.f32.mrb[0].mxu0
  %v2242 = vadd.f32 0.0, %v2241
  %v2243 = vpop.f32.mrb[0].mxu0
  %2244 = vmatprep.mubr.f32.mxu0 0.0
  %2245 = vmatmul.mubr.f32.gmra.mrb[0].mxu0 %v957
  %v2246 = vpop.f32.mrb[0].mxu0
  %v2247 = vadd.f32 0.0, %v2246
  %v2248 = vpop.f32.mrb[0].mxu0
  %2249 = vmatprep.mubr.f32.mxu0 0.0
  %2250 = vmatmul.mubr.f32.gmra.mrb[0].mxu0 %v960
  %v2251 = vpop.f32.mrb[0].mxu0
  %v2252 = vadd.f32 0.0, %v2251
  %v2253 = vpop.f32.mrb[0].mxu0
  %2254 = vmatprep.mubr.f32.mxu0 0.0
  %2255 = vmatmul.mubr.f32.gmra.mrb[0].mxu0 %v963
  %v2256 = vpop.f32.mrb[0].mxu0
  %v2257 = vadd.f32 0.0, %v2256
  %v2258 = vpop.f32.mrb[0].mxu0
  %2259 = vmatprep.mubr.f32.mxu0 0.0
  %2260 = vmatmul.mubr.f32.gmra.mrb[0].mxu0 %v966
  %v2261 = vpop.f32.mrb[0].mxu0
  %v2262 = vadd.f32 0.0, %v2261
  %v2263 = vpop.f32.mrb[0].mxu0
  %2264 = vmatprep.mubr.f32.mxu0 0.0
  %2265 = vmatmul.mubr.f32.gmra.mrb[0].mxu0 %v969
  %v2266 = vpop.f32.mrb[0].mxu0
  %v2267 = vadd.f32 0.0, %v2266
  %v2268 = vpop.f32.mrb[0].mxu0
  %2269 = vmatprep.mubr.f32.mxu0 0.0
  %2270 = vmatmul.mubr.f32.gmra.mrb[0].mxu0 %v972
  %v2271 = vpop.f32.mrb[0].mxu0
  %v2272 = vadd.f32 0.0, %v2271
  %v2273 = vpop.f32.mrb[0].mxu0
  %2274 = vmatprep.mubr.f32.mxu0 0.0
  %2275 = vmatmul.mubr.f32.gmra.mrb[0].mxu0 %v975
  %v2276 = vpop.f32.mrb[0].mxu0
  %v2277 = vadd.f32 0.0, %v2276
  %v2278 = vpop.f32.mrb[0].mxu0
  %2279 = vmatprep.mubr.f32.mxu0 0.0
  %2280 = vmatmul.mubr.f32.gmra.mrb[0].mxu0 %v978
  %v2281 = vpop.f32.mrb[0].mxu0
  %v2282 = vadd.f32 0.0, %v2281
  %v2283 = vpop.f32.mrb[0].mxu0
  %2284 = vmatprep.mubr.f32.mxu0 0.0
  %2285 = vmatmul.mubr.f32.gmra.mrb[0].mxu0 %v981
  %v2286 = vpop.f32.mrb[0].mxu0
  %v2287 = vadd.f32 0.0, %v2286
  %v2288 = vpop.f32.mrb[0].mxu0
  %2289 = vmatprep.mubr.f32.mxu0 0.0
  %2290 = vmatmul.mubr.f32.gmra.mrb[0].mxu0 %v984
  %v2291 = vpop.f32.mrb[0].mxu0
  %v2292 = vadd.f32 0.0, %v2291
  %v2293 = vpop.f32.mrb[0].mxu0
  %2294 = vmatprep.mubr.f32.mxu0 0.0
  %2295 = vmatmul.mubr.f32.gmra.mrb[0].mxu0 %v987
  %v2296 = vpop.f32.mrb[0].mxu0
  %v2297 = vadd.f32 0.0, %v2296
  %v2298 = vpop.f32.mrb[0].mxu0
  %2299 = vmatprep.mubr.f32.mxu0 0.0
  %2300 = vmatmul.mubr.f32.gmra.mrb[0].mxu0 %v990
  %v2301 = vpop.f32.mrb[0].mxu0
  %v2302 = vadd.f32 0.0, %v2301
  %v2303 = vpop.f32.mrb[0].mxu0
  %2304 = vmatprep.mubr.f32.mxu0 0.0
  %2305 = vmatmul.mubr.f32.gmra.mrb[0].mxu0 %v993
  %v2306 = vpop.f32.mrb[0].mxu0
  %v2307 = vadd.f32 0.0, %v2306
  %v2308 = vpop.f32.mrb[0].mxu0
  %2309 = vmatprep.mubr.f32.mxu0 0.0
  %2310 = vmatmul.mubr.f32.gmra.mrb[0].mxu0 %v996
  %v2311 = vpop.f32.mrb[0].mxu0
  %v2312 = vadd.f32 0.0, %v2311
  %v2313 = vpop.f32.mrb[0].mxu0
  %2314 = vmatprep.mubr.f32.mxu0 0.0
  %2315 = vmatmul.mubr.f32.gmra.mrb[0].mxu0 %v999
  %v2316 = vpop.f32.mrb[0].mxu0
  %v2317 = vadd.f32 0.0, %v2316
  %v2318 = vpop.f32.mrb[0].mxu0
  %2319 = vmatprep.mubr.f32.mxu0 0.0
  %2320 = vmatmul.mubr.f32.gmra.mrb[0].mxu0 %v1002
  %v2321 = vpop.f32.mrb[0].mxu0
  %v2322 = vadd.f32 0.0, %v2321
  %v2323 = vpop.f32.mrb[0].mxu0
  %2324 = vmatprep.mubr.f32.mxu0 0.0
  %2325 = vmatmul.mubr.f32.gmra.mrb[0].mxu0 %v1005
  %v2326 = vpop.f32.mrb[0].mxu0
  %v2327 = vadd.f32 0.0, %v2326
  %v2328 = vpop.f32.mrb[0].mxu0
  %2329 = vmatprep.mubr.f32.mxu0 0.0
  %2330 = vmatmul.mubr.f32.gmra.mrb[0].mxu0 %v1008
  %v2331 = vpop.f32.mrb[0].mxu0
  %v2332 = vadd.f32 0.0, %v2331
  %v2333 = vpop.f32.mrb[0].mxu0
  %2334 = vmatprep.mubr.f32.mxu0 0.0
  %2335 = vmatmul.mubr.f32.gmra.mrb[0].mxu0 %v1011
  %v2336 = vpop.f32.mrb[0].mxu0
  %v2337 = vadd.f32 0.0, %v2336
  %v2338 = vpop.f32.mrb[0].mxu0
  %2339 = vmatprep.mubr.f32.mxu0 0.0
  %2340 = vmatmul.mubr.f32.gmra.mrb[0].mxu0 %v1014
  %v2341 = vpop.f32.mrb[0].mxu0
  %v2342 = vadd.f32 0.0, %v2341
  %v2343 = vpop.f32.mrb[0].mxu0
  %2344 = vmatprep.mubr.f32.mxu0 0.0
  %2345 = vmatmul.mubr.f32.gmra.mrb[0].mxu0 %v1017
  %v2346 = vpop.f32.mrb[0].mxu0
  %v2347 = vadd.f32 0.0, %v2346
  %v2348 = vpop.f32.mrb[0].mxu0
  %2349 = vmatprep.mubr.f32.mxu0 0.0
  %2350 = vmatmul.mubr.f32.gmra.mrb[0].mxu0 %v1020
  %v2351 = vpop.f32.mrb[0].mxu0
  %v2352 = vadd.f32 0.0, %v2351
  %v2353 = vpop.f32.mrb[0].mxu0
  %2354 = vmatprep.mubr.f32.mxu0 0.0
  %2355 = vmatmul.mubr.f32.gmra.mrb[0].mxu0 %v1023
  %v2356 = vpop.f32.mrb[0].mxu0
  %v2357 = vadd.f32 0.0, %v2356
  %v2358 = vpop.f32.mrb[0].mxu0
  %2359 = vmatprep.mubr.f32.mxu0 0.0
  %2360 = vmatmul.mubr.f32.gmra.mrb[0].mxu0 %v1026
  %v2361 = vpop.f32.mrb[0].mxu0
  %v2362 = vadd.f32 0.0, %v2361
  %v2363 = vpop.f32.mrb[0].mxu0
  %2364 = vmatprep.mubr.f32.mxu0 0.0
  %2365 = vmatmul.mubr.f32.gmra.mrb[0].mxu0 %v1029
  %v2366 = vpop.f32.mrb[0].mxu0
  %v2367 = vadd.f32 0.0, %v2366
  %v2368 = vpop.f32.mrb[0].mxu0
  %2369 = vmatprep.mubr.f32.mxu0 0.0
  %2370 = vmatmul.mubr.f32.gmra.mrb[0].mxu0 %v1032
  %v2371 = vpop.f32.mrb[0].mxu0
  %v2372 = vadd.f32 0.0, %v2371
  %v2373 = vpop.f32.mrb[0].mxu0
  %2374 = vmatprep.mubr.f32.mxu0 0.0
  %2375 = vmatmul.mubr.f32.gmra.mrb[0].mxu0 %v1035
  %v2376 = vpop.f32.mrb[0].mxu0
  %v2377 = vadd.f32 0.0, %v2376
  %v2378 = vpop.f32.mrb[0].mxu0
  %2379 = vmatprep.mubr.f32.mxu0 0.0
  %2380 = vmatmul.mubr.f32.gmra.mrb[0].mxu0 %v1038
  %v2381 = vpop.f32.mrb[0].mxu0
  %v2382 = vadd.f32 0.0, %v2381
  %v2383 = vpop.f32.mrb[0].mxu0
  %2384 = vmatprep.mubr.f32.mxu0 0.0
  %2385 = vmatmul.mubr.f32.gmra.mrb[0].mxu0 %v1041
  %v2386 = vpop.f32.mrb[0].mxu0
  %v2387 = vadd.f32 0.0, %v2386
  %v2388 = vpop.f32.mrb[0].mxu0
  %2389 = vmatprep.mubr.f32.mxu0 0.0
  %2390 = vmatmul.mubr.f32.gmra.mrb[0].mxu0 %v1044
  %v2391 = vpop.f32.mrb[0].mxu0
  %v2392 = vadd.f32 0.0, %v2391
  %v2393 = vpop.f32.mrb[0].mxu0
  %2394 = vdwg.mxu0
  %vm2395 = vcmask 523264
  %v2396 = vsel %vm2395, %v1117, 0.0
  %v2397 = vsel %vm2395, %v1122, 0.0
  %v2398 = vadd.f32 %v2396, %v2397
  %v2399 = vsel %vm2395, %v1127, 0.0
  %v2400 = vadd.f32 %v2398, %v2399
  %v2401 = vsel %vm2395, %v1132, 0.0
  %v2402 = vadd.f32 %v2400, %v2401
  %v2403 = vsel %vm2395, %v1137, 0.0
  %v2404 = vadd.f32 %v2402, %v2403
  %v2405 = vsel %vm2395, %v1142, 0.0
  %v2406 = vadd.f32 %v2404, %v2405
  %v2407 = vsel %vm2395, %v1147, 0.0
  %v2408 = vadd.f32 %v2406, %v2407
  %v2409 = vsel %vm2395, %v1152, 0.0
  %v2410 = vadd.f32 %v2408, %v2409
  %v2411 = vrot.slane %v2410, 4
  %v2412 = vadd.f32 %v2410, %v2411
  %v2413 = vrot.slane %v2412, 2
  %v2414 = vadd.f32 %v2412, %v2413
  %v2415 = vrot.slane %v2414, 1
  %v2416 = vadd.f32 %v2414, %v2415
  %v2417 = vsel %vm2395, %v1157, 0.0
  %v2418 = vsel %vm2395, %v1162, 0.0
  %v2419 = vadd.f32 %v2417, %v2418
  %v2420 = vsel %vm2395, %v1167, 0.0
  %v2421 = vadd.f32 %v2419, %v2420
  %v2422 = vsel %vm2395, %v1172, 0.0
  %v2423 = vadd.f32 %v2421, %v2422
  %v2424 = vsel %vm2395, %v1177, 0.0
  %v2425 = vadd.f32 %v2423, %v2424
  %v2426 = vsel %vm2395, %v1182, 0.0
  %v2427 = vadd.f32 %v2425, %v2426
  %v2428 = vsel %vm2395, %v1187, 0.0
  %v2429 = vadd.f32 %v2427, %v2428
  %v2430 = vsel %vm2395, %v1192, 0.0
  %v2431 = vadd.f32 %v2429, %v2430
  %v2432 = vrot.slane %v2431, 4
  %v2433 = vadd.f32 %v2431, %v2432
  %v2434 = vrot.slane %v2433, 2
  %v2435 = vadd.f32 %v2433, %v2434
  %v2436 = vrot.slane %v2435, 1
  %v2437 = vadd.f32 %v2435, %v2436
  %v2438 = vsel %vm2395, %v1197, 0.0
  %v2439 = vsel %vm2395, %v1202, 0.0
  %v2440 = vadd.f32 %v2438, %v2439
  %v2441 = vsel %vm2395, %v1207, 0.0
  %v2442 = vadd.f32 %v2440, %v2441
  %v2443 = vsel %vm2395, %v1212, 0.0
  %v2444 = vadd.f32 %v2442, %v2443
  %v2445 = vsel %vm2395, %v1217, 0.0
  %v2446 = vadd.f32 %v2444, %v2445
  %v2447 = vsel %vm2395, %v1222, 0.0
  %v2448 = vadd.f32 %v2446, %v2447
  %v2449 = vsel %vm2395, %v1227, 0.0
  %v2450 = vadd.f32 %v2448, %v2449
  %v2451 = vsel %vm2395, %v1232, 0.0
  %v2452 = vadd.f32 %v2450, %v2451
  %v2453 = vrot.slane %v2452, 4
  %v2454 = vadd.f32 %v2452, %v2453
  %v2455 = vrot.slane %v2454, 2
  %v2456 = vadd.f32 %v2454, %v2455
  %v2457 = vrot.slane %v2456, 1
  %v2458 = vadd.f32 %v2456, %v2457
  %v2459 = vsel %vm2395, %v1237, 0.0
  %v2460 = vsel %vm2395, %v1242, 0.0
  %v2461 = vadd.f32 %v2459, %v2460
  %v2462 = vsel %vm2395, %v1247, 0.0
  %v2463 = vadd.f32 %v2461, %v2462
  %v2464 = vsel %vm2395, %v1252, 0.0
  %v2465 = vadd.f32 %v2463, %v2464
  %v2466 = vsel %vm2395, %v1257, 0.0
  %v2467 = vadd.f32 %v2465, %v2466
  %v2468 = vsel %vm2395, %v1262, 0.0
  %v2469 = vadd.f32 %v2467, %v2468
  %v2470 = vsel %vm2395, %v1267, 0.0
  %v2471 = vadd.f32 %v2469, %v2470
  %v2472 = vsel %vm2395, %v1272, 0.0
  %v2473 = vadd.f32 %v2471, %v2472
  %v2474 = vrot.slane %v2473, 4
  %v2475 = vadd.f32 %v2473, %v2474
  %v2476 = vrot.slane %v2475, 2
  %v2477 = vadd.f32 %v2475, %v2476
  %v2478 = vrot.slane %v2477, 1
  %v2479 = vadd.f32 %v2477, %v2478
  %v2480 = vsel %vm2395, %v1277, 0.0
  %v2481 = vsel %vm2395, %v1282, 0.0
  %v2482 = vadd.f32 %v2480, %v2481
  %v2483 = vsel %vm2395, %v1287, 0.0
  %v2484 = vadd.f32 %v2482, %v2483
  %v2485 = vsel %vm2395, %v1292, 0.0
  %v2486 = vadd.f32 %v2484, %v2485
  %v2487 = vsel %vm2395, %v1297, 0.0
  %v2488 = vadd.f32 %v2486, %v2487
  %v2489 = vsel %vm2395, %v1302, 0.0
  %v2490 = vadd.f32 %v2488, %v2489
  %v2491 = vsel %vm2395, %v1307, 0.0
  %v2492 = vadd.f32 %v2490, %v2491
  %v2493 = vsel %vm2395, %v1312, 0.0
  %v2494 = vadd.f32 %v2492, %v2493
  %v2495 = vrot.slane %v2494, 4
  %v2496 = vadd.f32 %v2494, %v2495
  %v2497 = vrot.slane %v2496, 2
  %v2498 = vadd.f32 %v2496, %v2497
  %v2499 = vrot.slane %v2498, 1
  %v2500 = vadd.f32 %v2498, %v2499
  %v2501 = vsel %vm2395, %v1317, 0.0
  %v2502 = vsel %vm2395, %v1322, 0.0
  %v2503 = vadd.f32 %v2501, %v2502
  %v2504 = vsel %vm2395, %v1327, 0.0
  %v2505 = vadd.f32 %v2503, %v2504
  %v2506 = vsel %vm2395, %v1332, 0.0
  %v2507 = vadd.f32 %v2505, %v2506
  %v2508 = vsel %vm2395, %v1337, 0.0
  %v2509 = vadd.f32 %v2507, %v2508
  %v2510 = vsel %vm2395, %v1342, 0.0
  %v2511 = vadd.f32 %v2509, %v2510
  %v2512 = vsel %vm2395, %v1347, 0.0
  %v2513 = vadd.f32 %v2511, %v2512
  %v2514 = vsel %vm2395, %v1352, 0.0
  %v2515 = vadd.f32 %v2513, %v2514
  %v2516 = vrot.slane %v2515, 4
  %v2517 = vadd.f32 %v2515, %v2516
  %v2518 = vrot.slane %v2517, 2
  %v2519 = vadd.f32 %v2517, %v2518
  %v2520 = vrot.slane %v2519, 1
  %v2521 = vadd.f32 %v2519, %v2520
  %v2522 = vsel %vm2395, %v1357, 0.0
  %v2523 = vsel %vm2395, %v1362, 0.0
  %v2524 = vadd.f32 %v2522, %v2523
  %v2525 = vsel %vm2395, %v1367, 0.0
  %v2526 = vadd.f32 %v2524, %v2525
  %v2527 = vsel %vm2395, %v1372, 0.0
  %v2528 = vadd.f32 %v2526, %v2527
  %v2529 = vsel %vm2395, %v1377, 0.0
  %v2530 = vadd.f32 %v2528, %v2529
  %v2531 = vsel %vm2395, %v1382, 0.0
  %v2532 = vadd.f32 %v2530, %v2531
  %v2533 = vsel %vm2395, %v1387, 0.0
  %v2534 = vadd.f32 %v2532, %v2533
  %v2535 = vsel %vm2395, %v1392, 0.0
  %v2536 = vadd.f32 %v2534, %v2535
  %v2537 = vrot.slane %v2536, 4
  %v2538 = vadd.f32 %v2536, %v2537
  %v2539 = vrot.slane %v2538, 2
  %v2540 = vadd.f32 %v2538, %v2539
  %v2541 = vrot.slane %v2540, 1
  %v2542 = vadd.f32 %v2540, %v2541
  %v2543 = vsel %vm2395, %v1397, 0.0
  %v2544 = vsel %vm2395, %v1402, 0.0
  %v2545 = vadd.f32 %v2543, %v2544
  %v2546 = vsel %vm2395, %v1407, 0.0
  %v2547 = vadd.f32 %v2545, %v2546
  %v2548 = vsel %vm2395, %v1412, 0.0
  %v2549 = vadd.f32 %v2547, %v2548
  %v2550 = vsel %vm2395, %v1417, 0.0
  %v2551 = vadd.f32 %v2549, %v2550
  %v2552 = vsel %vm2395, %v1422, 0.0
  %v2553 = vadd.f32 %v2551, %v2552
  %v2554 = vsel %vm2395, %v1427, 0.0
  %v2555 = vadd.f32 %v2553, %v2554
  %v2556 = vsel %vm2395, %v1432, 0.0
  %v2557 = vadd.f32 %v2555, %v2556
  %v2558 = vrot.slane %v2557, 4
  %v2559 = vadd.f32 %v2557, %v2558
  %v2560 = vrot.slane %v2559, 2
  %v2561 = vadd.f32 %v2559, %v2560
  %v2562 = vrot.slane %v2561, 1
  %v2563 = vadd.f32 %v2561, %v2562
  %v2564 = vsel %vm2395, %v1437, 0.0
  %v2565 = vsel %vm2395, %v1442, 0.0
  %v2566 = vadd.f32 %v2564, %v2565
  %v2567 = vsel %vm2395, %v1447, 0.0
  %v2568 = vadd.f32 %v2566, %v2567
  %v2569 = vsel %vm2395, %v1452, 0.0
  %v2570 = vadd.f32 %v2568, %v2569
  %v2571 = vsel %vm2395, %v1457, 0.0
  %v2572 = vadd.f32 %v2570, %v2571
  %v2573 = vsel %vm2395, %v1462, 0.0
  %v2574 = vadd.f32 %v2572, %v2573
  %v2575 = vsel %vm2395, %v1467, 0.0
  %v2576 = vadd.f32 %v2574, %v2575
  %v2577 = vsel %vm2395, %v1472, 0.0
  %v2578 = vadd.f32 %v2576, %v2577
  %v2579 = vrot.slane %v2578, 4
  %v2580 = vadd.f32 %v2578, %v2579
  %v2581 = vrot.slane %v2580, 2
  %v2582 = vadd.f32 %v2580, %v2581
  %v2583 = vrot.slane %v2582, 1
  %v2584 = vadd.f32 %v2582, %v2583
  %v2585 = vsel %vm2395, %v1477, 0.0
  %v2586 = vsel %vm2395, %v1482, 0.0
  %v2587 = vadd.f32 %v2585, %v2586
  %v2588 = vsel %vm2395, %v1487, 0.0
  %v2589 = vadd.f32 %v2587, %v2588
  %v2590 = vsel %vm2395, %v1492, 0.0
  %v2591 = vadd.f32 %v2589, %v2590
  %v2592 = vsel %vm2395, %v1497, 0.0
  %v2593 = vadd.f32 %v2591, %v2592
  %v2594 = vsel %vm2395, %v1502, 0.0
  %v2595 = vadd.f32 %v2593, %v2594
  %v2596 = vsel %vm2395, %v1507, 0.0
  %v2597 = vadd.f32 %v2595, %v2596
  %v2598 = vsel %vm2395, %v1512, 0.0
  %v2599 = vadd.f32 %v2597, %v2598
  %v2600 = vrot.slane %v2599, 4
  %v2601 = vadd.f32 %v2599, %v2600
  %v2602 = vrot.slane %v2601, 2
  %v2603 = vadd.f32 %v2601, %v2602
  %v2604 = vrot.slane %v2603, 1
  %v2605 = vadd.f32 %v2603, %v2604
  %v2606 = vsel %vm2395, %v1517, 0.0
  %v2607 = vsel %vm2395, %v1522, 0.0
  %v2608 = vadd.f32 %v2606, %v2607
  %v2609 = vsel %vm2395, %v1527, 0.0
  %v2610 = vadd.f32 %v2608, %v2609
  %v2611 = vsel %vm2395, %v1532, 0.0
  %v2612 = vadd.f32 %v2610, %v2611
  %v2613 = vsel %vm2395, %v1537, 0.0
  %v2614 = vadd.f32 %v2612, %v2613
  %v2615 = vsel %vm2395, %v1542, 0.0
  %v2616 = vadd.f32 %v2614, %v2615
  %v2617 = vsel %vm2395, %v1547, 0.0
  %v2618 = vadd.f32 %v2616, %v2617
  %v2619 = vsel %vm2395, %v1552, 0.0
  %v2620 = vadd.f32 %v2618, %v2619
  %v2621 = vrot.slane %v2620, 4
  %v2622 = vadd.f32 %v2620, %v2621
  %v2623 = vrot.slane %v2622, 2
  %v2624 = vadd.f32 %v2622, %v2623
  %v2625 = vrot.slane %v2624, 1
  %v2626 = vadd.f32 %v2624, %v2625
  %v2627 = vsel %vm2395, %v1557, 0.0
  %v2628 = vsel %vm2395, %v1562, 0.0
  %v2629 = vadd.f32 %v2627, %v2628
  %v2630 = vsel %vm2395, %v1567, 0.0
  %v2631 = vadd.f32 %v2629, %v2630
  %v2632 = vsel %vm2395, %v1572, 0.0
  %v2633 = vadd.f32 %v2631, %v2632
  %v2634 = vsel %vm2395, %v1577, 0.0
  %v2635 = vadd.f32 %v2633, %v2634
  %v2636 = vsel %vm2395, %v1582, 0.0
  %v2637 = vadd.f32 %v2635, %v2636
  %v2638 = vsel %vm2395, %v1587, 0.0
  %v2639 = vadd.f32 %v2637, %v2638
  %v2640 = vsel %vm2395, %v1592, 0.0
  %v2641 = vadd.f32 %v2639, %v2640
  %v2642 = vrot.slane %v2641, 4
  %v2643 = vadd.f32 %v2641, %v2642
  %v2644 = vrot.slane %v2643, 2
  %v2645 = vadd.f32 %v2643, %v2644
  %v2646 = vrot.slane %v2645, 1
  %v2647 = vadd.f32 %v2645, %v2646
  %v2648 = vsel %vm2395, %v1597, 0.0
  %v2649 = vsel %vm2395, %v1602, 0.0
  %v2650 = vadd.f32 %v2648, %v2649
  %v2651 = vsel %vm2395, %v1607, 0.0
  %v2652 = vadd.f32 %v2650, %v2651
  %v2653 = vsel %vm2395, %v1612, 0.0
  %v2654 = vadd.f32 %v2652, %v2653
  %v2655 = vsel %vm2395, %v1617, 0.0
  %v2656 = vadd.f32 %v2654, %v2655
  %v2657 = vsel %vm2395, %v1622, 0.0
  %v2658 = vadd.f32 %v2656, %v2657
  %v2659 = vsel %vm2395, %v1627, 0.0
  %v2660 = vadd.f32 %v2658, %v2659
  %v2661 = vsel %vm2395, %v1632, 0.0
  %v2662 = vadd.f32 %v2660, %v2661
  %v2663 = vrot.slane %v2662, 4
  %v2664 = vadd.f32 %v2662, %v2663
  %v2665 = vrot.slane %v2664, 2
  %v2666 = vadd.f32 %v2664, %v2665
  %v2667 = vrot.slane %v2666, 1
  %v2668 = vadd.f32 %v2666, %v2667
  %v2669 = vsel %vm2395, %v1637, 0.0
  %v2670 = vsel %vm2395, %v1642, 0.0
  %v2671 = vadd.f32 %v2669, %v2670
  %v2672 = vsel %vm2395, %v1647, 0.0
  %v2673 = vadd.f32 %v2671, %v2672
  %v2674 = vsel %vm2395, %v1652, 0.0
  %v2675 = vadd.f32 %v2673, %v2674
  %v2676 = vsel %vm2395, %v1657, 0.0
  %v2677 = vadd.f32 %v2675, %v2676
  %v2678 = vsel %vm2395, %v1662, 0.0
  %v2679 = vadd.f32 %v2677, %v2678
  %v2680 = vsel %vm2395, %v1667, 0.0
  %v2681 = vadd.f32 %v2679, %v2680
  %v2682 = vsel %vm2395, %v1672, 0.0
  %v2683 = vadd.f32 %v2681, %v2682
  %v2684 = vrot.slane %v2683, 4
  %v2685 = vadd.f32 %v2683, %v2684
  %v2686 = vrot.slane %v2685, 2
  %v2687 = vadd.f32 %v2685, %v2686
  %v2688 = vrot.slane %v2687, 1
  %v2689 = vadd.f32 %v2687, %v2688
  %v2690 = vsel %vm2395, %v1677, 0.0
  %v2691 = vsel %vm2395, %v1682, 0.0
  %v2692 = vadd.f32 %v2690, %v2691
  %v2693 = vsel %vm2395, %v1687, 0.0
  %v2694 = vadd.f32 %v2692, %v2693
  %v2695 = vsel %vm2395, %v1692, 0.0
  %v2696 = vadd.f32 %v2694, %v2695
  %v2697 = vsel %vm2395, %v1697, 0.0
  %v2698 = vadd.f32 %v2696, %v2697
  %v2699 = vsel %vm2395, %v1702, 0.0
  %v2700 = vadd.f32 %v2698, %v2699
  %v2701 = vsel %vm2395, %v1707, 0.0
  %v2702 = vadd.f32 %v2700, %v2701
  %v2703 = vsel %vm2395, %v1712, 0.0
  %v2704 = vadd.f32 %v2702, %v2703
  %v2705 = vrot.slane %v2704, 4
  %v2706 = vadd.f32 %v2704, %v2705
  %v2707 = vrot.slane %v2706, 2
  %v2708 = vadd.f32 %v2706, %v2707
  %v2709 = vrot.slane %v2708, 1
  %v2710 = vadd.f32 %v2708, %v2709
  %v2711 = vsel %vm2395, %v1717, 0.0
  %v2712 = vsel %vm2395, %v1722, 0.0
  %v2713 = vadd.f32 %v2711, %v2712
  %v2714 = vsel %vm2395, %v1727, 0.0
  %v2715 = vadd.f32 %v2713, %v2714
  %v2716 = vsel %vm2395, %v1732, 0.0
  %v2717 = vadd.f32 %v2715, %v2716
  %v2718 = vsel %vm2395, %v1737, 0.0
  %v2719 = vadd.f32 %v2717, %v2718
  %v2720 = vsel %vm2395, %v1742, 0.0
  %v2721 = vadd.f32 %v2719, %v2720
  %v2722 = vsel %vm2395, %v1747, 0.0
  %v2723 = vadd.f32 %v2721, %v2722
  %v2724 = vsel %vm2395, %v1752, 0.0
  %v2725 = vadd.f32 %v2723, %v2724
  %v2726 = vrot.slane %v2725, 4
  %v2727 = vadd.f32 %v2725, %v2726
  %v2728 = vrot.slane %v2727, 2
  %v2729 = vadd.f32 %v2727, %v2728
  %v2730 = vrot.slane %v2729, 1
  %v2731 = vadd.f32 %v2729, %v2730
  %v2732 = vsel %vm2395, %v1757, 0.0
  %v2733 = vsel %vm2395, %v1762, 0.0
  %v2734 = vadd.f32 %v2732, %v2733
  %v2735 = vsel %vm2395, %v1767, 0.0
  %v2736 = vadd.f32 %v2734, %v2735
  %v2737 = vsel %vm2395, %v1772, 0.0
  %v2738 = vadd.f32 %v2736, %v2737
  %v2739 = vsel %vm2395, %v1777, 0.0
  %v2740 = vadd.f32 %v2738, %v2739
  %v2741 = vsel %vm2395, %v1782, 0.0
  %v2742 = vadd.f32 %v2740, %v2741
  %v2743 = vsel %vm2395, %v1787, 0.0
  %v2744 = vadd.f32 %v2742, %v2743
  %v2745 = vsel %vm2395, %v1792, 0.0
  %v2746 = vadd.f32 %v2744, %v2745
  %v2747 = vrot.slane %v2746, 4
  %v2748 = vadd.f32 %v2746, %v2747
  %v2749 = vrot.slane %v2748, 2
  %v2750 = vadd.f32 %v2748, %v2749
  %v2751 = vrot.slane %v2750, 1
  %v2752 = vadd.f32 %v2750, %v2751
  %v2753 = vsel %vm2395, %v1797, 0.0
  %v2754 = vsel %vm2395, %v1802, 0.0
  %v2755 = vadd.f32 %v2753, %v2754
  %v2756 = vsel %vm2395, %v1807, 0.0
  %v2757 = vadd.f32 %v2755, %v2756
  %v2758 = vsel %vm2395, %v1812, 0.0
  %v2759 = vadd.f32 %v2757, %v2758
  %v2760 = vsel %vm2395, %v1817, 0.0
  %v2761 = vadd.f32 %v2759, %v2760
  %v2762 = vsel %vm2395, %v1822, 0.0
  %v2763 = vadd.f32 %v2761, %v2762
  %v2764 = vsel %vm2395, %v1827, 0.0
  %v2765 = vadd.f32 %v2763, %v2764
  %v2766 = vsel %vm2395, %v1832, 0.0
  %v2767 = vadd.f32 %v2765, %v2766
  %v2768 = vrot.slane %v2767, 4
  %v2769 = vadd.f32 %v2767, %v2768
  %v2770 = vrot.slane %v2769, 2
  %v2771 = vadd.f32 %v2769, %v2770
  %v2772 = vrot.slane %v2771, 1
  %v2773 = vadd.f32 %v2771, %v2772
  %v2774 = vsel %vm2395, %v1837, 0.0
  %v2775 = vsel %vm2395, %v1842, 0.0
  %v2776 = vadd.f32 %v2774, %v2775
  %v2777 = vsel %vm2395, %v1847, 0.0
  %v2778 = vadd.f32 %v2776, %v2777
  %v2779 = vsel %vm2395, %v1852, 0.0
  %v2780 = vadd.f32 %v2778, %v2779
  %v2781 = vsel %vm2395, %v1857, 0.0
  %v2782 = vadd.f32 %v2780, %v2781
  %v2783 = vsel %vm2395, %v1862, 0.0
  %v2784 = vadd.f32 %v2782, %v2783
  %v2785 = vsel %vm2395, %v1867, 0.0
  %v2786 = vadd.f32 %v2784, %v2785
  %v2787 = vsel %vm2395, %v1872, 0.0
  %v2788 = vadd.f32 %v2786, %v2787
  %v2789 = vrot.slane %v2788, 4
  %v2790 = vadd.f32 %v2788, %v2789
  %v2791 = vrot.slane %v2790, 2
  %v2792 = vadd.f32 %v2790, %v2791
  %v2793 = vrot.slane %v2792, 1
  %v2794 = vadd.f32 %v2792, %v2793
  %v2795 = vsel %vm2395, %v1877, 0.0
  %v2796 = vsel %vm2395, %v1882, 0.0
  %v2797 = vadd.f32 %v2795, %v2796
  %v2798 = vsel %vm2395, %v1887, 0.0
  %v2799 = vadd.f32 %v2797, %v2798
  %v2800 = vsel %vm2395, %v1892, 0.0
  %v2801 = vadd.f32 %v2799, %v2800
  %v2802 = vsel %vm2395, %v1897, 0.0
  %v2803 = vadd.f32 %v2801, %v2802
  %v2804 = vsel %vm2395, %v1902, 0.0
  %v2805 = vadd.f32 %v2803, %v2804
  %v2806 = vsel %vm2395, %v1907, 0.0
  %v2807 = vadd.f32 %v2805, %v2806
  %v2808 = vsel %vm2395, %v1912, 0.0
  %v2809 = vadd.f32 %v2807, %v2808
  %v2810 = vrot.slane %v2809, 4
  %v2811 = vadd.f32 %v2809, %v2810
  %v2812 = vrot.slane %v2811, 2
  %v2813 = vadd.f32 %v2811, %v2812
  %v2814 = vrot.slane %v2813, 1
  %v2815 = vadd.f32 %v2813, %v2814
  %v2816 = vsel %vm2395, %v1917, 0.0
  %v2817 = vsel %vm2395, %v1922, 0.0
  %v2818 = vadd.f32 %v2816, %v2817
  %v2819 = vsel %vm2395, %v1927, 0.0
  %v2820 = vadd.f32 %v2818, %v2819
  %v2821 = vsel %vm2395, %v1932, 0.0
  %v2822 = vadd.f32 %v2820, %v2821
  %v2823 = vsel %vm2395, %v1937, 0.0
  %v2824 = vadd.f32 %v2822, %v2823
  %v2825 = vsel %vm2395, %v1942, 0.0
  %v2826 = vadd.f32 %v2824, %v2825
  %v2827 = vsel %vm2395, %v1947, 0.0
  %v2828 = vadd.f32 %v2826, %v2827
  %v2829 = vsel %vm2395, %v1952, 0.0
  %v2830 = vadd.f32 %v2828, %v2829
  %v2831 = vrot.slane %v2830, 4
  %v2832 = vadd.f32 %v2830, %v2831
  %v2833 = vrot.slane %v2832, 2
  %v2834 = vadd.f32 %v2832, %v2833
  %v2835 = vrot.slane %v2834, 1
  %v2836 = vadd.f32 %v2834, %v2835
  %v2837 = vsel %vm2395, %v1957, 0.0
  %v2838 = vsel %vm2395, %v1962, 0.0
  %v2839 = vadd.f32 %v2837, %v2838
  %v2840 = vsel %vm2395, %v1967, 0.0
  %v2841 = vadd.f32 %v2839, %v2840
  %v2842 = vsel %vm2395, %v1972, 0.0
  %v2843 = vadd.f32 %v2841, %v2842
  %v2844 = vsel %vm2395, %v1977, 0.0
  %v2845 = vadd.f32 %v2843, %v2844
  %v2846 = vsel %vm2395, %v1982, 0.0
  %v2847 = vadd.f32 %v2845, %v2846
  %v2848 = vsel %vm2395, %v1987, 0.0
  %v2849 = vadd.f32 %v2847, %v2848
  %v2850 = vsel %vm2395, %v1992, 0.0
  %v2851 = vadd.f32 %v2849, %v2850
  %v2852 = vrot.slane %v2851, 4
  %v2853 = vadd.f32 %v2851, %v2852
  %v2854 = vrot.slane %v2853, 2
  %v2855 = vadd.f32 %v2853, %v2854
  %v2856 = vrot.slane %v2855, 1
  %v2857 = vadd.f32 %v2855, %v2856
  %v2858 = vsel %vm2395, %v1997, 0.0
  %v2859 = vsel %vm2395, %v2002, 0.0
  %v2860 = vadd.f32 %v2858, %v2859
  %v2861 = vsel %vm2395, %v2007, 0.0
  %v2862 = vadd.f32 %v2860, %v2861
  %v2863 = vsel %vm2395, %v2012, 0.0
  %v2864 = vadd.f32 %v2862, %v2863
  %v2865 = vsel %vm2395, %v2017, 0.0
  %v2866 = vadd.f32 %v2864, %v2865
  %v2867 = vsel %vm2395, %v2022, 0.0
  %v2868 = vadd.f32 %v2866, %v2867
  %v2869 = vsel %vm2395, %v2027, 0.0
  %v2870 = vadd.f32 %v2868, %v2869
  %v2871 = vsel %vm2395, %v2032, 0.0
  %v2872 = vadd.f32 %v2870, %v2871
  %v2873 = vrot.slane %v2872, 4
  %v2874 = vadd.f32 %v2872, %v2873
  %v2875 = vrot.slane %v2874, 2
  %v2876 = vadd.f32 %v2874, %v2875
  %v2877 = vrot.slane %v2876, 1
  %v2878 = vadd.f32 %v2876, %v2877
  %v2879 = vsel %vm2395, %v2037, 0.0
  %v2880 = vsel %vm2395, %v2042, 0.0
  %v2881 = vadd.f32 %v2879, %v2880
  %v2882 = vsel %vm2395, %v2047, 0.0
  %v2883 = vadd.f32 %v2881, %v2882
  %v2884 = vsel %vm2395, %v2052, 0.0
  %v2885 = vadd.f32 %v2883, %v2884
  %v2886 = vsel %vm2395, %v2057, 0.0
  %v2887 = vadd.f32 %v2885, %v2886
  %v2888 = vsel %vm2395, %v2062, 0.0
  %v2889 = vadd.f32 %v2887, %v2888
  %v2890 = vsel %vm2395, %v2067, 0.0
  %v2891 = vadd.f32 %v2889, %v2890
  %v2892 = vsel %vm2395, %v2072, 0.0
  %v2893 = vadd.f32 %v2891, %v2892
  %v2894 = vrot.slane %v2893, 4
  %v2895 = vadd.f32 %v2893, %v2894
  %v2896 = vrot.slane %v2895, 2
  %v2897 = vadd.f32 %v2895, %v2896
  %v2898 = vrot.slane %v2897, 1
  %v2899 = vadd.f32 %v2897, %v2898
  %v2900 = vsel %vm2395, %v2077, 0.0
  %v2901 = vsel %vm2395, %v2082, 0.0
  %v2902 = vadd.f32 %v2900, %v2901
  %v2903 = vsel %vm2395, %v2087, 0.0
  %v2904 = vadd.f32 %v2902, %v2903
  %v2905 = vsel %vm2395, %v2092, 0.0
  %v2906 = vadd.f32 %v2904, %v2905
  %v2907 = vsel %vm2395, %v2097, 0.0
  %v2908 = vadd.f32 %v2906, %v2907
  %v2909 = vsel %vm2395, %v2102, 0.0
  %v2910 = vadd.f32 %v2908, %v2909
  %v2911 = vsel %vm2395, %v2107, 0.0
  %v2912 = vadd.f32 %v2910, %v2911
  %v2913 = vsel %vm2395, %v2112, 0.0
  %v2914 = vadd.f32 %v2912, %v2913
  %v2915 = vrot.slane %v2914, 4
  %v2916 = vadd.f32 %v2914, %v2915
  %v2917 = vrot.slane %v2916, 2
  %v2918 = vadd.f32 %v2916, %v2917
  %v2919 = vrot.slane %v2918, 1
  %v2920 = vadd.f32 %v2918, %v2919
  %v2921 = vsel %vm2395, %v2117, 0.0
  %v2922 = vsel %vm2395, %v2122, 0.0
  %v2923 = vadd.f32 %v2921, %v2922
  %v2924 = vsel %vm2395, %v2127, 0.0
  %v2925 = vadd.f32 %v2923, %v2924
  %v2926 = vsel %vm2395, %v2132, 0.0
  %v2927 = vadd.f32 %v2925, %v2926
  %v2928 = vsel %vm2395, %v2137, 0.0
  %v2929 = vadd.f32 %v2927, %v2928
  %v2930 = vsel %vm2395, %v2142, 0.0
  %v2931 = vadd.f32 %v2929, %v2930
  %v2932 = vsel %vm2395, %v2147, 0.0
  %v2933 = vadd.f32 %v2931, %v2932
  %v2934 = vsel %vm2395, %v2152, 0.0
  %v2935 = vadd.f32 %v2933, %v2934
  %v2936 = vrot.slane %v2935, 4
  %v2937 = vadd.f32 %v2935, %v2936
  %v2938 = vrot.slane %v2937, 2
  %v2939 = vadd.f32 %v2937, %v2938
  %v2940 = vrot.slane %v2939, 1
  %v2941 = vadd.f32 %v2939, %v2940
  %v2942 = vsel %vm2395, %v2157, 0.0
  %v2943 = vsel %vm2395, %v2162, 0.0
  %v2944 = vadd.f32 %v2942, %v2943
  %v2945 = vsel %vm2395, %v2167, 0.0
  %v2946 = vadd.f32 %v2944, %v2945
  %v2947 = vsel %vm2395, %v2172, 0.0
  %v2948 = vadd.f32 %v2946, %v2947
  %v2949 = vsel %vm2395, %v2177, 0.0
  %v2950 = vadd.f32 %v2948, %v2949
  %v2951 = vsel %vm2395, %v2182, 0.0
  %v2952 = vadd.f32 %v2950, %v2951
  %v2953 = vsel %vm2395, %v2187, 0.0
  %v2954 = vadd.f32 %v2952, %v2953
  %v2955 = vsel %vm2395, %v2192, 0.0
  %v2956 = vadd.f32 %v2954, %v2955
  %v2957 = vrot.slane %v2956, 4
  %v2958 = vadd.f32 %v2956, %v2957
  %v2959 = vrot.slane %v2958, 2
  %v2960 = vadd.f32 %v2958, %v2959
  %v2961 = vrot.slane %v2960, 1
  %v2962 = vadd.f32 %v2960, %v2961
  %v2963 = vsel %vm2395, %v2197, 0.0
  %v2964 = vsel %vm2395, %v2202, 0.0
  %v2965 = vadd.f32 %v2963, %v2964
  %v2966 = vsel %vm2395, %v2207, 0.0
  %v2967 = vadd.f32 %v2965, %v2966
  %v2968 = vsel %vm2395, %v2212, 0.0
  %v2969 = vadd.f32 %v2967, %v2968
  %v2970 = vsel %vm2395, %v2217, 0.0
  %v2971 = vadd.f32 %v2969, %v2970
  %v2972 = vsel %vm2395, %v2222, 0.0
  %v2973 = vadd.f32 %v2971, %v2972
  %v2974 = vsel %vm2395, %v2227, 0.0
  %v2975 = vadd.f32 %v2973, %v2974
  %v2976 = vsel %vm2395, %v2232, 0.0
  %v2977 = vadd.f32 %v2975, %v2976
  %v2978 = vrot.slane %v2977, 4
  %v2979 = vadd.f32 %v2977, %v2978
  %v2980 = vrot.slane %v2979, 2
  %v2981 = vadd.f32 %v2979, %v2980
  %v2982 = vrot.slane %v2981, 1
  %v2983 = vadd.f32 %v2981, %v2982
  %v2984 = vsel %vm2395, %v2237, 0.0
  %v2985 = vsel %vm2395, %v2242, 0.0
  %v2986 = vadd.f32 %v2984, %v2985
  %v2987 = vsel %vm2395, %v2247, 0.0
  %v2988 = vadd.f32 %v2986, %v2987
  %v2989 = vsel %vm2395, %v2252, 0.0
  %v2990 = vadd.f32 %v2988, %v2989
  %v2991 = vsel %vm2395, %v2257, 0.0
  %v2992 = vadd.f32 %v2990, %v2991
  %v2993 = vsel %vm2395, %v2262, 0.0
  %v2994 = vadd.f32 %v2992, %v2993
  %v2995 = vsel %vm2395, %v2267, 0.0
  %v2996 = vadd.f32 %v2994, %v2995
  %v2997 = vsel %vm2395, %v2272, 0.0
  %v2998 = vadd.f32 %v2996, %v2997
  %v2999 = vrot.slane %v2998, 4
  %v3000 = vadd.f32 %v2998, %v2999
  %v3001 = vrot.slane %v3000, 2
  %v3002 = vadd.f32 %v3000, %v3001
  %v3003 = vrot.slane %v3002, 1
  %v3004 = vadd.f32 %v3002, %v3003
  %v3005 = vsel %vm2395, %v2277, 0.0
  %v3006 = vsel %vm2395, %v2282, 0.0
  %v3007 = vadd.f32 %v3005, %v3006
  %v3008 = vsel %vm2395, %v2287, 0.0
  %v3009 = vadd.f32 %v3007, %v3008
  %v3010 = vsel %vm2395, %v2292, 0.0
  %v3011 = vadd.f32 %v3009, %v3010
  %v3012 = vsel %vm2395, %v2297, 0.0
  %v3013 = vadd.f32 %v3011, %v3012
  %v3014 = vsel %vm2395, %v2302, 0.0
  %v3015 = vadd.f32 %v3013, %v3014
  %v3016 = vsel %vm2395, %v2307, 0.0
  %v3017 = vadd.f32 %v3015, %v3016
  %v3018 = vsel %vm2395, %v2312, 0.0
  %v3019 = vadd.f32 %v3017, %v3018
  %v3020 = vrot.slane %v3019, 4
  %v3021 = vadd.f32 %v3019, %v3020
  %v3022 = vrot.slane %v3021, 2
  %v3023 = vadd.f32 %v3021, %v3022
  %v3024 = vrot.slane %v3023, 1
  %v3025 = vadd.f32 %v3023, %v3024
  %v3026 = vsel %vm2395, %v2317, 0.0
  %v3027 = vsel %vm2395, %v2322, 0.0
  %v3028 = vadd.f32 %v3026, %v3027
  %v3029 = vsel %vm2395, %v2327, 0.0
  %v3030 = vadd.f32 %v3028, %v3029
  %v3031 = vsel %vm2395, %v2332, 0.0
  %v3032 = vadd.f32 %v3030, %v3031
  %v3033 = vsel %vm2395, %v2337, 0.0
  %v3034 = vadd.f32 %v3032, %v3033
  %v3035 = vsel %vm2395, %v2342, 0.0
  %v3036 = vadd.f32 %v3034, %v3035
  %v3037 = vsel %vm2395, %v2347, 0.0
  %v3038 = vadd.f32 %v3036, %v3037
  %v3039 = vsel %vm2395, %v2352, 0.0
  %v3040 = vadd.f32 %v3038, %v3039
  %v3041 = vrot.slane %v3040, 4
  %v3042 = vadd.f32 %v3040, %v3041
  %v3043 = vrot.slane %v3042, 2
  %v3044 = vadd.f32 %v3042, %v3043
  %v3045 = vrot.slane %v3044, 1
  %v3046 = vadd.f32 %v3044, %v3045
  %v3047 = vsel %vm2395, %v2357, 0.0
  %v3048 = vsel %vm2395, %v2362, 0.0
  %v3049 = vadd.f32 %v3047, %v3048
  %v3050 = vsel %vm2395, %v2367, 0.0
  %v3051 = vadd.f32 %v3049, %v3050
  %v3052 = vsel %vm2395, %v2372, 0.0
  %v3053 = vadd.f32 %v3051, %v3052
  %v3054 = vsel %vm2395, %v2377, 0.0
  %v3055 = vadd.f32 %v3053, %v3054
  %v3056 = vsel %vm2395, %v2382, 0.0
  %v3057 = vadd.f32 %v3055, %v3056
  %v3058 = vsel %vm2395, %v2387, 0.0
  %v3059 = vadd.f32 %v3057, %v3058
  %v3060 = vsel %vm2395, %v2392, 0.0
  %v3061 = vadd.f32 %v3059, %v3060
  %v3062 = vrot.slane %v3061, 4
  %v3063 = vadd.f32 %v3061, %v3062
  %v3064 = vrot.slane %v3063, 2
  %v3065 = vadd.f32 %v3063, %v3064
  %v3066 = vrot.slane %v3065, 1
  %v3067 = vadd.f32 %v3065, %v3066
  %v3068 = vrcp.pop 64.0
  %v3069 = vmul.f32 %v2416, %v3068
  %v3070 = vmul.f32 %v2437, %v3068
  %v3071 = vmul.f32 %v2458, %v3068
  %v3072 = vmul.f32 %v2479, %v3068
  %v3073 = vmul.f32 %v2500, %v3068
  %v3074 = vmul.f32 %v2521, %v3068
  %v3075 = vmul.f32 %v2542, %v3068
  %v3076 = vmul.f32 %v2563, %v3068
  %v3077 = vmul.f32 %v2584, %v3068
  %v3078 = vmul.f32 %v2605, %v3068
  %v3079 = vmul.f32 %v2626, %v3068
  %v3080 = vmul.f32 %v2647, %v3068
  %v3081 = vmul.f32 %v2668, %v3068
  %v3082 = vmul.f32 %v2689, %v3068
  %v3083 = vmul.f32 %v2710, %v3068
  %v3084 = vmul.f32 %v2731, %v3068
  %v3085 = vmul.f32 %v2752, %v3068
  %v3086 = vmul.f32 %v2773, %v3068
  %v3087 = vmul.f32 %v2794, %v3068
  %v3088 = vmul.f32 %v2815, %v3068
  %v3089 = vmul.f32 %v2836, %v3068
  %v3090 = vmul.f32 %v2857, %v3068
  %v3091 = vmul.f32 %v2878, %v3068
  %v3092 = vmul.f32 %v2899, %v3068
  %v3093 = vmul.f32 %v2920, %v3068
  %v3094 = vmul.f32 %v2941, %v3068
  %v3095 = vmul.f32 %v2962, %v3068
  %v3096 = vmul.f32 %v2983, %v3068
  %v3097 = vmul.f32 %v3004, %v3068
  %v3098 = vmul.f32 %v3025, %v3068
  %v3099 = vmul.f32 %v3046, %v3068
  %v3100 = vmul.f32 %v3067, %v3068
  %v3101 = vmul.f32 %v1117, %v1117
  %v3102 = vmul.f32 %v1122, %v1122
  %v3103 = vmul.f32 %v1127, %v1127
  %v3104 = vmul.f32 %v1132, %v1132
  %v3105 = vmul.f32 %v1137, %v1137
  %v3106 = vmul.f32 %v1142, %v1142
  %v3107 = vmul.f32 %v1147, %v1147
  %v3108 = vmul.f32 %v1152, %v1152
  %v3109 = vmul.f32 %v1157, %v1157
  %v3110 = vmul.f32 %v1162, %v1162
  %v3111 = vmul.f32 %v1167, %v1167
  %v3112 = vmul.f32 %v1172, %v1172
  %v3113 = vmul.f32 %v1177, %v1177
  %v3114 = vmul.f32 %v1182, %v1182
  %v3115 = vmul.f32 %v1187, %v1187
  %v3116 = vmul.f32 %v1192, %v1192
  %v3117 = vmul.f32 %v1197, %v1197
  %v3118 = vmul.f32 %v1202, %v1202
  %v3119 = vmul.f32 %v1207, %v1207
  %v3120 = vmul.f32 %v1212, %v1212
  %v3121 = vmul.f32 %v1217, %v1217
  %v3122 = vmul.f32 %v1222, %v1222
  %v3123 = vmul.f32 %v1227, %v1227
  %v3124 = vmul.f32 %v1232, %v1232
  %v3125 = vmul.f32 %v1237, %v1237
  %v3126 = vmul.f32 %v1242, %v1242
  %v3127 = vmul.f32 %v1247, %v1247
  %v3128 = vmul.f32 %v1252, %v1252
  %v3129 = vmul.f32 %v1257, %v1257
  %v3130 = vmul.f32 %v1262, %v1262
  %v3131 = vmul.f32 %v1267, %v1267
  %v3132 = vmul.f32 %v1272, %v1272
  %v3133 = vmul.f32 %v1277, %v1277
  %v3134 = vmul.f32 %v1282, %v1282
  %v3135 = vmul.f32 %v1287, %v1287
  %v3136 = vmul.f32 %v1292, %v1292
  %v3137 = vmul.f32 %v1297, %v1297
  %v3138 = vmul.f32 %v1302, %v1302
  %v3139 = vmul.f32 %v1307, %v1307
  %v3140 = vmul.f32 %v1312, %v1312
  %v3141 = vmul.f32 %v1317, %v1317
  %v3142 = vmul.f32 %v1322, %v1322
  %v3143 = vmul.f32 %v1327, %v1327
  %v3144 = vmul.f32 %v1332, %v1332
  %v3145 = vmul.f32 %v1337, %v1337
  %v3146 = vmul.f32 %v1342, %v1342
  %v3147 = vmul.f32 %v1347, %v1347
  %v3148 = vmul.f32 %v1352, %v1352
  %v3149 = vmul.f32 %v1357, %v1357
  %v3150 = vmul.f32 %v1362, %v1362
  %v3151 = vmul.f32 %v1367, %v1367
  %v3152 = vmul.f32 %v1372, %v1372
  %v3153 = vmul.f32 %v1377, %v1377
  %v3154 = vmul.f32 %v1382, %v1382
  %v3155 = vmul.f32 %v1387, %v1387
  %v3156 = vmul.f32 %v1392, %v1392
  %v3157 = vmul.f32 %v1397, %v1397
  %v3158 = vmul.f32 %v1402, %v1402
  %v3159 = vmul.f32 %v1407, %v1407
  %v3160 = vmul.f32 %v1412, %v1412
  %v3161 = vmul.f32 %v1417, %v1417
  %v3162 = vmul.f32 %v1422, %v1422
  %v3163 = vmul.f32 %v1427, %v1427
  %v3164 = vmul.f32 %v1432, %v1432
  %v3165 = vmul.f32 %v1437, %v1437
  %v3166 = vmul.f32 %v1442, %v1442
  %v3167 = vmul.f32 %v1447, %v1447
  %v3168 = vmul.f32 %v1452, %v1452
  %v3169 = vmul.f32 %v1457, %v1457
  %v3170 = vmul.f32 %v1462, %v1462
  %v3171 = vmul.f32 %v1467, %v1467
  %v3172 = vmul.f32 %v1472, %v1472
  %v3173 = vmul.f32 %v1477, %v1477
  %v3174 = vmul.f32 %v1482, %v1482
  %v3175 = vmul.f32 %v1487, %v1487
  %v3176 = vmul.f32 %v1492, %v1492
  %v3177 = vmul.f32 %v1497, %v1497
  %v3178 = vmul.f32 %v1502, %v1502
  %v3179 = vmul.f32 %v1507, %v1507
  %v3180 = vmul.f32 %v1512, %v1512
  %v3181 = vmul.f32 %v1517, %v1517
  %v3182 = vmul.f32 %v1522, %v1522
  %v3183 = vmul.f32 %v1527, %v1527
  %v3184 = vmul.f32 %v1532, %v1532
  %v3185 = vmul.f32 %v1537, %v1537
  %v3186 = vmul.f32 %v1542, %v1542
  %v3187 = vmul.f32 %v1547, %v1547
  %v3188 = vmul.f32 %v1552, %v1552
  %v3189 = vmul.f32 %v1557, %v1557
  %v3190 = vmul.f32 %v1562, %v1562
  %v3191 = vmul.f32 %v1567, %v1567
  %v3192 = vmul.f32 %v1572, %v1572
  %v3193 = vmul.f32 %v1577, %v1577
  %v3194 = vmul.f32 %v1582, %v1582
  %v3195 = vmul.f32 %v1587, %v1587
  %v3196 = vmul.f32 %v1592, %v1592
  %v3197 = vmul.f32 %v1597, %v1597
  %v3198 = vmul.f32 %v1602, %v1602
  %v3199 = vmul.f32 %v1607, %v1607
  %v3200 = vmul.f32 %v1612, %v1612
  %v3201 = vmul.f32 %v1617, %v1617
  %v3202 = vmul.f32 %v1622, %v1622
  %v3203 = vmul.f32 %v1627, %v1627
  %v3204 = vmul.f32 %v1632, %v1632
  %v3205 = vmul.f32 %v1637, %v1637
  %v3206 = vmul.f32 %v1642, %v1642
  %v3207 = vmul.f32 %v1647, %v1647
  %v3208 = vmul.f32 %v1652, %v1652
  %v3209 = vmul.f32 %v1657, %v1657
  %v3210 = vmul.f32 %v1662, %v1662
  %v3211 = vmul.f32 %v1667, %v1667
  %v3212 = vmul.f32 %v1672, %v1672
  %v3213 = vmul.f32 %v1677, %v1677
  %v3214 = vmul.f32 %v1682, %v1682
  %v3215 = vmul.f32 %v1687, %v1687
  %v3216 = vmul.f32 %v1692, %v1692
  %v3217 = vmul.f32 %v1697, %v1697
  %v3218 = vmul.f32 %v1702, %v1702
  %v3219 = vmul.f32 %v1707, %v1707
  %v3220 = vmul.f32 %v1712, %v1712
  %v3221 = vmul.f32 %v1717, %v1717
  %v3222 = vmul.f32 %v1722, %v1722
  %v3223 = vmul.f32 %v1727, %v1727
  %v3224 = vmul.f32 %v1732, %v1732
  %v3225 = vmul.f32 %v1737, %v1737
  %v3226 = vmul.f32 %v1742, %v1742
  %v3227 = vmul.f32 %v1747, %v1747
  %v3228 = vmul.f32 %v1752, %v1752
  %v3229 = vmul.f32 %v1757, %v1757
  %v3230 = vmul.f32 %v1762, %v1762
  %v3231 = vmul.f32 %v1767, %v1767
  %v3232 = vmul.f32 %v1772, %v1772
  %v3233 = vmul.f32 %v1777, %v1777
  %v3234 = vmul.f32 %v1782, %v1782
  %v3235 = vmul.f32 %v1787, %v1787
  %v3236 = vmul.f32 %v1792, %v1792
  %v3237 = vmul.f32 %v1797, %v1797
  %v3238 = vmul.f32 %v1802, %v1802
  %v3239 = vmul.f32 %v1807, %v1807
  %v3240 = vmul.f32 %v1812, %v1812
  %v3241 = vmul.f32 %v1817, %v1817
  %v3242 = vmul.f32 %v1822, %v1822
  %v3243 = vmul.f32 %v1827, %v1827
  %v3244 = vmul.f32 %v1832, %v1832
  %v3245 = vmul.f32 %v1837, %v1837
  %v3246 = vmul.f32 %v1842, %v1842
  %v3247 = vmul.f32 %v1847, %v1847
  %v3248 = vmul.f32 %v1852, %v1852
  %v3249 = vmul.f32 %v1857, %v1857
  %v3250 = vmul.f32 %v1862, %v1862
  %v3251 = vmul.f32 %v1867, %v1867
  %v3252 = vmul.f32 %v1872, %v1872
  %v3253 = vmul.f32 %v1877, %v1877
  %v3254 = vmul.f32 %v1882, %v1882
  %v3255 = vmul.f32 %v1887, %v1887
  %v3256 = vmul.f32 %v1892, %v1892
  %v3257 = vmul.f32 %v1897, %v1897
  %v3258 = vmul.f32 %v1902, %v1902
  %v3259 = vmul.f32 %v1907, %v1907
  %v3260 = vmul.f32 %v1912, %v1912
  %v3261 = vmul.f32 %v1917, %v1917
  %v3262 = vmul.f32 %v1922, %v1922
  %v3263 = vmul.f32 %v1927, %v1927
  %v3264 = vmul.f32 %v1932, %v1932
  %v3265 = vmul.f32 %v1937, %v1937
  %v3266 = vmul.f32 %v1942, %v1942
  %v3267 = vmul.f32 %v1947, %v1947
  %v3268 = vmul.f32 %v1952, %v1952
  %v3269 = vmul.f32 %v1957, %v1957
  %v3270 = vmul.f32 %v1962, %v1962
  %v3271 = vmul.f32 %v1967, %v1967
  %v3272 = vmul.f32 %v1972, %v1972
  %v3273 = vmul.f32 %v1977, %v1977
  %v3274 = vmul.f32 %v1982, %v1982
  %v3275 = vmul.f32 %v1987, %v1987
  %v3276 = vmul.f32 %v1992, %v1992
  %v3277 = vmul.f32 %v1997, %v1997
  %v3278 = vmul.f32 %v2002, %v2002
  %v3279 = vmul.f32 %v2007, %v2007
  %v3280 = vmul.f32 %v2012, %v2012
  %v3281 = vmul.f32 %v2017, %v2017
  %v3282 = vmul.f32 %v2022, %v2022
  %v3283 = vmul.f32 %v2027, %v2027
  %v3284 = vmul.f32 %v2032, %v2032
  %v3285 = vmul.f32 %v2037, %v2037
  %v3286 = vmul.f32 %v2042, %v2042
  %v3287 = vmul.f32 %v2047, %v2047
  %v3288 = vmul.f32 %v2052, %v2052
  %v3289 = vmul.f32 %v2057, %v2057
  %v3290 = vmul.f32 %v2062, %v2062
  %v3291 = vmul.f32 %v2067, %v2067
  %v3292 = vmul.f32 %v2072, %v2072
  %v3293 = vmul.f32 %v2077, %v2077
  %v3294 = vmul.f32 %v2082, %v2082
  %v3295 = vmul.f32 %v2087, %v2087
  %v3296 = vmul.f32 %v2092, %v2092
  %v3297 = vmul.f32 %v2097, %v2097
  %v3298 = vmul.f32 %v2102, %v2102
  %v3299 = vmul.f32 %v2107, %v2107
  %v3300 = vmul.f32 %v2112, %v2112
  %v3301 = vmul.f32 %v2117, %v2117
  %v3302 = vmul.f32 %v2122, %v2122
  %v3303 = vmul.f32 %v2127, %v2127
  %v3304 = vmul.f32 %v2132, %v2132
  %v3305 = vmul.f32 %v2137, %v2137
  %v3306 = vmul.f32 %v2142, %v2142
  %v3307 = vmul.f32 %v2147, %v2147
  %v3308 = vmul.f32 %v2152, %v2152
  %v3309 = vmul.f32 %v2157, %v2157
  %v3310 = vmul.f32 %v2162, %v2162
  %v3311 = vmul.f32 %v2167, %v2167
  %v3312 = vmul.f32 %v2172, %v2172
  %v3313 = vmul.f32 %v2177, %v2177
  %v3314 = vmul.f32 %v2182, %v2182
  %v3315 = vmul.f32 %v2187, %v2187
  %v3316 = vmul.f32 %v2192, %v2192
  %v3317 = vmul.f32 %v2197, %v2197
  %v3318 = vmul.f32 %v2202, %v2202
  %v3319 = vmul.f32 %v2207, %v2207
  %v3320 = vmul.f32 %v2212, %v2212
  %v3321 = vmul.f32 %v2217, %v2217
  %v3322 = vmul.f32 %v2222, %v2222
  %v3323 = vmul.f32 %v2227, %v2227
  %v3324 = vmul.f32 %v2232, %v2232
  %v3325 = vmul.f32 %v2237, %v2237
  %v3326 = vmul.f32 %v2242, %v2242
  %v3327 = vmul.f32 %v2247, %v2247
  %v3328 = vmul.f32 %v2252, %v2252
  %v3329 = vmul.f32 %v2257, %v2257
  %v3330 = vmul.f32 %v2262, %v2262
  %v3331 = vmul.f32 %v2267, %v2267
  %v3332 = vmul.f32 %v2272, %v2272
  %v3333 = vmul.f32 %v2277, %v2277
  %v3334 = vmul.f32 %v2282, %v2282
  %v3335 = vmul.f32 %v2287, %v2287
  %v3336 = vmul.f32 %v2292, %v2292
  %v3337 = vmul.f32 %v2297, %v2297
  %v3338 = vmul.f32 %v2302, %v2302
  %v3339 = vmul.f32 %v2307, %v2307
  %v3340 = vmul.f32 %v2312, %v2312
  %v3341 = vmul.f32 %v2317, %v2317
  %v3342 = vmul.f32 %v2322, %v2322
  %v3343 = vmul.f32 %v2327, %v2327
  %v3344 = vmul.f32 %v2332, %v2332
  %v3345 = vmul.f32 %v2337, %v2337
  %v3346 = vmul.f32 %v2342, %v2342
  %v3347 = vmul.f32 %v2347, %v2347
  %v3348 = vmul.f32 %v2352, %v2352
  %v3349 = vmul.f32 %v2357, %v2357
  %v3350 = vmul.f32 %v2362, %v2362
  %v3351 = vmul.f32 %v2367, %v2367
  %v3352 = vmul.f32 %v2372, %v2372
  %v3353 = vmul.f32 %v2377, %v2377
  %v3354 = vmul.f32 %v2382, %v2382
  %v3355 = vmul.f32 %v2387, %v2387
  %v3356 = vmul.f32 %v2392, %v2392
  %v3357 = vsel %vm2395, %v3101, 0.0
  %v3358 = vsel %vm2395, %v3102, 0.0
  %v3359 = vadd.f32 %v3357, %v3358
  %v3360 = vsel %vm2395, %v3103, 0.0
  %v3361 = vadd.f32 %v3359, %v3360
  %v3362 = vsel %vm2395, %v3104, 0.0
  %v3363 = vadd.f32 %v3361, %v3362
  %v3364 = vsel %vm2395, %v3105, 0.0
  %v3365 = vadd.f32 %v3363, %v3364
  %v3366 = vsel %vm2395, %v3106, 0.0
  %v3367 = vadd.f32 %v3365, %v3366
  %v3368 = vsel %vm2395, %v3107, 0.0
  %v3369 = vadd.f32 %v3367, %v3368
  %v3370 = vsel %vm2395, %v3108, 0.0
  %v3371 = vadd.f32 %v3369, %v3370
  %v3372 = vrot.slane %v3371, 4
  %v3373 = vadd.f32 %v3371, %v3372
  %v3374 = vrot.slane %v3373, 2
  %v3375 = vadd.f32 %v3373, %v3374
  %v3376 = vrot.slane %v3375, 1
  %v3377 = vadd.f32 %v3375, %v3376
  %v3378 = vsel %vm2395, %v3109, 0.0
  %v3379 = vsel %vm2395, %v3110, 0.0
  %v3380 = vadd.f32 %v3378, %v3379
  %v3381 = vsel %vm2395, %v3111, 0.0
  %v3382 = vadd.f32 %v3380, %v3381
  %v3383 = vsel %vm2395, %v3112, 0.0
  %v3384 = vadd.f32 %v3382, %v3383
  %v3385 = vsel %vm2395, %v3113, 0.0
  %v3386 = vadd.f32 %v3384, %v3385
  %v3387 = vsel %vm2395, %v3114, 0.0
  %v3388 = vadd.f32 %v3386, %v3387
  %v3389 = vsel %vm2395, %v3115, 0.0
  %v3390 = vadd.f32 %v3388, %v3389
  %v3391 = vsel %vm2395, %v3116, 0.0
  %v3392 = vadd.f32 %v3390, %v3391
  %v3393 = vrot.slane %v3392, 4
  %v3394 = vadd.f32 %v3392, %v3393
  %v3395 = vrot.slane %v3394, 2
  %v3396 = vadd.f32 %v3394, %v3395
  %v3397 = vrot.slane %v3396, 1
  %v3398 = vadd.f32 %v3396, %v3397
  %v3399 = vsel %vm2395, %v3117, 0.0
  %v3400 = vsel %vm2395, %v3118, 0.0
  %v3401 = vadd.f32 %v3399, %v3400
  %v3402 = vsel %vm2395, %v3119, 0.0
  %v3403 = vadd.f32 %v3401, %v3402
  %v3404 = vsel %vm2395, %v3120, 0.0
  %v3405 = vadd.f32 %v3403, %v3404
  %v3406 = vsel %vm2395, %v3121, 0.0
  %v3407 = vadd.f32 %v3405, %v3406
  %v3408 = vsel %vm2395, %v3122, 0.0
  %v3409 = vadd.f32 %v3407, %v3408
  %v3410 = vsel %vm2395, %v3123, 0.0
  %v3411 = vadd.f32 %v3409, %v3410
  %v3412 = vsel %vm2395, %v3124, 0.0
  %v3413 = vadd.f32 %v3411, %v3412
  %v3414 = vrot.slane %v3413, 4
  %v3415 = vadd.f32 %v3413, %v3414
  %v3416 = vrot.slane %v3415, 2
  %v3417 = vadd.f32 %v3415, %v3416
  %v3418 = vrot.slane %v3417, 1
  %v3419 = vadd.f32 %v3417, %v3418
  %v3420 = vsel %vm2395, %v3125, 0.0
  %v3421 = vsel %vm2395, %v3126, 0.0
  %v3422 = vadd.f32 %v3420, %v3421
  %v3423 = vsel %vm2395, %v3127, 0.0
  %v3424 = vadd.f32 %v3422, %v3423
  %v3425 = vsel %vm2395, %v3128, 0.0
  %v3426 = vadd.f32 %v3424, %v3425
  %v3427 = vsel %vm2395, %v3129, 0.0
  %v3428 = vadd.f32 %v3426, %v3427
  %v3429 = vsel %vm2395, %v3130, 0.0
  %v3430 = vadd.f32 %v3428, %v3429
  %v3431 = vsel %vm2395, %v3131, 0.0
  %v3432 = vadd.f32 %v3430, %v3431
  %v3433 = vsel %vm2395, %v3132, 0.0
  %v3434 = vadd.f32 %v3432, %v3433
  %v3435 = vrot.slane %v3434, 4
  %v3436 = vadd.f32 %v3434, %v3435
  %v3437 = vrot.slane %v3436, 2
  %v3438 = vadd.f32 %v3436, %v3437
  %v3439 = vrot.slane %v3438, 1
  %v3440 = vadd.f32 %v3438, %v3439
  %v3441 = vsel %vm2395, %v3133, 0.0
  %v3442 = vsel %vm2395, %v3134, 0.0
  %v3443 = vadd.f32 %v3441, %v3442
  %v3444 = vsel %vm2395, %v3135, 0.0
  %v3445 = vadd.f32 %v3443, %v3444
  %v3446 = vsel %vm2395, %v3136, 0.0
  %v3447 = vadd.f32 %v3445, %v3446
  %v3448 = vsel %vm2395, %v3137, 0.0
  %v3449 = vadd.f32 %v3447, %v3448
  %v3450 = vsel %vm2395, %v3138, 0.0
  %v3451 = vadd.f32 %v3449, %v3450
  %v3452 = vsel %vm2395, %v3139, 0.0
  %v3453 = vadd.f32 %v3451, %v3452
  %v3454 = vsel %vm2395, %v3140, 0.0
  %v3455 = vadd.f32 %v3453, %v3454
  %v3456 = vrot.slane %v3455, 4
  %v3457 = vadd.f32 %v3455, %v3456
  %v3458 = vrot.slane %v3457, 2
  %v3459 = vadd.f32 %v3457, %v3458
  %v3460 = vrot.slane %v3459, 1
  %v3461 = vadd.f32 %v3459, %v3460
  %v3462 = vsel %vm2395, %v3141, 0.0
  %v3463 = vsel %vm2395, %v3142, 0.0
  %v3464 = vadd.f32 %v3462, %v3463
  %v3465 = vsel %vm2395, %v3143, 0.0
  %v3466 = vadd.f32 %v3464, %v3465
  %v3467 = vsel %vm2395, %v3144, 0.0
  %v3468 = vadd.f32 %v3466, %v3467
  %v3469 = vsel %vm2395, %v3145, 0.0
  %v3470 = vadd.f32 %v3468, %v3469
  %v3471 = vsel %vm2395, %v3146, 0.0
  %v3472 = vadd.f32 %v3470, %v3471
  %v3473 = vsel %vm2395, %v3147, 0.0
  %v3474 = vadd.f32 %v3472, %v3473
  %v3475 = vsel %vm2395, %v3148, 0.0
  %v3476 = vadd.f32 %v3474, %v3475
  %v3477 = vrot.slane %v3476, 4
  %v3478 = vadd.f32 %v3476, %v3477
  %v3479 = vrot.slane %v3478, 2
  %v3480 = vadd.f32 %v3478, %v3479
  %v3481 = vrot.slane %v3480, 1
  %v3482 = vadd.f32 %v3480, %v3481
  %v3483 = vsel %vm2395, %v3149, 0.0
  %v3484 = vsel %vm2395, %v3150, 0.0
  %v3485 = vadd.f32 %v3483, %v3484
  %v3486 = vsel %vm2395, %v3151, 0.0
  %v3487 = vadd.f32 %v3485, %v3486
  %v3488 = vsel %vm2395, %v3152, 0.0
  %v3489 = vadd.f32 %v3487, %v3488
  %v3490 = vsel %vm2395, %v3153, 0.0
  %v3491 = vadd.f32 %v3489, %v3490
  %v3492 = vsel %vm2395, %v3154, 0.0
  %v3493 = vadd.f32 %v3491, %v3492
  %v3494 = vsel %vm2395, %v3155, 0.0
  %v3495 = vadd.f32 %v3493, %v3494
  %v3496 = vsel %vm2395, %v3156, 0.0
  %v3497 = vadd.f32 %v3495, %v3496
  %v3498 = vrot.slane %v3497, 4
  %v3499 = vadd.f32 %v3497, %v3498
  %v3500 = vrot.slane %v3499, 2
  %v3501 = vadd.f32 %v3499, %v3500
  %v3502 = vrot.slane %v3501, 1
  %v3503 = vadd.f32 %v3501, %v3502
  %v3504 = vsel %vm2395, %v3157, 0.0
  %v3505 = vsel %vm2395, %v3158, 0.0
  %v3506 = vadd.f32 %v3504, %v3505
  %v3507 = vsel %vm2395, %v3159, 0.0
  %v3508 = vadd.f32 %v3506, %v3507
  %v3509 = vsel %vm2395, %v3160, 0.0
  %v3510 = vadd.f32 %v3508, %v3509
  %v3511 = vsel %vm2395, %v3161, 0.0
  %v3512 = vadd.f32 %v3510, %v3511
  %v3513 = vsel %vm2395, %v3162, 0.0
  %v3514 = vadd.f32 %v3512, %v3513
  %v3515 = vsel %vm2395, %v3163, 0.0
  %v3516 = vadd.f32 %v3514, %v3515
  %v3517 = vsel %vm2395, %v3164, 0.0
  %v3518 = vadd.f32 %v3516, %v3517
  %v3519 = vrot.slane %v3518, 4
  %v3520 = vadd.f32 %v3518, %v3519
  %v3521 = vrot.slane %v3520, 2
  %v3522 = vadd.f32 %v3520, %v3521
  %v3523 = vrot.slane %v3522, 1
  %v3524 = vadd.f32 %v3522, %v3523
  %v3525 = vsel %vm2395, %v3165, 0.0
  %v3526 = vsel %vm2395, %v3166, 0.0
  %v3527 = vadd.f32 %v3525, %v3526
  %v3528 = vsel %vm2395, %v3167, 0.0
  %v3529 = vadd.f32 %v3527, %v3528
  %v3530 = vsel %vm2395, %v3168, 0.0
  %v3531 = vadd.f32 %v3529, %v3530
  %v3532 = vsel %vm2395, %v3169, 0.0
  %v3533 = vadd.f32 %v3531, %v3532
  %v3534 = vsel %vm2395, %v3170, 0.0
  %v3535 = vadd.f32 %v3533, %v3534
  %v3536 = vsel %vm2395, %v3171, 0.0
  %v3537 = vadd.f32 %v3535, %v3536
  %v3538 = vsel %vm2395, %v3172, 0.0
  %v3539 = vadd.f32 %v3537, %v3538
  %v3540 = vrot.slane %v3539, 4
  %v3541 = vadd.f32 %v3539, %v3540
  %v3542 = vrot.slane %v3541, 2
  %v3543 = vadd.f32 %v3541, %v3542
  %v3544 = vrot.slane %v3543, 1
  %v3545 = vadd.f32 %v3543, %v3544
  %v3546 = vsel %vm2395, %v3173, 0.0
  %v3547 = vsel %vm2395, %v3174, 0.0
  %v3548 = vadd.f32 %v3546, %v3547
  %v3549 = vsel %vm2395, %v3175, 0.0
  %v3550 = vadd.f32 %v3548, %v3549
  %v3551 = vsel %vm2395, %v3176, 0.0
  %v3552 = vadd.f32 %v3550, %v3551
  %v3553 = vsel %vm2395, %v3177, 0.0
  %v3554 = vadd.f32 %v3552, %v3553
  %v3555 = vsel %vm2395, %v3178, 0.0
  %v3556 = vadd.f32 %v3554, %v3555
  %v3557 = vsel %vm2395, %v3179, 0.0
  %v3558 = vadd.f32 %v3556, %v3557
  %v3559 = vsel %vm2395, %v3180, 0.0
  %v3560 = vadd.f32 %v3558, %v3559
  %v3561 = vrot.slane %v3560, 4
  %v3562 = vadd.f32 %v3560, %v3561
  %v3563 = vrot.slane %v3562, 2
  %v3564 = vadd.f32 %v3562, %v3563
  %v3565 = vrot.slane %v3564, 1
  %v3566 = vadd.f32 %v3564, %v3565
  %v3567 = vsel %vm2395, %v3181, 0.0
  %v3568 = vsel %vm2395, %v3182, 0.0
  %v3569 = vadd.f32 %v3567, %v3568
  %v3570 = vsel %vm2395, %v3183, 0.0
  %v3571 = vadd.f32 %v3569, %v3570
  %v3572 = vsel %vm2395, %v3184, 0.0
  %v3573 = vadd.f32 %v3571, %v3572
  %v3574 = vsel %vm2395, %v3185, 0.0
  %v3575 = vadd.f32 %v3573, %v3574
  %v3576 = vsel %vm2395, %v3186, 0.0
  %v3577 = vadd.f32 %v3575, %v3576
  %v3578 = vsel %vm2395, %v3187, 0.0
  %v3579 = vadd.f32 %v3577, %v3578
  %v3580 = vsel %vm2395, %v3188, 0.0
  %v3581 = vadd.f32 %v3579, %v3580
  %v3582 = vrot.slane %v3581, 4
  %v3583 = vadd.f32 %v3581, %v3582
  %v3584 = vrot.slane %v3583, 2
  %v3585 = vadd.f32 %v3583, %v3584
  %v3586 = vrot.slane %v3585, 1
  %v3587 = vadd.f32 %v3585, %v3586
  %v3588 = vsel %vm2395, %v3189, 0.0
  %v3589 = vsel %vm2395, %v3190, 0.0
  %v3590 = vadd.f32 %v3588, %v3589
  %v3591 = vsel %vm2395, %v3191, 0.0
  %v3592 = vadd.f32 %v3590, %v3591
  %v3593 = vsel %vm2395, %v3192, 0.0
  %v3594 = vadd.f32 %v3592, %v3593
  %v3595 = vsel %vm2395, %v3193, 0.0
  %v3596 = vadd.f32 %v3594, %v3595
  %v3597 = vsel %vm2395, %v3194, 0.0
  %v3598 = vadd.f32 %v3596, %v3597
  %v3599 = vsel %vm2395, %v3195, 0.0
  %v3600 = vadd.f32 %v3598, %v3599
  %v3601 = vsel %vm2395, %v3196, 0.0
  %v3602 = vadd.f32 %v3600, %v3601
  %v3603 = vrot.slane %v3602, 4
  %v3604 = vadd.f32 %v3602, %v3603
  %v3605 = vrot.slane %v3604, 2
  %v3606 = vadd.f32 %v3604, %v3605
  %v3607 = vrot.slane %v3606, 1
  %v3608 = vadd.f32 %v3606, %v3607
  %v3609 = vsel %vm2395, %v3197, 0.0
  %v3610 = vsel %vm2395, %v3198, 0.0
  %v3611 = vadd.f32 %v3609, %v3610
  %v3612 = vsel %vm2395, %v3199, 0.0
  %v3613 = vadd.f32 %v3611, %v3612
  %v3614 = vsel %vm2395, %v3200, 0.0
  %v3615 = vadd.f32 %v3613, %v3614
  %v3616 = vsel %vm2395, %v3201, 0.0
  %v3617 = vadd.f32 %v3615, %v3616
  %v3618 = vsel %vm2395, %v3202, 0.0
  %v3619 = vadd.f32 %v3617, %v3618
  %v3620 = vsel %vm2395, %v3203, 0.0
  %v3621 = vadd.f32 %v3619, %v3620
  %v3622 = vsel %vm2395, %v3204, 0.0
  %v3623 = vadd.f32 %v3621, %v3622
  %v3624 = vrot.slane %v3623, 4
  %v3625 = vadd.f32 %v3623, %v3624
  %v3626 = vrot.slane %v3625, 2
  %v3627 = vadd.f32 %v3625, %v3626
  %v3628 = vrot.slane %v3627, 1
  %v3629 = vadd.f32 %v3627, %v3628
  %v3630 = vsel %vm2395, %v3205, 0.0
  %v3631 = vsel %vm2395, %v3206, 0.0
  %v3632 = vadd.f32 %v3630, %v3631
  %v3633 = vsel %vm2395, %v3207, 0.0
  %v3634 = vadd.f32 %v3632, %v3633
  %v3635 = vsel %vm2395, %v3208, 0.0
  %v3636 = vadd.f32 %v3634, %v3635
  %v3637 = vsel %vm2395, %v3209, 0.0
  %v3638 = vadd.f32 %v3636, %v3637
  %v3639 = vsel %vm2395, %v3210, 0.0
  %v3640 = vadd.f32 %v3638, %v3639
  %v3641 = vsel %vm2395, %v3211, 0.0
  %v3642 = vadd.f32 %v3640, %v3641
  %v3643 = vsel %vm2395, %v3212, 0.0
  %v3644 = vadd.f32 %v3642, %v3643
  %v3645 = vrot.slane %v3644, 4
  %v3646 = vadd.f32 %v3644, %v3645
  %v3647 = vrot.slane %v3646, 2
  %v3648 = vadd.f32 %v3646, %v3647
  %v3649 = vrot.slane %v3648, 1
  %v3650 = vadd.f32 %v3648, %v3649
  %v3651 = vsel %vm2395, %v3213, 0.0
  %v3652 = vsel %vm2395, %v3214, 0.0
  %v3653 = vadd.f32 %v3651, %v3652
  %v3654 = vsel %vm2395, %v3215, 0.0
  %v3655 = vadd.f32 %v3653, %v3654
  %v3656 = vsel %vm2395, %v3216, 0.0
  %v3657 = vadd.f32 %v3655, %v3656
  %v3658 = vsel %vm2395, %v3217, 0.0
  %v3659 = vadd.f32 %v3657, %v3658
  %v3660 = vsel %vm2395, %v3218, 0.0
  %v3661 = vadd.f32 %v3659, %v3660
  %v3662 = vsel %vm2395, %v3219, 0.0
  %v3663 = vadd.f32 %v3661, %v3662
  %v3664 = vsel %vm2395, %v3220, 0.0
  %v3665 = vadd.f32 %v3663, %v3664
  %v3666 = vrot.slane %v3665, 4
  %v3667 = vadd.f32 %v3665, %v3666
  %v3668 = vrot.slane %v3667, 2
  %v3669 = vadd.f32 %v3667, %v3668
  %v3670 = vrot.slane %v3669, 1
  %v3671 = vadd.f32 %v3669, %v3670
  %v3672 = vsel %vm2395, %v3221, 0.0
  %v3673 = vsel %vm2395, %v3222, 0.0
  %v3674 = vadd.f32 %v3672, %v3673
  %v3675 = vsel %vm2395, %v3223, 0.0
  %v3676 = vadd.f32 %v3674, %v3675
  %v3677 = vsel %vm2395, %v3224, 0.0
  %v3678 = vadd.f32 %v3676, %v3677
  %v3679 = vsel %vm2395, %v3225, 0.0
  %v3680 = vadd.f32 %v3678, %v3679
  %v3681 = vsel %vm2395, %v3226, 0.0
  %v3682 = vadd.f32 %v3680, %v3681
  %v3683 = vsel %vm2395, %v3227, 0.0
  %v3684 = vadd.f32 %v3682, %v3683
  %v3685 = vsel %vm2395, %v3228, 0.0
  %v3686 = vadd.f32 %v3684, %v3685
  %v3687 = vrot.slane %v3686, 4
  %v3688 = vadd.f32 %v3686, %v3687
  %v3689 = vrot.slane %v3688, 2
  %v3690 = vadd.f32 %v3688, %v3689
  %v3691 = vrot.slane %v3690, 1
  %v3692 = vadd.f32 %v3690, %v3691
  %v3693 = vsel %vm2395, %v3229, 0.0
  %v3694 = vsel %vm2395, %v3230, 0.0
  %v3695 = vadd.f32 %v3693, %v3694
  %v3696 = vsel %vm2395, %v3231, 0.0
  %v3697 = vadd.f32 %v3695, %v3696
  %v3698 = vsel %vm2395, %v3232, 0.0
  %v3699 = vadd.f32 %v3697, %v3698
  %v3700 = vsel %vm2395, %v3233, 0.0
  %v3701 = vadd.f32 %v3699, %v3700
  %v3702 = vsel %vm2395, %v3234, 0.0
  %v3703 = vadd.f32 %v3701, %v3702
  %v3704 = vsel %vm2395, %v3235, 0.0
  %v3705 = vadd.f32 %v3703, %v3704
  %v3706 = vsel %vm2395, %v3236, 0.0
  %v3707 = vadd.f32 %v3705, %v3706
  %v3708 = vrot.slane %v3707, 4
  %v3709 = vadd.f32 %v3707, %v3708
  %v3710 = vrot.slane %v3709, 2
  %v3711 = vadd.f32 %v3709, %v3710
  %v3712 = vrot.slane %v3711, 1
  %v3713 = vadd.f32 %v3711, %v3712
  %v3714 = vsel %vm2395, %v3237, 0.0
  %v3715 = vsel %vm2395, %v3238, 0.0
  %v3716 = vadd.f32 %v3714, %v3715
  %v3717 = vsel %vm2395, %v3239, 0.0
  %v3718 = vadd.f32 %v3716, %v3717
  %v3719 = vsel %vm2395, %v3240, 0.0
  %v3720 = vadd.f32 %v3718, %v3719
  %v3721 = vsel %vm2395, %v3241, 0.0
  %v3722 = vadd.f32 %v3720, %v3721
  %v3723 = vsel %vm2395, %v3242, 0.0
  %v3724 = vadd.f32 %v3722, %v3723
  %v3725 = vsel %vm2395, %v3243, 0.0
  %v3726 = vadd.f32 %v3724, %v3725
  %v3727 = vsel %vm2395, %v3244, 0.0
  %v3728 = vadd.f32 %v3726, %v3727
  %v3729 = vrot.slane %v3728, 4
  %v3730 = vadd.f32 %v3728, %v3729
  %v3731 = vrot.slane %v3730, 2
  %v3732 = vadd.f32 %v3730, %v3731
  %v3733 = vrot.slane %v3732, 1
  %v3734 = vadd.f32 %v3732, %v3733
  %v3735 = vsel %vm2395, %v3245, 0.0
  %v3736 = vsel %vm2395, %v3246, 0.0
  %v3737 = vadd.f32 %v3735, %v3736
  %v3738 = vsel %vm2395, %v3247, 0.0
  %v3739 = vadd.f32 %v3737, %v3738
  %v3740 = vsel %vm2395, %v3248, 0.0
  %v3741 = vadd.f32 %v3739, %v3740
  %v3742 = vsel %vm2395, %v3249, 0.0
  %v3743 = vadd.f32 %v3741, %v3742
  %v3744 = vsel %vm2395, %v3250, 0.0
  %v3745 = vadd.f32 %v3743, %v3744
  %v3746 = vsel %vm2395, %v3251, 0.0
  %v3747 = vadd.f32 %v3745, %v3746
  %v3748 = vsel %vm2395, %v3252, 0.0
  %v3749 = vadd.f32 %v3747, %v3748
  %v3750 = vrot.slane %v3749, 4
  %v3751 = vadd.f32 %v3749, %v3750
  %v3752 = vrot.slane %v3751, 2
  %v3753 = vadd.f32 %v3751, %v3752
  %v3754 = vrot.slane %v3753, 1
  %v3755 = vadd.f32 %v3753, %v3754
  %v3756 = vsel %vm2395, %v3253, 0.0
  %v3757 = vsel %vm2395, %v3254, 0.0
  %v3758 = vadd.f32 %v3756, %v3757
  %v3759 = vsel %vm2395, %v3255, 0.0
  %v3760 = vadd.f32 %v3758, %v3759
  %v3761 = vsel %vm2395, %v3256, 0.0
  %v3762 = vadd.f32 %v3760, %v3761
  %v3763 = vsel %vm2395, %v3257, 0.0
  %v3764 = vadd.f32 %v3762, %v3763
  %v3765 = vsel %vm2395, %v3258, 0.0
  %v3766 = vadd.f32 %v3764, %v3765
  %v3767 = vsel %vm2395, %v3259, 0.0
  %v3768 = vadd.f32 %v3766, %v3767
  %v3769 = vsel %vm2395, %v3260, 0.0
  %v3770 = vadd.f32 %v3768, %v3769
  %v3771 = vrot.slane %v3770, 4
  %v3772 = vadd.f32 %v3770, %v3771
  %v3773 = vrot.slane %v3772, 2
  %v3774 = vadd.f32 %v3772, %v3773
  %v3775 = vrot.slane %v3774, 1
  %v3776 = vadd.f32 %v3774, %v3775
  %v3777 = vsel %vm2395, %v3261, 0.0
  %v3778 = vsel %vm2395, %v3262, 0.0
  %v3779 = vadd.f32 %v3777, %v3778
  %v3780 = vsel %vm2395, %v3263, 0.0
  %v3781 = vadd.f32 %v3779, %v3780
  %v3782 = vsel %vm2395, %v3264, 0.0
  %v3783 = vadd.f32 %v3781, %v3782
  %v3784 = vsel %vm2395, %v3265, 0.0
  %v3785 = vadd.f32 %v3783, %v3784
  %v3786 = vsel %vm2395, %v3266, 0.0
  %v3787 = vadd.f32 %v3785, %v3786
  %v3788 = vsel %vm2395, %v3267, 0.0
  %v3789 = vadd.f32 %v3787, %v3788
  %v3790 = vsel %vm2395, %v3268, 0.0
  %v3791 = vadd.f32 %v3789, %v3790
  %v3792 = vrot.slane %v3791, 4
  %v3793 = vadd.f32 %v3791, %v3792
  %v3794 = vrot.slane %v3793, 2
  %v3795 = vadd.f32 %v3793, %v3794
  %v3796 = vrot.slane %v3795, 1
  %v3797 = vadd.f32 %v3795, %v3796
  %v3798 = vsel %vm2395, %v3269, 0.0
  %v3799 = vsel %vm2395, %v3270, 0.0
  %v3800 = vadd.f32 %v3798, %v3799
  %v3801 = vsel %vm2395, %v3271, 0.0
  %v3802 = vadd.f32 %v3800, %v3801
  %v3803 = vsel %vm2395, %v3272, 0.0
  %v3804 = vadd.f32 %v3802, %v3803
  %v3805 = vsel %vm2395, %v3273, 0.0
  %v3806 = vadd.f32 %v3804, %v3805
  %v3807 = vsel %vm2395, %v3274, 0.0
  %v3808 = vadd.f32 %v3806, %v3807
  %v3809 = vsel %vm2395, %v3275, 0.0
  %v3810 = vadd.f32 %v3808, %v3809
  %v3811 = vsel %vm2395, %v3276, 0.0
  %v3812 = vadd.f32 %v3810, %v3811
  %v3813 = vrot.slane %v3812, 4
  %v3814 = vadd.f32 %v3812, %v3813
  %v3815 = vrot.slane %v3814, 2
  %v3816 = vadd.f32 %v3814, %v3815
  %v3817 = vrot.slane %v3816, 1
  %v3818 = vadd.f32 %v3816, %v3817
  %v3819 = vsel %vm2395, %v3277, 0.0
  %v3820 = vsel %vm2395, %v3278, 0.0
  %v3821 = vadd.f32 %v3819, %v3820
  %v3822 = vsel %vm2395, %v3279, 0.0
  %v3823 = vadd.f32 %v3821, %v3822
  %v3824 = vsel %vm2395, %v3280, 0.0
  %v3825 = vadd.f32 %v3823, %v3824
  %v3826 = vsel %vm2395, %v3281, 0.0
  %v3827 = vadd.f32 %v3825, %v3826
  %v3828 = vsel %vm2395, %v3282, 0.0
  %v3829 = vadd.f32 %v3827, %v3828
  %v3830 = vsel %vm2395, %v3283, 0.0
  %v3831 = vadd.f32 %v3829, %v3830
  %v3832 = vsel %vm2395, %v3284, 0.0
  %v3833 = vadd.f32 %v3831, %v3832
  %v3834 = vrot.slane %v3833, 4
  %v3835 = vadd.f32 %v3833, %v3834
  %v3836 = vrot.slane %v3835, 2
  %v3837 = vadd.f32 %v3835, %v3836
  %v3838 = vrot.slane %v3837, 1
  %v3839 = vadd.f32 %v3837, %v3838
  %v3840 = vsel %vm2395, %v3285, 0.0
  %v3841 = vsel %vm2395, %v3286, 0.0
  %v3842 = vadd.f32 %v3840, %v3841
  %v3843 = vsel %vm2395, %v3287, 0.0
  %v3844 = vadd.f32 %v3842, %v3843
  %v3845 = vsel %vm2395, %v3288, 0.0
  %v3846 = vadd.f32 %v3844, %v3845
  %v3847 = vsel %vm2395, %v3289, 0.0
  %v3848 = vadd.f32 %v3846, %v3847
  %v3849 = vsel %vm2395, %v3290, 0.0
  %v3850 = vadd.f32 %v3848, %v3849
  %v3851 = vsel %vm2395, %v3291, 0.0
  %v3852 = vadd.f32 %v3850, %v3851
  %v3853 = vsel %vm2395, %v3292, 0.0
  %v3854 = vadd.f32 %v3852, %v3853
  %v3855 = vrot.slane %v3854, 4
  %v3856 = vadd.f32 %v3854, %v3855
  %v3857 = vrot.slane %v3856, 2
  %v3858 = vadd.f32 %v3856, %v3857
  %v3859 = vrot.slane %v3858, 1
  %v3860 = vadd.f32 %v3858, %v3859
  %v3861 = vsel %vm2395, %v3293, 0.0
  %v3862 = vsel %vm2395, %v3294, 0.0
  %v3863 = vadd.f32 %v3861, %v3862
  %v3864 = vsel %vm2395, %v3295, 0.0
  %v3865 = vadd.f32 %v3863, %v3864
  %v3866 = vsel %vm2395, %v3296, 0.0
  %v3867 = vadd.f32 %v3865, %v3866
  %v3868 = vsel %vm2395, %v3297, 0.0
  %v3869 = vadd.f32 %v3867, %v3868
  %v3870 = vsel %vm2395, %v3298, 0.0
  %v3871 = vadd.f32 %v3869, %v3870
  %v3872 = vsel %vm2395, %v3299, 0.0
  %v3873 = vadd.f32 %v3871, %v3872
  %v3874 = vsel %vm2395, %v3300, 0.0
  %v3875 = vadd.f32 %v3873, %v3874
  %v3876 = vrot.slane %v3875, 4
  %v3877 = vadd.f32 %v3875, %v3876
  %v3878 = vrot.slane %v3877, 2
  %v3879 = vadd.f32 %v3877, %v3878
  %v3880 = vrot.slane %v3879, 1
  %v3881 = vadd.f32 %v3879, %v3880
  %v3882 = vsel %vm2395, %v3301, 0.0
  %v3883 = vsel %vm2395, %v3302, 0.0
  %v3884 = vadd.f32 %v3882, %v3883
  %v3885 = vsel %vm2395, %v3303, 0.0
  %v3886 = vadd.f32 %v3884, %v3885
  %v3887 = vsel %vm2395, %v3304, 0.0
  %v3888 = vadd.f32 %v3886, %v3887
  %v3889 = vsel %vm2395, %v3305, 0.0
  %v3890 = vadd.f32 %v3888, %v3889
  %v3891 = vsel %vm2395, %v3306, 0.0
  %v3892 = vadd.f32 %v3890, %v3891
  %v3893 = vsel %vm2395, %v3307, 0.0
  %v3894 = vadd.f32 %v3892, %v3893
  %v3895 = vsel %vm2395, %v3308, 0.0
  %v3896 = vadd.f32 %v3894, %v3895
  %v3897 = vrot.slane %v3896, 4
  %v3898 = vadd.f32 %v3896, %v3897
  %v3899 = vrot.slane %v3898, 2
  %v3900 = vadd.f32 %v3898, %v3899
  %v3901 = vrot.slane %v3900, 1
  %v3902 = vadd.f32 %v3900, %v3901
  %v3903 = vsel %vm2395, %v3309, 0.0
  %v3904 = vsel %vm2395, %v3310, 0.0
  %v3905 = vadd.f32 %v3903, %v3904
  %v3906 = vsel %vm2395, %v3311, 0.0
  %v3907 = vadd.f32 %v3905, %v3906
  %v3908 = vsel %vm2395, %v3312, 0.0
  %v3909 = vadd.f32 %v3907, %v3908
  %v3910 = vsel %vm2395, %v3313, 0.0
  %v3911 = vadd.f32 %v3909, %v3910
  %v3912 = vsel %vm2395, %v3314, 0.0
  %v3913 = vadd.f32 %v3911, %v3912
  %v3914 = vsel %vm2395, %v3315, 0.0
  %v3915 = vadd.f32 %v3913, %v3914
  %v3916 = vsel %vm2395, %v3316, 0.0
  %v3917 = vadd.f32 %v3915, %v3916
  %v3918 = vrot.slane %v3917, 4
  %v3919 = vadd.f32 %v3917, %v3918
  %v3920 = vrot.slane %v3919, 2
  %v3921 = vadd.f32 %v3919, %v3920
  %v3922 = vrot.slane %v3921, 1
  %v3923 = vadd.f32 %v3921, %v3922
  %v3924 = vsel %vm2395, %v3317, 0.0
  %v3925 = vsel %vm2395, %v3318, 0.0
  %v3926 = vadd.f32 %v3924, %v3925
  %v3927 = vsel %vm2395, %v3319, 0.0
  %v3928 = vadd.f32 %v3926, %v3927
  %v3929 = vsel %vm2395, %v3320, 0.0
  %v3930 = vadd.f32 %v3928, %v3929
  %v3931 = vsel %vm2395, %v3321, 0.0
  %v3932 = vadd.f32 %v3930, %v3931
  %v3933 = vsel %vm2395, %v3322, 0.0
  %v3934 = vadd.f32 %v3932, %v3933
  %v3935 = vsel %vm2395, %v3323, 0.0
  %v3936 = vadd.f32 %v3934, %v3935
  %v3937 = vsel %vm2395, %v3324, 0.0
  %v3938 = vadd.f32 %v3936, %v3937
  %v3939 = vrot.slane %v3938, 4
  %v3940 = vadd.f32 %v3938, %v3939
  %v3941 = vrot.slane %v3940, 2
  %v3942 = vadd.f32 %v3940, %v3941
  %v3943 = vrot.slane %v3942, 1
  %v3944 = vadd.f32 %v3942, %v3943
  %v3945 = vsel %vm2395, %v3325, 0.0
  %v3946 = vsel %vm2395, %v3326, 0.0
  %v3947 = vadd.f32 %v3945, %v3946
  %v3948 = vsel %vm2395, %v3327, 0.0
  %v3949 = vadd.f32 %v3947, %v3948
  %v3950 = vsel %vm2395, %v3328, 0.0
  %v3951 = vadd.f32 %v3949, %v3950
  %v3952 = vsel %vm2395, %v3329, 0.0
  %v3953 = vadd.f32 %v3951, %v3952
  %v3954 = vsel %vm2395, %v3330, 0.0
  %v3955 = vadd.f32 %v3953, %v3954
  %v3956 = vsel %vm2395, %v3331, 0.0
  %v3957 = vadd.f32 %v3955, %v3956
  %v3958 = vsel %vm2395, %v3332, 0.0
  %v3959 = vadd.f32 %v3957, %v3958
  %v3960 = vrot.slane %v3959, 4
  %v3961 = vadd.f32 %v3959, %v3960
  %v3962 = vrot.slane %v3961, 2
  %v3963 = vadd.f32 %v3961, %v3962
  %v3964 = vrot.slane %v3963, 1
  %v3965 = vadd.f32 %v3963, %v3964
  %v3966 = vsel %vm2395, %v3333, 0.0
  %v3967 = vsel %vm2395, %v3334, 0.0
  %v3968 = vadd.f32 %v3966, %v3967
  %v3969 = vsel %vm2395, %v3335, 0.0
  %v3970 = vadd.f32 %v3968, %v3969
  %v3971 = vsel %vm2395, %v3336, 0.0
  %v3972 = vadd.f32 %v3970, %v3971
  %v3973 = vsel %vm2395, %v3337, 0.0
  %v3974 = vadd.f32 %v3972, %v3973
  %v3975 = vsel %vm2395, %v3338, 0.0
  %v3976 = vadd.f32 %v3974, %v3975
  %v3977 = vsel %vm2395, %v3339, 0.0
  %v3978 = vadd.f32 %v3976, %v3977
  %v3979 = vsel %vm2395, %v3340, 0.0
  %v3980 = vadd.f32 %v3978, %v3979
  %v3981 = vrot.slane %v3980, 4
  %v3982 = vadd.f32 %v3980, %v3981
  %v3983 = vrot.slane %v3982, 2
  %v3984 = vadd.f32 %v3982, %v3983
  %v3985 = vrot.slane %v3984, 1
  %v3986 = vadd.f32 %v3984, %v3985
  %v3987 = vsel %vm2395, %v3341, 0.0
  %v3988 = vsel %vm2395, %v3342, 0.0
  %v3989 = vadd.f32 %v3987, %v3988
  %v3990 = vsel %vm2395, %v3343, 0.0
  %v3991 = vadd.f32 %v3989, %v3990
  %v3992 = vsel %vm2395, %v3344, 0.0
  %v3993 = vadd.f32 %v3991, %v3992
  %v3994 = vsel %vm2395, %v3345, 0.0
  %v3995 = vadd.f32 %v3993, %v3994
  %v3996 = vsel %vm2395, %v3346, 0.0
  %v3997 = vadd.f32 %v3995, %v3996
  %v3998 = vsel %vm2395, %v3347, 0.0
  %v3999 = vadd.f32 %v3997, %v3998
  %v4000 = vsel %vm2395, %v3348, 0.0
  %v4001 = vadd.f32 %v3999, %v4000
  %v4002 = vrot.slane %v4001, 4
  %v4003 = vadd.f32 %v4001, %v4002
  %v4004 = vrot.slane %v4003, 2
  %v4005 = vadd.f32 %v4003, %v4004
  %v4006 = vrot.slane %v4005, 1
  %v4007 = vadd.f32 %v4005, %v4006
  %v4008 = vsel %vm2395, %v3349, 0.0
  %v4009 = vsel %vm2395, %v3350, 0.0
  %v4010 = vadd.f32 %v4008, %v4009
  %v4011 = vsel %vm2395, %v3351, 0.0
  %v4012 = vadd.f32 %v4010, %v4011
  %v4013 = vsel %vm2395, %v3352, 0.0
  %v4014 = vadd.f32 %v4012, %v4013
  %v4015 = vsel %vm2395, %v3353, 0.0
  %v4016 = vadd.f32 %v4014, %v4015
  %v4017 = vsel %vm2395, %v3354, 0.0
  %v4018 = vadd.f32 %v4016, %v4017
  %v4019 = vsel %vm2395, %v3355, 0.0
  %v4020 = vadd.f32 %v4018, %v4019
  %v4021 = vsel %vm2395, %v3356, 0.0
  %v4022 = vadd.f32 %v4020, %v4021
  %v4023 = vrot.slane %v4022, 4
  %v4024 = vadd.f32 %v4022, %v4023
  %v4025 = vrot.slane %v4024, 2
  %v4026 = vadd.f32 %v4024, %v4025
  %v4027 = vrot.slane %v4026, 1
  %v4028 = vadd.f32 %v4026, %v4027
  %v4029 = vmul.f32 %v3377, %v3068
  %v4030 = vmul.f32 %v3398, %v3068
  %v4031 = vmul.f32 %v3419, %v3068
  %v4032 = vmul.f32 %v3440, %v3068
  %v4033 = vmul.f32 %v3461, %v3068
  %v4034 = vmul.f32 %v3482, %v3068
  %v4035 = vmul.f32 %v3503, %v3068
  %v4036 = vmul.f32 %v3524, %v3068
  %v4037 = vmul.f32 %v3545, %v3068
  %v4038 = vmul.f32 %v3566, %v3068
  %v4039 = vmul.f32 %v3587, %v3068
  %v4040 = vmul.f32 %v3608, %v3068
  %v4041 = vmul.f32 %v3629, %v3068
  %v4042 = vmul.f32 %v3650, %v3068
  %v4043 = vmul.f32 %v3671, %v3068
  %v4044 = vmul.f32 %v3692, %v3068
  %v4045 = vmul.f32 %v3713, %v3068
  %v4046 = vmul.f32 %v3734, %v3068
  %v4047 = vmul.f32 %v3755, %v3068
  %v4048 = vmul.f32 %v3776, %v3068
  %v4049 = vmul.f32 %v3797, %v3068
  %v4050 = vmul.f32 %v3818, %v3068
  %v4051 = vmul.f32 %v3839, %v3068
  %v4052 = vmul.f32 %v3860, %v3068
  %v4053 = vmul.f32 %v3881, %v3068
  %v4054 = vmul.f32 %v3902, %v3068
  %v4055 = vmul.f32 %v3923, %v3068
  %v4056 = vmul.f32 %v3944, %v3068
  %v4057 = vmul.f32 %v3965, %v3068
  %v4058 = vmul.f32 %v3986, %v3068
  %v4059 = vmul.f32 %v4007, %v3068
  %v4060 = vmul.f32 %v4028, %v3068
  %v4061 = vmul.f32 %v3069, %v3069
  %v4062 = vmul.f32 %v3070, %v3070
  %v4063 = vmul.f32 %v3071, %v3071
  %v4064 = vmul.f32 %v3072, %v3072
  %v4065 = vmul.f32 %v3073, %v3073
  %v4066 = vmul.f32 %v3074, %v3074
  %v4067 = vmul.f32 %v3075, %v3075
  %v4068 = vmul.f32 %v3076, %v3076
  %v4069 = vmul.f32 %v3077, %v3077
  %v4070 = vmul.f32 %v3078, %v3078
  %v4071 = vmul.f32 %v3079, %v3079
  %v4072 = vmul.f32 %v3080, %v3080
  %v4073 = vmul.f32 %v3081, %v3081
  %v4074 = vmul.f32 %v3082, %v3082
  %v4075 = vmul.f32 %v3083, %v3083
  %v4076 = vmul.f32 %v3084, %v3084
  %v4077 = vmul.f32 %v3085, %v3085
  %v4078 = vmul.f32 %v3086, %v3086
  %v4079 = vmul.f32 %v3087, %v3087
  %v4080 = vmul.f32 %v3088, %v3088
  %v4081 = vmul.f32 %v3089, %v3089
  %v4082 = vmul.f32 %v3090, %v3090
  %v4083 = vmul.f32 %v3091, %v3091
  %v4084 = vmul.f32 %v3092, %v3092
  %v4085 = vmul.f32 %v3093, %v3093
  %v4086 = vmul.f32 %v3094, %v3094
  %v4087 = vmul.f32 %v3095, %v3095
  %v4088 = vmul.f32 %v3096, %v3096
  %v4089 = vmul.f32 %v3097, %v3097
  %v4090 = vmul.f32 %v3098, %v3098
  %v4091 = vmul.f32 %v3099, %v3099
  %v4092 = vmul.f32 %v3100, %v3100
  %v4093 = vsub.f32 %v4029, %v4061
  %v4094 = vsub.f32 %v4030, %v4062
  %v4095 = vsub.f32 %v4031, %v4063
  %v4096 = vsub.f32 %v4032, %v4064
  %v4097 = vsub.f32 %v4033, %v4065
  %v4098 = vsub.f32 %v4034, %v4066
  %v4099 = vsub.f32 %v4035, %v4067
  %v4100 = vsub.f32 %v4036, %v4068
  %v4101 = vsub.f32 %v4037, %v4069
  %v4102 = vsub.f32 %v4038, %v4070
  %v4103 = vsub.f32 %v4039, %v4071
  %v4104 = vsub.f32 %v4040, %v4072
  %v4105 = vsub.f32 %v4041, %v4073
  %v4106 = vsub.f32 %v4042, %v4074
  %v4107 = vsub.f32 %v4043, %v4075
  %v4108 = vsub.f32 %v4044, %v4076
  %v4109 = vsub.f32 %v4045, %v4077
  %v4110 = vsub.f32 %v4046, %v4078
  %v4111 = vsub.f32 %v4047, %v4079
  %v4112 = vsub.f32 %v4048, %v4080
  %v4113 = vsub.f32 %v4049, %v4081
  %v4114 = vsub.f32 %v4050, %v4082
  %v4115 = vsub.f32 %v4051, %v4083
  %v4116 = vsub.f32 %v4052, %v4084
  %v4117 = vsub.f32 %v4053, %v4085
  %v4118 = vsub.f32 %v4054, %v4086
  %v4119 = vsub.f32 %v4055, %v4087
  %v4120 = vsub.f32 %v4056, %v4088
  %v4121 = vsub.f32 %v4057, %v4089
  %v4122 = vsub.f32 %v4058, %v4090
  %v4123 = vsub.f32 %v4059, %v4091
  %v4124 = vsub.f32 %v4060, %v4092
  %v4125 = vmax.f32 %v4093, 0.0
  %v4126 = vmax.f32 %v4094, 0.0
  %v4127 = vmax.f32 %v4095, 0.0
  %v4128 = vmax.f32 %v4096, 0.0
  %v4129 = vmax.f32 %v4097, 0.0
  %v4130 = vmax.f32 %v4098, 0.0
  %v4131 = vmax.f32 %v4099, 0.0
  %v4132 = vmax.f32 %v4100, 0.0
  %v4133 = vmax.f32 %v4101, 0.0
  %v4134 = vmax.f32 %v4102, 0.0
  %v4135 = vmax.f32 %v4103, 0.0
  %v4136 = vmax.f32 %v4104, 0.0
  %v4137 = vmax.f32 %v4105, 0.0
  %v4138 = vmax.f32 %v4106, 0.0
  %v4139 = vmax.f32 %v4107, 0.0
  %v4140 = vmax.f32 %v4108, 0.0
  %v4141 = vmax.f32 %v4109, 0.0
  %v4142 = vmax.f32 %v4110, 0.0
  %v4143 = vmax.f32 %v4111, 0.0
  %v4144 = vmax.f32 %v4112, 0.0
  %v4145 = vmax.f32 %v4113, 0.0
  %v4146 = vmax.f32 %v4114, 0.0
  %v4147 = vmax.f32 %v4115, 0.0
  %v4148 = vmax.f32 %v4116, 0.0
  %v4149 = vmax.f32 %v4117, 0.0
  %v4150 = vmax.f32 %v4118, 0.0
  %v4151 = vmax.f32 %v4119, 0.0
  %v4152 = vmax.f32 %v4120, 0.0
  %v4153 = vmax.f32 %v4121, 0.0
  %v4154 = vmax.f32 %v4122, 0.0
  %v4155 = vmax.f32 %v4123, 0.0
  %v4156 = vmax.f32 %v4124, 0.0
  %v4157 = vsub.f32 %v1117, %v3069
  %v4158 = vsub.f32 %v1122, %v3069
  %v4159 = vsub.f32 %v1127, %v3069
  %v4160 = vsub.f32 %v1132, %v3069
  %v4161 = vsub.f32 %v1137, %v3069
  %v4162 = vsub.f32 %v1142, %v3069
  %v4163 = vsub.f32 %v1147, %v3069
  %v4164 = vsub.f32 %v1152, %v3069
  %v4165 = vsub.f32 %v1157, %v3070
  %v4166 = vsub.f32 %v1162, %v3070
  %v4167 = vsub.f32 %v1167, %v3070
  %v4168 = vsub.f32 %v1172, %v3070
  %v4169 = vsub.f32 %v1177, %v3070
  %v4170 = vsub.f32 %v1182, %v3070
  %v4171 = vsub.f32 %v1187, %v3070
  %v4172 = vsub.f32 %v1192, %v3070
  %v4173 = vsub.f32 %v1197, %v3071
  %v4174 = vsub.f32 %v1202, %v3071
  %v4175 = vsub.f32 %v1207, %v3071
  %v4176 = vsub.f32 %v1212, %v3071
  %v4177 = vsub.f32 %v1217, %v3071
  %v4178 = vsub.f32 %v1222, %v3071
  %v4179 = vsub.f32 %v1227, %v3071
  %v4180 = vsub.f32 %v1232, %v3071
  %v4181 = vsub.f32 %v1237, %v3072
  %v4182 = vsub.f32 %v1242, %v3072
  %v4183 = vsub.f32 %v1247, %v3072
  %v4184 = vsub.f32 %v1252, %v3072
  %v4185 = vsub.f32 %v1257, %v3072
  %v4186 = vsub.f32 %v1262, %v3072
  %v4187 = vsub.f32 %v1267, %v3072
  %v4188 = vsub.f32 %v1272, %v3072
  %v4189 = vsub.f32 %v1277, %v3073
  %v4190 = vsub.f32 %v1282, %v3073
  %v4191 = vsub.f32 %v1287, %v3073
  %v4192 = vsub.f32 %v1292, %v3073
  %v4193 = vsub.f32 %v1297, %v3073
  %v4194 = vsub.f32 %v1302, %v3073
  %v4195 = vsub.f32 %v1307, %v3073
  %v4196 = vsub.f32 %v1312, %v3073
  %v4197 = vsub.f32 %v1317, %v3074
  %v4198 = vsub.f32 %v1322, %v3074
  %v4199 = vsub.f32 %v1327, %v3074
  %v4200 = vsub.f32 %v1332, %v3074
  %v4201 = vsub.f32 %v1337, %v3074
  %v4202 = vsub.f32 %v1342, %v3074
  %v4203 = vsub.f32 %v1347, %v3074
  %v4204 = vsub.f32 %v1352, %v3074
  %v4205 = vsub.f32 %v1357, %v3075
  %v4206 = vsub.f32 %v1362, %v3075
  %v4207 = vsub.f32 %v1367, %v3075
  %v4208 = vsub.f32 %v1372, %v3075
  %v4209 = vsub.f32 %v1377, %v3075
  %v4210 = vsub.f32 %v1382, %v3075
  %v4211 = vsub.f32 %v1387, %v3075
  %v4212 = vsub.f32 %v1392, %v3075
  %v4213 = vsub.f32 %v1397, %v3076
  %v4214 = vsub.f32 %v1402, %v3076
  %v4215 = vsub.f32 %v1407, %v3076
  %v4216 = vsub.f32 %v1412, %v3076
  %v4217 = vsub.f32 %v1417, %v3076
  %v4218 = vsub.f32 %v1422, %v3076
  %v4219 = vsub.f32 %v1427, %v3076
  %v4220 = vsub.f32 %v1432, %v3076
  %v4221 = vsub.f32 %v1437, %v3077
  %v4222 = vsub.f32 %v1442, %v3077
  %v4223 = vsub.f32 %v1447, %v3077
  %v4224 = vsub.f32 %v1452, %v3077
  %v4225 = vsub.f32 %v1457, %v3077
  %v4226 = vsub.f32 %v1462, %v3077
  %v4227 = vsub.f32 %v1467, %v3077
  %v4228 = vsub.f32 %v1472, %v3077
  %v4229 = vsub.f32 %v1477, %v3078
  %v4230 = vsub.f32 %v1482, %v3078
  %v4231 = vsub.f32 %v1487, %v3078
  %v4232 = vsub.f32 %v1492, %v3078
  %v4233 = vsub.f32 %v1497, %v3078
  %v4234 = vsub.f32 %v1502, %v3078
  %v4235 = vsub.f32 %v1507, %v3078
  %v4236 = vsub.f32 %v1512, %v3078
  %v4237 = vsub.f32 %v1517, %v3079
  %v4238 = vsub.f32 %v1522, %v3079
  %v4239 = vsub.f32 %v1527, %v3079
  %v4240 = vsub.f32 %v1532, %v3079
  %v4241 = vsub.f32 %v1537, %v3079
  %v4242 = vsub.f32 %v1542, %v3079
  %v4243 = vsub.f32 %v1547, %v3079
  %v4244 = vsub.f32 %v1552, %v3079
  %v4245 = vsub.f32 %v1557, %v3080
  %v4246 = vsub.f32 %v1562, %v3080
  %v4247 = vsub.f32 %v1567, %v3080
  %v4248 = vsub.f32 %v1572, %v3080
  %v4249 = vsub.f32 %v1577, %v3080
  %v4250 = vsub.f32 %v1582, %v3080
  %v4251 = vsub.f32 %v1587, %v3080
  %v4252 = vsub.f32 %v1592, %v3080
  %v4253 = vsub.f32 %v1597, %v3081
  %v4254 = vsub.f32 %v1602, %v3081
  %v4255 = vsub.f32 %v1607, %v3081
  %v4256 = vsub.f32 %v1612, %v3081
  %v4257 = vsub.f32 %v1617, %v3081
  %v4258 = vsub.f32 %v1622, %v3081
  %v4259 = vsub.f32 %v1627, %v3081
  %v4260 = vsub.f32 %v1632, %v3081
  %v4261 = vsub.f32 %v1637, %v3082
  %v4262 = vsub.f32 %v1642, %v3082
  %v4263 = vsub.f32 %v1647, %v3082
  %v4264 = vsub.f32 %v1652, %v3082
  %v4265 = vsub.f32 %v1657, %v3082
  %v4266 = vsub.f32 %v1662, %v3082
  %v4267 = vsub.f32 %v1667, %v3082
  %v4268 = vsub.f32 %v1672, %v3082
  %v4269 = vsub.f32 %v1677, %v3083
  %v4270 = vsub.f32 %v1682, %v3083
  %v4271 = vsub.f32 %v1687, %v3083
  %v4272 = vsub.f32 %v1692, %v3083
  %v4273 = vsub.f32 %v1697, %v3083
  %v4274 = vsub.f32 %v1702, %v3083
  %v4275 = vsub.f32 %v1707, %v3083
  %v4276 = vsub.f32 %v1712, %v3083
  %v4277 = vsub.f32 %v1717, %v3084
  %v4278 = vsub.f32 %v1722, %v3084
  %v4279 = vsub.f32 %v1727, %v3084
  %v4280 = vsub.f32 %v1732, %v3084
  %v4281 = vsub.f32 %v1737, %v3084
  %v4282 = vsub.f32 %v1742, %v3084
  %v4283 = vsub.f32 %v1747, %v3084
  %v4284 = vsub.f32 %v1752, %v3084
  %v4285 = vsub.f32 %v1757, %v3085
  %v4286 = vsub.f32 %v1762, %v3085
  %v4287 = vsub.f32 %v1767, %v3085
  %v4288 = vsub.f32 %v1772, %v3085
  %v4289 = vsub.f32 %v1777, %v3085
  %v4290 = vsub.f32 %v1782, %v3085
  %v4291 = vsub.f32 %v1787, %v3085
  %v4292 = vsub.f32 %v1792, %v3085
  %v4293 = vsub.f32 %v1797, %v3086
  %v4294 = vsub.f32 %v1802, %v3086
  %v4295 = vsub.f32 %v1807, %v3086
  %v4296 = vsub.f32 %v1812, %v3086
  %v4297 = vsub.f32 %v1817, %v3086
  %v4298 = vsub.f32 %v1822, %v3086
  %v4299 = vsub.f32 %v1827, %v3086
  %v4300 = vsub.f32 %v1832, %v3086
  %v4301 = vsub.f32 %v1837, %v3087
  %v4302 = vsub.f32 %v1842, %v3087
  %v4303 = vsub.f32 %v1847, %v3087
  %v4304 = vsub.f32 %v1852, %v3087
  %v4305 = vsub.f32 %v1857, %v3087
  %v4306 = vsub.f32 %v1862, %v3087
  %v4307 = vsub.f32 %v1867, %v3087
  %v4308 = vsub.f32 %v1872, %v3087
  %v4309 = vsub.f32 %v1877, %v3088
  %v4310 = vsub.f32 %v1882, %v3088
  %v4311 = vsub.f32 %v1887, %v3088
  %v4312 = vsub.f32 %v1892, %v3088
  %v4313 = vsub.f32 %v1897, %v3088
  %v4314 = vsub.f32 %v1902, %v3088
  %v4315 = vsub.f32 %v1907, %v3088
  %v4316 = vsub.f32 %v1912, %v3088
  %v4317 = vsub.f32 %v1917, %v3089
  %v4318 = vsub.f32 %v1922, %v3089
  %v4319 = vsub.f32 %v1927, %v3089
  %v4320 = vsub.f32 %v1932, %v3089
  %v4321 = vsub.f32 %v1937, %v3089
  %v4322 = vsub.f32 %v1942, %v3089
  %v4323 = vsub.f32 %v1947, %v3089
  %v4324 = vsub.f32 %v1952, %v3089
  %v4325 = vsub.f32 %v1957, %v3090
  %v4326 = vsub.f32 %v1962, %v3090
  %v4327 = vsub.f32 %v1967, %v3090
  %v4328 = vsub.f32 %v1972, %v3090
  %v4329 = vsub.f32 %v1977, %v3090
  %v4330 = vsub.f32 %v1982, %v3090
  %v4331 = vsub.f32 %v1987, %v3090
  %v4332 = vsub.f32 %v1992, %v3090
  %v4333 = vsub.f32 %v1997, %v3091
  %v4334 = vsub.f32 %v2002, %v3091
  %v4335 = vsub.f32 %v2007, %v3091
  %v4336 = vsub.f32 %v2012, %v3091
  %v4337 = vsub.f32 %v2017, %v3091
  %v4338 = vsub.f32 %v2022, %v3091
  %v4339 = vsub.f32 %v2027, %v3091
  %v4340 = vsub.f32 %v2032, %v3091
  %v4341 = vsub.f32 %v2037, %v3092
  %v4342 = vsub.f32 %v2042, %v3092
  %v4343 = vsub.f32 %v2047, %v3092
  %v4344 = vsub.f32 %v2052, %v3092
  %v4345 = vsub.f32 %v2057, %v3092
  %v4346 = vsub.f32 %v2062, %v3092
  %v4347 = vsub.f32 %v2067, %v3092
  %v4348 = vsub.f32 %v2072, %v3092
  %v4349 = vsub.f32 %v2077, %v3093
  %v4350 = vsub.f32 %v2082, %v3093
  %v4351 = vsub.f32 %v2087, %v3093
  %v4352 = vsub.f32 %v2092, %v3093
  %v4353 = vsub.f32 %v2097, %v3093
  %v4354 = vsub.f32 %v2102, %v3093
  %v4355 = vsub.f32 %v2107, %v3093
  %v4356 = vsub.f32 %v2112, %v3093
  %v4357 = vsub.f32 %v2117, %v3094
  %v4358 = vsub.f32 %v2122, %v3094
  %v4359 = vsub.f32 %v2127, %v3094
  %v4360 = vsub.f32 %v2132, %v3094
  %v4361 = vsub.f32 %v2137, %v3094
  %v4362 = vsub.f32 %v2142, %v3094
  %v4363 = vsub.f32 %v2147, %v3094
  %v4364 = vsub.f32 %v2152, %v3094
  %v4365 = vsub.f32 %v2157, %v3095
  %v4366 = vsub.f32 %v2162, %v3095
  %v4367 = vsub.f32 %v2167, %v3095
  %v4368 = vsub.f32 %v2172, %v3095
  %v4369 = vsub.f32 %v2177, %v3095
  %v4370 = vsub.f32 %v2182, %v3095
  %v4371 = vsub.f32 %v2187, %v3095
  %v4372 = vsub.f32 %v2192, %v3095
  %v4373 = vsub.f32 %v2197, %v3096
  %v4374 = vsub.f32 %v2202, %v3096
  %v4375 = vsub.f32 %v2207, %v3096
  %v4376 = vsub.f32 %v2212, %v3096
  %v4377 = vsub.f32 %v2217, %v3096
  %v4378 = vsub.f32 %v2222, %v3096
  %v4379 = vsub.f32 %v2227, %v3096
  %v4380 = vsub.f32 %v2232, %v3096
  %v4381 = vsub.f32 %v2237, %v3097
  %v4382 = vsub.f32 %v2242, %v3097
  %v4383 = vsub.f32 %v2247, %v3097
  %v4384 = vsub.f32 %v2252, %v3097
  %v4385 = vsub.f32 %v2257, %v3097
  %v4386 = vsub.f32 %v2262, %v3097
  %v4387 = vsub.f32 %v2267, %v3097
  %v4388 = vsub.f32 %v2272, %v3097
  %v4389 = vsub.f32 %v2277, %v3098
  %v4390 = vsub.f32 %v2282, %v3098
  %v4391 = vsub.f32 %v2287, %v3098
  %v4392 = vsub.f32 %v2292, %v3098
  %v4393 = vsub.f32 %v2297, %v3098
  %v4394 = vsub.f32 %v2302, %v3098
  %v4395 = vsub.f32 %v2307, %v3098
  %v4396 = vsub.f32 %v2312, %v3098
  %v4397 = vsub.f32 %v2317, %v3099
  %v4398 = vsub.f32 %v2322, %v3099
  %v4399 = vsub.f32 %v2327, %v3099
  %v4400 = vsub.f32 %v2332, %v3099
  %v4401 = vsub.f32 %v2337, %v3099
  %v4402 = vsub.f32 %v2342, %v3099
  %v4403 = vsub.f32 %v2347, %v3099
  %v4404 = vsub.f32 %v2352, %v3099
  %v4405 = vsub.f32 %v2357, %v3100
  %v4406 = vsub.f32 %v2362, %v3100
  %v4407 = vsub.f32 %v2367, %v3100
  %v4408 = vsub.f32 %v2372, %v3100
  %v4409 = vsub.f32 %v2377, %v3100
  %v4410 = vsub.f32 %v2382, %v3100
  %v4411 = vsub.f32 %v2387, %v3100
  %v4412 = vsub.f32 %v2392, %v3100
  %v4413 = vadd.f32 %v4125, 1e-05
  %v4414 = vadd.f32 %v4126, 1e-05
  %v4415 = vadd.f32 %v4127, 1e-05
  %v4416 = vadd.f32 %v4128, 1e-05
  %v4417 = vadd.f32 %v4129, 1e-05
  %v4418 = vadd.f32 %v4130, 1e-05
  %v4419 = vadd.f32 %v4131, 1e-05
  %v4420 = vadd.f32 %v4132, 1e-05
  %v4421 = vadd.f32 %v4133, 1e-05
  %v4422 = vadd.f32 %v4134, 1e-05
  %v4423 = vadd.f32 %v4135, 1e-05
  %v4424 = vadd.f32 %v4136, 1e-05
  %v4425 = vadd.f32 %v4137, 1e-05
  %v4426 = vadd.f32 %v4138, 1e-05
  %v4427 = vadd.f32 %v4139, 1e-05
  %v4428 = vadd.f32 %v4140, 1e-05
  %v4429 = vadd.f32 %v4141, 1e-05
  %v4430 = vadd.f32 %v4142, 1e-05
  %v4431 = vadd.f32 %v4143, 1e-05
  %v4432 = vadd.f32 %v4144, 1e-05
  %v4433 = vadd.f32 %v4145, 1e-05
  %v4434 = vadd.f32 %v4146, 1e-05
  %v4435 = vadd.f32 %v4147, 1e-05
  %v4436 = vadd.f32 %v4148, 1e-05
  %v4437 = vadd.f32 %v4149, 1e-05
  %v4438 = vadd.f32 %v4150, 1e-05
  %v4439 = vadd.f32 %v4151, 1e-05
  %v4440 = vadd.f32 %v4152, 1e-05
  %v4441 = vadd.f32 %v4153, 1e-05
  %v4442 = vadd.f32 %v4154, 1e-05
  %v4443 = vadd.f32 %v4155, 1e-05
  %v4444 = vadd.f32 %v4156, 1e-05
  %v4445 = vrsqrt.pop %v4413
  %v4446 = vrsqrt.pop %v4414
  %v4447 = vrsqrt.pop %v4415
  %v4448 = vrsqrt.pop %v4416
  %v4449 = vrsqrt.pop %v4417
  %v4450 = vrsqrt.pop %v4418
  %v4451 = vrsqrt.pop %v4419
  %v4452 = vrsqrt.pop %v4420
  %v4453 = vrsqrt.pop %v4421
  %v4454 = vrsqrt.pop %v4422
  %v4455 = vrsqrt.pop %v4423
  %v4456 = vrsqrt.pop %v4424
  %v4457 = vrsqrt.pop %v4425
  %v4458 = vrsqrt.pop %v4426
  %v4459 = vrsqrt.pop %v4427
  %v4460 = vrsqrt.pop %v4428
  %v4461 = vrsqrt.pop %v4429
  %v4462 = vrsqrt.pop %v4430
  %v4463 = vrsqrt.pop %v4431
  %v4464 = vrsqrt.pop %v4432
  %v4465 = vrsqrt.pop %v4433
  %v4466 = vrsqrt.pop %v4434
  %v4467 = vrsqrt.pop %v4435
  %v4468 = vrsqrt.pop %v4436
  %v4469 = vrsqrt.pop %v4437
  %v4470 = vrsqrt.pop %v4438
  %v4471 = vrsqrt.pop %v4439
  %v4472 = vrsqrt.pop %v4440
  %v4473 = vrsqrt.pop %v4441
  %v4474 = vrsqrt.pop %v4442
  %v4475 = vrsqrt.pop %v4443
  %v4476 = vrsqrt.pop %v4444
  %v4477 = vmul.f32 %v4157, %v4445
  %v4478 = vmul.f32 %v4158, %v4445
  %v4479 = vmul.f32 %v4159, %v4445
  %v4480 = vmul.f32 %v4160, %v4445
  %v4481 = vmul.f32 %v4161, %v4445
  %v4482 = vmul.f32 %v4162, %v4445
  %v4483 = vmul.f32 %v4163, %v4445
  %v4484 = vmul.f32 %v4164, %v4445
  %v4485 = vmul.f32 %v4165, %v4446
  %v4486 = vmul.f32 %v4166, %v4446
  %v4487 = vmul.f32 %v4167, %v4446
  %v4488 = vmul.f32 %v4168, %v4446
  %v4489 = vmul.f32 %v4169, %v4446
  %v4490 = vmul.f32 %v4170, %v4446
  %v4491 = vmul.f32 %v4171, %v4446
  %v4492 = vmul.f32 %v4172, %v4446
  %v4493 = vmul.f32 %v4173, %v4447
  %v4494 = vmul.f32 %v4174, %v4447
  %v4495 = vmul.f32 %v4175, %v4447
  %v4496 = vmul.f32 %v4176, %v4447
  %v4497 = vmul.f32 %v4177, %v4447
  %v4498 = vmul.f32 %v4178, %v4447
  %v4499 = vmul.f32 %v4179, %v4447
  %v4500 = vmul.f32 %v4180, %v4447
  %v4501 = vmul.f32 %v4181, %v4448
  %v4502 = vmul.f32 %v4182, %v4448
  %v4503 = vmul.f32 %v4183, %v4448
  %v4504 = vmul.f32 %v4184, %v4448
  %v4505 = vmul.f32 %v4185, %v4448
  %v4506 = vmul.f32 %v4186, %v4448
  %v4507 = vmul.f32 %v4187, %v4448
  %v4508 = vmul.f32 %v4188, %v4448
  %v4509 = vmul.f32 %v4189, %v4449
  %v4510 = vmul.f32 %v4190, %v4449
  %v4511 = vmul.f32 %v4191, %v4449
  %v4512 = vmul.f32 %v4192, %v4449
  %v4513 = vmul.f32 %v4193, %v4449
  %v4514 = vmul.f32 %v4194, %v4449
  %v4515 = vmul.f32 %v4195, %v4449
  %v4516 = vmul.f32 %v4196, %v4449
  %v4517 = vmul.f32 %v4197, %v4450
  %v4518 = vmul.f32 %v4198, %v4450
  %v4519 = vmul.f32 %v4199, %v4450
  %v4520 = vmul.f32 %v4200, %v4450
  %v4521 = vmul.f32 %v4201, %v4450
  %v4522 = vmul.f32 %v4202, %v4450
  %v4523 = vmul.f32 %v4203, %v4450
  %v4524 = vmul.f32 %v4204, %v4450
  %v4525 = vmul.f32 %v4205, %v4451
  %v4526 = vmul.f32 %v4206, %v4451
  %v4527 = vmul.f32 %v4207, %v4451
  %v4528 = vmul.f32 %v4208, %v4451
  %v4529 = vmul.f32 %v4209, %v4451
  %v4530 = vmul.f32 %v4210, %v4451
  %v4531 = vmul.f32 %v4211, %v4451
  %v4532 = vmul.f32 %v4212, %v4451
  %v4533 = vmul.f32 %v4213, %v4452
  %v4534 = vmul.f32 %v4214, %v4452
  %v4535 = vmul.f32 %v4215, %v4452
  %v4536 = vmul.f32 %v4216, %v4452
  %v4537 = vmul.f32 %v4217, %v4452
  %v4538 = vmul.f32 %v4218, %v4452
  %v4539 = vmul.f32 %v4219, %v4452
  %v4540 = vmul.f32 %v4220, %v4452
  %v4541 = vmul.f32 %v4221, %v4453
  %v4542 = vmul.f32 %v4222, %v4453
  %v4543 = vmul.f32 %v4223, %v4453
  %v4544 = vmul.f32 %v4224, %v4453
  %v4545 = vmul.f32 %v4225, %v4453
  %v4546 = vmul.f32 %v4226, %v4453
  %v4547 = vmul.f32 %v4227, %v4453
  %v4548 = vmul.f32 %v4228, %v4453
  %v4549 = vmul.f32 %v4229, %v4454
  %v4550 = vmul.f32 %v4230, %v4454
  %v4551 = vmul.f32 %v4231, %v4454
  %v4552 = vmul.f32 %v4232, %v4454
  %v4553 = vmul.f32 %v4233, %v4454
  %v4554 = vmul.f32 %v4234, %v4454
  %v4555 = vmul.f32 %v4235, %v4454
  %v4556 = vmul.f32 %v4236, %v4454
  %v4557 = vmul.f32 %v4237, %v4455
  %v4558 = vmul.f32 %v4238, %v4455
  %v4559 = vmul.f32 %v4239, %v4455
  %v4560 = vmul.f32 %v4240, %v4455
  %v4561 = vmul.f32 %v4241, %v4455
  %v4562 = vmul.f32 %v4242, %v4455
  %v4563 = vmul.f32 %v4243, %v4455
  %v4564 = vmul.f32 %v4244, %v4455
  %v4565 = vmul.f32 %v4245, %v4456
  %v4566 = vmul.f32 %v4246, %v4456
  %v4567 = vmul.f32 %v4247, %v4456
  %v4568 = vmul.f32 %v4248, %v4456
  %v4569 = vmul.f32 %v4249, %v4456
  %v4570 = vmul.f32 %v4250, %v4456
  %v4571 = vmul.f32 %v4251, %v4456
  %v4572 = vmul.f32 %v4252, %v4456
  %v4573 = vmul.f32 %v4253, %v4457
  %v4574 = vmul.f32 %v4254, %v4457
  %v4575 = vmul.f32 %v4255, %v4457
  %v4576 = vmul.f32 %v4256, %v4457
  %v4577 = vmul.f32 %v4257, %v4457
  %v4578 = vmul.f32 %v4258, %v4457
  %v4579 = vmul.f32 %v4259, %v4457
  %v4580 = vmul.f32 %v4260, %v4457
  %v4581 = vmul.f32 %v4261, %v4458
  %v4582 = vmul.f32 %v4262, %v4458
  %v4583 = vmul.f32 %v4263, %v4458
  %v4584 = vmul.f32 %v4264, %v4458
  %v4585 = vmul.f32 %v4265, %v4458
  %v4586 = vmul.f32 %v4266, %v4458
  %v4587 = vmul.f32 %v4267, %v4458
  %v4588 = vmul.f32 %v4268, %v4458
  %v4589 = vmul.f32 %v4269, %v4459
  %v4590 = vmul.f32 %v4270, %v4459
  %v4591 = vmul.f32 %v4271, %v4459
  %v4592 = vmul.f32 %v4272, %v4459
  %v4593 = vmul.f32 %v4273, %v4459
  %v4594 = vmul.f32 %v4274, %v4459
  %v4595 = vmul.f32 %v4275, %v4459
  %v4596 = vmul.f32 %v4276, %v4459
  %v4597 = vmul.f32 %v4277, %v4460
  %v4598 = vmul.f32 %v4278, %v4460
  %v4599 = vmul.f32 %v4279, %v4460
  %v4600 = vmul.f32 %v4280, %v4460
  %v4601 = vmul.f32 %v4281, %v4460
  %v4602 = vmul.f32 %v4282, %v4460
  %v4603 = vmul.f32 %v4283, %v4460
  %v4604 = vmul.f32 %v4284, %v4460
  %v4605 = vmul.f32 %v4285, %v4461
  %v4606 = vmul.f32 %v4286, %v4461
  %v4607 = vmul.f32 %v4287, %v4461
  %v4608 = vmul.f32 %v4288, %v4461
  %v4609 = vmul.f32 %v4289, %v4461
  %v4610 = vmul.f32 %v4290, %v4461
  %v4611 = vmul.f32 %v4291, %v4461
  %v4612 = vmul.f32 %v4292, %v4461
  %v4613 = vmul.f32 %v4293, %v4462
  %v4614 = vmul.f32 %v4294, %v4462
  %v4615 = vmul.f32 %v4295, %v4462
  %v4616 = vmul.f32 %v4296, %v4462
  %v4617 = vmul.f32 %v4297, %v4462
  %v4618 = vmul.f32 %v4298, %v4462
  %v4619 = vmul.f32 %v4299, %v4462
  %v4620 = vmul.f32 %v4300, %v4462
  %v4621 = vmul.f32 %v4301, %v4463
  %v4622 = vmul.f32 %v4302, %v4463
  %v4623 = vmul.f32 %v4303, %v4463
  %v4624 = vmul.f32 %v4304, %v4463
  %v4625 = vmul.f32 %v4305, %v4463
  %v4626 = vmul.f32 %v4306, %v4463
  %v4627 = vmul.f32 %v4307, %v4463
  %v4628 = vmul.f32 %v4308, %v4463
  %v4629 = vmul.f32 %v4309, %v4464
  %v4630 = vmul.f32 %v4310, %v4464
  %v4631 = vmul.f32 %v4311, %v4464
  %v4632 = vmul.f32 %v4312, %v4464
  %v4633 = vmul.f32 %v4313, %v4464
  %v4634 = vmul.f32 %v4314, %v4464
  %v4635 = vmul.f32 %v4315, %v4464
  %v4636 = vmul.f32 %v4316, %v4464
  %v4637 = vmul.f32 %v4317, %v4465
  %v4638 = vmul.f32 %v4318, %v4465
  %v4639 = vmul.f32 %v4319, %v4465
  %v4640 = vmul.f32 %v4320, %v4465
  %v4641 = vmul.f32 %v4321, %v4465
  %v4642 = vmul.f32 %v4322, %v4465
  %v4643 = vmul.f32 %v4323, %v4465
  %v4644 = vmul.f32 %v4324, %v4465
  %v4645 = vmul.f32 %v4325, %v4466
  %v4646 = vmul.f32 %v4326, %v4466
  %v4647 = vmul.f32 %v4327, %v4466
  %v4648 = vmul.f32 %v4328, %v4466
  %v4649 = vmul.f32 %v4329, %v4466
  %v4650 = vmul.f32 %v4330, %v4466
  %v4651 = vmul.f32 %v4331, %v4466
  %v4652 = vmul.f32 %v4332, %v4466
  %v4653 = vmul.f32 %v4333, %v4467
  %v4654 = vmul.f32 %v4334, %v4467
  %v4655 = vmul.f32 %v4335, %v4467
  %v4656 = vmul.f32 %v4336, %v4467
  %v4657 = vmul.f32 %v4337, %v4467
  %v4658 = vmul.f32 %v4338, %v4467
  %v4659 = vmul.f32 %v4339, %v4467
  %v4660 = vmul.f32 %v4340, %v4467
  %v4661 = vmul.f32 %v4341, %v4468
  %v4662 = vmul.f32 %v4342, %v4468
  %v4663 = vmul.f32 %v4343, %v4468
  %v4664 = vmul.f32 %v4344, %v4468
  %v4665 = vmul.f32 %v4345, %v4468
  %v4666 = vmul.f32 %v4346, %v4468
  %v4667 = vmul.f32 %v4347, %v4468
  %v4668 = vmul.f32 %v4348, %v4468
  %v4669 = vmul.f32 %v4349, %v4469
  %v4670 = vmul.f32 %v4350, %v4469
  %v4671 = vmul.f32 %v4351, %v4469
  %v4672 = vmul.f32 %v4352, %v4469
  %v4673 = vmul.f32 %v4353, %v4469
  %v4674 = vmul.f32 %v4354, %v4469
  %v4675 = vmul.f32 %v4355, %v4469
  %v4676 = vmul.f32 %v4356, %v4469
  %v4677 = vmul.f32 %v4357, %v4470
  %v4678 = vmul.f32 %v4358, %v4470
  %v4679 = vmul.f32 %v4359, %v4470
  %v4680 = vmul.f32 %v4360, %v4470
  %v4681 = vmul.f32 %v4361, %v4470
  %v4682 = vmul.f32 %v4362, %v4470
  %v4683 = vmul.f32 %v4363, %v4470
  %v4684 = vmul.f32 %v4364, %v4470
  %v4685 = vmul.f32 %v4365, %v4471
  %v4686 = vmul.f32 %v4366, %v4471
  %v4687 = vmul.f32 %v4367, %v4471
  %v4688 = vmul.f32 %v4368, %v4471
  %v4689 = vmul.f32 %v4369, %v4471
  %v4690 = vmul.f32 %v4370, %v4471
  %v4691 = vmul.f32 %v4371, %v4471
  %v4692 = vmul.f32 %v4372, %v4471
  %v4693 = vmul.f32 %v4373, %v4472
  %v4694 = vmul.f32 %v4374, %v4472
  %v4695 = vmul.f32 %v4375, %v4472
  %v4696 = vmul.f32 %v4376, %v4472
  %v4697 = vmul.f32 %v4377, %v4472
  %v4698 = vmul.f32 %v4378, %v4472
  %v4699 = vmul.f32 %v4379, %v4472
  %v4700 = vmul.f32 %v4380, %v4472
  %v4701 = vmul.f32 %v4381, %v4473
  %v4702 = vmul.f32 %v4382, %v4473
  %v4703 = vmul.f32 %v4383, %v4473
  %v4704 = vmul.f32 %v4384, %v4473
  %v4705 = vmul.f32 %v4385, %v4473
  %v4706 = vmul.f32 %v4386, %v4473
  %v4707 = vmul.f32 %v4387, %v4473
  %v4708 = vmul.f32 %v4388, %v4473
  %v4709 = vmul.f32 %v4389, %v4474
  %v4710 = vmul.f32 %v4390, %v4474
  %v4711 = vmul.f32 %v4391, %v4474
  %v4712 = vmul.f32 %v4392, %v4474
  %v4713 = vmul.f32 %v4393, %v4474
  %v4714 = vmul.f32 %v4394, %v4474
  %v4715 = vmul.f32 %v4395, %v4474
  %v4716 = vmul.f32 %v4396, %v4474
  %v4717 = vmul.f32 %v4397, %v4475
  %v4718 = vmul.f32 %v4398, %v4475
  %v4719 = vmul.f32 %v4399, %v4475
  %v4720 = vmul.f32 %v4400, %v4475
  %v4721 = vmul.f32 %v4401, %v4475
  %v4722 = vmul.f32 %v4402, %v4475
  %v4723 = vmul.f32 %v4403, %v4475
  %v4724 = vmul.f32 %v4404, %v4475
  %v4725 = vmul.f32 %v4405, %v4476
  %v4726 = vmul.f32 %v4406, %v4476
  %v4727 = vmul.f32 %v4407, %v4476
  %v4728 = vmul.f32 %v4408, %v4476
  %v4729 = vmul.f32 %v4409, %v4476
  %v4730 = vmul.f32 %v4410, %v4476
  %v4731 = vmul.f32 %v4411, %v4476
  %v4732 = vmul.f32 %v4412, %v4476
  %v4733 = vmax.f32 %v4477, 0.0
  %v4734 = vmax.f32 %v4478, 0.0
  %v4735 = vmax.f32 %v4479, 0.0
  %v4736 = vmax.f32 %v4480, 0.0
  %v4737 = vmax.f32 %v4481, 0.0
  %v4738 = vmax.f32 %v4482, 0.0
  %v4739 = vmax.f32 %v4483, 0.0
  %v4740 = vmax.f32 %v4484, 0.0
  %v4741 = vmax.f32 %v4485, 0.0
  %v4742 = vmax.f32 %v4486, 0.0
  %v4743 = vmax.f32 %v4487, 0.0
  %v4744 = vmax.f32 %v4488, 0.0
  %v4745 = vmax.f32 %v4489, 0.0
  %v4746 = vmax.f32 %v4490, 0.0
  %v4747 = vmax.f32 %v4491, 0.0
  %v4748 = vmax.f32 %v4492, 0.0
  %v4749 = vmax.f32 %v4493, 0.0
  %v4750 = vmax.f32 %v4494, 0.0
  %v4751 = vmax.f32 %v4495, 0.0
  %v4752 = vmax.f32 %v4496, 0.0
  %v4753 = vmax.f32 %v4497, 0.0
  %v4754 = vmax.f32 %v4498, 0.0
  %v4755 = vmax.f32 %v4499, 0.0
  %v4756 = vmax.f32 %v4500, 0.0
  %v4757 = vmax.f32 %v4501, 0.0
  %v4758 = vmax.f32 %v4502, 0.0
  %v4759 = vmax.f32 %v4503, 0.0
  %v4760 = vmax.f32 %v4504, 0.0
  %v4761 = vmax.f32 %v4505, 0.0
  %v4762 = vmax.f32 %v4506, 0.0
  %v4763 = vmax.f32 %v4507, 0.0
  %v4764 = vmax.f32 %v4508, 0.0
  %v4765 = vmax.f32 %v4509, 0.0
  %v4766 = vmax.f32 %v4510, 0.0
  %v4767 = vmax.f32 %v4511, 0.0
  %v4768 = vmax.f32 %v4512, 0.0
  %v4769 = vmax.f32 %v4513, 0.0
  %v4770 = vmax.f32 %v4514, 0.0
  %v4771 = vmax.f32 %v4515, 0.0
  %v4772 = vmax.f32 %v4516, 0.0
  %v4773 = vmax.f32 %v4517, 0.0
  %v4774 = vmax.f32 %v4518, 0.0
  %v4775 = vmax.f32 %v4519, 0.0
  %v4776 = vmax.f32 %v4520, 0.0
  %v4777 = vmax.f32 %v4521, 0.0
  %v4778 = vmax.f32 %v4522, 0.0
  %v4779 = vmax.f32 %v4523, 0.0
  %v4780 = vmax.f32 %v4524, 0.0
  %v4781 = vmax.f32 %v4525, 0.0
  %v4782 = vmax.f32 %v4526, 0.0
  %v4783 = vmax.f32 %v4527, 0.0
  %v4784 = vmax.f32 %v4528, 0.0
  %v4785 = vmax.f32 %v4529, 0.0
  %v4786 = vmax.f32 %v4530, 0.0
  %v4787 = vmax.f32 %v4531, 0.0
  %v4788 = vmax.f32 %v4532, 0.0
  %v4789 = vmax.f32 %v4533, 0.0
  %v4790 = vmax.f32 %v4534, 0.0
  %v4791 = vmax.f32 %v4535, 0.0
  %v4792 = vmax.f32 %v4536, 0.0
  %v4793 = vmax.f32 %v4537, 0.0
  %v4794 = vmax.f32 %v4538, 0.0
  %v4795 = vmax.f32 %v4539, 0.0
  %v4796 = vmax.f32 %v4540, 0.0
  %v4797 = vmax.f32 %v4541, 0.0
  %v4798 = vmax.f32 %v4542, 0.0
  %v4799 = vmax.f32 %v4543, 0.0
  %v4800 = vmax.f32 %v4544, 0.0
  %v4801 = vmax.f32 %v4545, 0.0
  %v4802 = vmax.f32 %v4546, 0.0
  %v4803 = vmax.f32 %v4547, 0.0
  %v4804 = vmax.f32 %v4548, 0.0
  %v4805 = vmax.f32 %v4549, 0.0
  %v4806 = vmax.f32 %v4550, 0.0
  %v4807 = vmax.f32 %v4551, 0.0
  %v4808 = vmax.f32 %v4552, 0.0
  %v4809 = vmax.f32 %v4553, 0.0
  %v4810 = vmax.f32 %v4554, 0.0
  %v4811 = vmax.f32 %v4555, 0.0
  %v4812 = vmax.f32 %v4556, 0.0
  %v4813 = vmax.f32 %v4557, 0.0
  %v4814 = vmax.f32 %v4558, 0.0
  %v4815 = vmax.f32 %v4559, 0.0
  %v4816 = vmax.f32 %v4560, 0.0
  %v4817 = vmax.f32 %v4561, 0.0
  %v4818 = vmax.f32 %v4562, 0.0
  %v4819 = vmax.f32 %v4563, 0.0
  %v4820 = vmax.f32 %v4564, 0.0
  %v4821 = vmax.f32 %v4565, 0.0
  %v4822 = vmax.f32 %v4566, 0.0
  %v4823 = vmax.f32 %v4567, 0.0
  %v4824 = vmax.f32 %v4568, 0.0
  %v4825 = vmax.f32 %v4569, 0.0
  %v4826 = vmax.f32 %v4570, 0.0
  %v4827 = vmax.f32 %v4571, 0.0
  %v4828 = vmax.f32 %v4572, 0.0
  %v4829 = vmax.f32 %v4573, 0.0
  %v4830 = vmax.f32 %v4574, 0.0
  %v4831 = vmax.f32 %v4575, 0.0
  %v4832 = vmax.f32 %v4576, 0.0
  %v4833 = vmax.f32 %v4577, 0.0
  %v4834 = vmax.f32 %v4578, 0.0
  %v4835 = vmax.f32 %v4579, 0.0
  %v4836 = vmax.f32 %v4580, 0.0
  %v4837 = vmax.f32 %v4581, 0.0
  %v4838 = vmax.f32 %v4582, 0.0
  %v4839 = vmax.f32 %v4583, 0.0
  %v4840 = vmax.f32 %v4584, 0.0
  %v4841 = vmax.f32 %v4585, 0.0
  %v4842 = vmax.f32 %v4586, 0.0
  %v4843 = vmax.f32 %v4587, 0.0
  %v4844 = vmax.f32 %v4588, 0.0
  %v4845 = vmax.f32 %v4589, 0.0
  %v4846 = vmax.f32 %v4590, 0.0
  %v4847 = vmax.f32 %v4591, 0.0
  %v4848 = vmax.f32 %v4592, 0.0
  %v4849 = vmax.f32 %v4593, 0.0
  %v4850 = vmax.f32 %v4594, 0.0
  %v4851 = vmax.f32 %v4595, 0.0
  %v4852 = vmax.f32 %v4596, 0.0
  %v4853 = vmax.f32 %v4597, 0.0
  %v4854 = vmax.f32 %v4598, 0.0
  %v4855 = vmax.f32 %v4599, 0.0
  %v4856 = vmax.f32 %v4600, 0.0
  %v4857 = vmax.f32 %v4601, 0.0
  %v4858 = vmax.f32 %v4602, 0.0
  %v4859 = vmax.f32 %v4603, 0.0
  %v4860 = vmax.f32 %v4604, 0.0
  %v4861 = vmax.f32 %v4605, 0.0
  %v4862 = vmax.f32 %v4606, 0.0
  %v4863 = vmax.f32 %v4607, 0.0
  %v4864 = vmax.f32 %v4608, 0.0
  %v4865 = vmax.f32 %v4609, 0.0
  %v4866 = vmax.f32 %v4610, 0.0
  %v4867 = vmax.f32 %v4611, 0.0
  %v4868 = vmax.f32 %v4612, 0.0
  %v4869 = vmax.f32 %v4613, 0.0
  %v4870 = vmax.f32 %v4614, 0.0
  %v4871 = vmax.f32 %v4615, 0.0
  %v4872 = vmax.f32 %v4616, 0.0
  %v4873 = vmax.f32 %v4617, 0.0
  %v4874 = vmax.f32 %v4618, 0.0
  %v4875 = vmax.f32 %v4619, 0.0
  %v4876 = vmax.f32 %v4620, 0.0
  %v4877 = vmax.f32 %v4621, 0.0
  %v4878 = vmax.f32 %v4622, 0.0
  %v4879 = vmax.f32 %v4623, 0.0
  %v4880 = vmax.f32 %v4624, 0.0
  %v4881 = vmax.f32 %v4625, 0.0
  %v4882 = vmax.f32 %v4626, 0.0
  %v4883 = vmax.f32 %v4627, 0.0
  %v4884 = vmax.f32 %v4628, 0.0
  %v4885 = vmax.f32 %v4629, 0.0
  %v4886 = vmax.f32 %v4630, 0.0
  %v4887 = vmax.f32 %v4631, 0.0
  %v4888 = vmax.f32 %v4632, 0.0
  %v4889 = vmax.f32 %v4633, 0.0
  %v4890 = vmax.f32 %v4634, 0.0
  %v4891 = vmax.f32 %v4635, 0.0
  %v4892 = vmax.f32 %v4636, 0.0
  %v4893 = vmax.f32 %v4637, 0.0
  %v4894 = vmax.f32 %v4638, 0.0
  %v4895 = vmax.f32 %v4639, 0.0
  %v4896 = vmax.f32 %v4640, 0.0
  %v4897 = vmax.f32 %v4641, 0.0
  %v4898 = vmax.f32 %v4642, 0.0
  %v4899 = vmax.f32 %v4643, 0.0
  %v4900 = vmax.f32 %v4644, 0.0
  %v4901 = vmax.f32 %v4645, 0.0
  %v4902 = vmax.f32 %v4646, 0.0
  %v4903 = vmax.f32 %v4647, 0.0
  %v4904 = vmax.f32 %v4648, 0.0
  %v4905 = vmax.f32 %v4649, 0.0
  %v4906 = vmax.f32 %v4650, 0.0
  %v4907 = vmax.f32 %v4651, 0.0
  %v4908 = vmax.f32 %v4652, 0.0
  %v4909 = vmax.f32 %v4653, 0.0
  %v4910 = vmax.f32 %v4654, 0.0
  %v4911 = vmax.f32 %v4655, 0.0
  %v4912 = vmax.f32 %v4656, 0.0
  %v4913 = vmax.f32 %v4657, 0.0
  %v4914 = vmax.f32 %v4658, 0.0
  %v4915 = vmax.f32 %v4659, 0.0
  %v4916 = vmax.f32 %v4660, 0.0
  %v4917 = vmax.f32 %v4661, 0.0
  %v4918 = vmax.f32 %v4662, 0.0
  %v4919 = vmax.f32 %v4663, 0.0
  %v4920 = vmax.f32 %v4664, 0.0
  %v4921 = vmax.f32 %v4665, 0.0
  %v4922 = vmax.f32 %v4666, 0.0
  %v4923 = vmax.f32 %v4667, 0.0
  %v4924 = vmax.f32 %v4668, 0.0
  %v4925 = vmax.f32 %v4669, 0.0
  %v4926 = vmax.f32 %v4670, 0.0
  %v4927 = vmax.f32 %v4671, 0.0
  %v4928 = vmax.f32 %v4672, 0.0
  %v4929 = vmax.f32 %v4673, 0.0
  %v4930 = vmax.f32 %v4674, 0.0
  %v4931 = vmax.f32 %v4675, 0.0
  %v4932 = vmax.f32 %v4676, 0.0
  %v4933 = vmax.f32 %v4677, 0.0
  %v4934 = vmax.f32 %v4678, 0.0
  %v4935 = vmax.f32 %v4679, 0.0
  %v4936 = vmax.f32 %v4680, 0.0
  %v4937 = vmax.f32 %v4681, 0.0
  %v4938 = vmax.f32 %v4682, 0.0
  %v4939 = vmax.f32 %v4683, 0.0
  %v4940 = vmax.f32 %v4684, 0.0
  %v4941 = vmax.f32 %v4685, 0.0
  %v4942 = vmax.f32 %v4686, 0.0
  %v4943 = vmax.f32 %v4687, 0.0
  %v4944 = vmax.f32 %v4688, 0.0
  %v4945 = vmax.f32 %v4689, 0.0
  %v4946 = vmax.f32 %v4690, 0.0
  %v4947 = vmax.f32 %v4691, 0.0
  %v4948 = vmax.f32 %v4692, 0.0
  %v4949 = vmax.f32 %v4693, 0.0
  %v4950 = vmax.f32 %v4694, 0.0
  %v4951 = vmax.f32 %v4695, 0.0
  %v4952 = vmax.f32 %v4696, 0.0
  %v4953 = vmax.f32 %v4697, 0.0
  %v4954 = vmax.f32 %v4698, 0.0
  %v4955 = vmax.f32 %v4699, 0.0
  %v4956 = vmax.f32 %v4700, 0.0
  %v4957 = vmax.f32 %v4701, 0.0
  %v4958 = vmax.f32 %v4702, 0.0
  %v4959 = vmax.f32 %v4703, 0.0
  %v4960 = vmax.f32 %v4704, 0.0
  %v4961 = vmax.f32 %v4705, 0.0
  %v4962 = vmax.f32 %v4706, 0.0
  %v4963 = vmax.f32 %v4707, 0.0
  %v4964 = vmax.f32 %v4708, 0.0
  %v4965 = vmax.f32 %v4709, 0.0
  %v4966 = vmax.f32 %v4710, 0.0
  %v4967 = vmax.f32 %v4711, 0.0
  %v4968 = vmax.f32 %v4712, 0.0
  %v4969 = vmax.f32 %v4713, 0.0
  %v4970 = vmax.f32 %v4714, 0.0
  %v4971 = vmax.f32 %v4715, 0.0
  %v4972 = vmax.f32 %v4716, 0.0
  %v4973 = vmax.f32 %v4717, 0.0
  %v4974 = vmax.f32 %v4718, 0.0
  %v4975 = vmax.f32 %v4719, 0.0
  %v4976 = vmax.f32 %v4720, 0.0
  %v4977 = vmax.f32 %v4721, 0.0
  %v4978 = vmax.f32 %v4722, 0.0
  %v4979 = vmax.f32 %v4723, 0.0
  %v4980 = vmax.f32 %v4724, 0.0
  %v4981 = vmax.f32 %v4725, 0.0
  %v4982 = vmax.f32 %v4726, 0.0
  %v4983 = vmax.f32 %v4727, 0.0
  %v4984 = vmax.f32 %v4728, 0.0
  %v4985 = vmax.f32 %v4729, 0.0
  %v4986 = vmax.f32 %v4730, 0.0
  %v4987 = vmax.f32 %v4731, 0.0
  %v4988 = vmax.f32 %v4732, 0.0
  %v4989 = vsel %vm2395, %v4733, 0.0
  %v4990 = vsel %vm2395, %v4734, 0.0
  %v4991 = vadd.f32 %v4989, %v4990
  %v4992 = vsel %vm2395, %v4735, 0.0
  %v4993 = vadd.f32 %v4991, %v4992
  %v4994 = vsel %vm2395, %v4736, 0.0
  %v4995 = vadd.f32 %v4993, %v4994
  %v4996 = vsel %vm2395, %v4737, 0.0
  %v4997 = vadd.f32 %v4995, %v4996
  %v4998 = vsel %vm2395, %v4738, 0.0
  %v4999 = vadd.f32 %v4997, %v4998
  %v5000 = vsel %vm2395, %v4739, 0.0
  %v5001 = vadd.f32 %v4999, %v5000
  %v5002 = vsel %vm2395, %v4740, 0.0
  %v5003 = vadd.f32 %v5001, %v5002
  %v5004 = vrot.slane %v5003, 4
  %v5005 = vadd.f32 %v5003, %v5004
  %v5006 = vrot.slane %v5005, 2
  %v5007 = vadd.f32 %v5005, %v5006
  %v5008 = vrot.slane %v5007, 1
  %v5009 = vadd.f32 %v5007, %v5008
  %v5010 = vsel %vm2395, %v4741, 0.0
  %v5011 = vsel %vm2395, %v4742, 0.0
  %v5012 = vadd.f32 %v5010, %v5011
  %v5013 = vsel %vm2395, %v4743, 0.0
  %v5014 = vadd.f32 %v5012, %v5013
  %v5015 = vsel %vm2395, %v4744, 0.0
  %v5016 = vadd.f32 %v5014, %v5015
  %v5017 = vsel %vm2395, %v4745, 0.0
  %v5018 = vadd.f32 %v5016, %v5017
  %v5019 = vsel %vm2395, %v4746, 0.0
  %v5020 = vadd.f32 %v5018, %v5019
  %v5021 = vsel %vm2395, %v4747, 0.0
  %v5022 = vadd.f32 %v5020, %v5021
  %v5023 = vsel %vm2395, %v4748, 0.0
  %v5024 = vadd.f32 %v5022, %v5023
  %v5025 = vrot.slane %v5024, 4
  %v5026 = vadd.f32 %v5024, %v5025
  %v5027 = vrot.slane %v5026, 2
  %v5028 = vadd.f32 %v5026, %v5027
  %v5029 = vrot.slane %v5028, 1
  %v5030 = vadd.f32 %v5028, %v5029
  %v5031 = vsel %vm2395, %v4749, 0.0
  %v5032 = vsel %vm2395, %v4750, 0.0
  %v5033 = vadd.f32 %v5031, %v5032
  %v5034 = vsel %vm2395, %v4751, 0.0
  %v5035 = vadd.f32 %v5033, %v5034
  %v5036 = vsel %vm2395, %v4752, 0.0
  %v5037 = vadd.f32 %v5035, %v5036
  %v5038 = vsel %vm2395, %v4753, 0.0
  %v5039 = vadd.f32 %v5037, %v5038
  %v5040 = vsel %vm2395, %v4754, 0.0
  %v5041 = vadd.f32 %v5039, %v5040
  %v5042 = vsel %vm2395, %v4755, 0.0
  %v5043 = vadd.f32 %v5041, %v5042
  %v5044 = vsel %vm2395, %v4756, 0.0
  %v5045 = vadd.f32 %v5043, %v5044
  %v5046 = vrot.slane %v5045, 4
  %v5047 = vadd.f32 %v5045, %v5046
  %v5048 = vrot.slane %v5047, 2
  %v5049 = vadd.f32 %v5047, %v5048
  %v5050 = vrot.slane %v5049, 1
  %v5051 = vadd.f32 %v5049, %v5050
  %v5052 = vsel %vm2395, %v4757, 0.0
  %v5053 = vsel %vm2395, %v4758, 0.0
  %v5054 = vadd.f32 %v5052, %v5053
  %v5055 = vsel %vm2395, %v4759, 0.0
  %v5056 = vadd.f32 %v5054, %v5055
  %v5057 = vsel %vm2395, %v4760, 0.0
  %v5058 = vadd.f32 %v5056, %v5057
  %v5059 = vsel %vm2395, %v4761, 0.0
  %v5060 = vadd.f32 %v5058, %v5059
  %v5061 = vsel %vm2395, %v4762, 0.0
  %v5062 = vadd.f32 %v5060, %v5061
  %v5063 = vsel %vm2395, %v4763, 0.0
  %v5064 = vadd.f32 %v5062, %v5063
  %v5065 = vsel %vm2395, %v4764, 0.0
  %v5066 = vadd.f32 %v5064, %v5065
  %v5067 = vrot.slane %v5066, 4
  %v5068 = vadd.f32 %v5066, %v5067
  %v5069 = vrot.slane %v5068, 2
  %v5070 = vadd.f32 %v5068, %v5069
  %v5071 = vrot.slane %v5070, 1
  %v5072 = vadd.f32 %v5070, %v5071
  %v5073 = vsel %vm2395, %v4765, 0.0
  %v5074 = vsel %vm2395, %v4766, 0.0
  %v5075 = vadd.f32 %v5073, %v5074
  %v5076 = vsel %vm2395, %v4767, 0.0
  %v5077 = vadd.f32 %v5075, %v5076
  %v5078 = vsel %vm2395, %v4768, 0.0
  %v5079 = vadd.f32 %v5077, %v5078
  %v5080 = vsel %vm2395, %v4769, 0.0
  %v5081 = vadd.f32 %v5079, %v5080
  %v5082 = vsel %vm2395, %v4770, 0.0
  %v5083 = vadd.f32 %v5081, %v5082
  %v5084 = vsel %vm2395, %v4771, 0.0
  %v5085 = vadd.f32 %v5083, %v5084
  %v5086 = vsel %vm2395, %v4772, 0.0
  %v5087 = vadd.f32 %v5085, %v5086
  %v5088 = vrot.slane %v5087, 4
  %v5089 = vadd.f32 %v5087, %v5088
  %v5090 = vrot.slane %v5089, 2
  %v5091 = vadd.f32 %v5089, %v5090
  %v5092 = vrot.slane %v5091, 1
  %v5093 = vadd.f32 %v5091, %v5092
  %v5094 = vsel %vm2395, %v4773, 0.0
  %v5095 = vsel %vm2395, %v4774, 0.0
  %v5096 = vadd.f32 %v5094, %v5095
  %v5097 = vsel %vm2395, %v4775, 0.0
  %v5098 = vadd.f32 %v5096, %v5097
  %v5099 = vsel %vm2395, %v4776, 0.0
  %v5100 = vadd.f32 %v5098, %v5099
  %v5101 = vsel %vm2395, %v4777, 0.0
  %v5102 = vadd.f32 %v5100, %v5101
  %v5103 = vsel %vm2395, %v4778, 0.0
  %v5104 = vadd.f32 %v5102, %v5103
  %v5105 = vsel %vm2395, %v4779, 0.0
  %v5106 = vadd.f32 %v5104, %v5105
  %v5107 = vsel %vm2395, %v4780, 0.0
  %v5108 = vadd.f32 %v5106, %v5107
  %v5109 = vrot.slane %v5108, 4
  %v5110 = vadd.f32 %v5108, %v5109
  %v5111 = vrot.slane %v5110, 2
  %v5112 = vadd.f32 %v5110, %v5111
  %v5113 = vrot.slane %v5112, 1
  %v5114 = vadd.f32 %v5112, %v5113
  %v5115 = vsel %vm2395, %v4781, 0.0
  %v5116 = vsel %vm2395, %v4782, 0.0
  %v5117 = vadd.f32 %v5115, %v5116
  %v5118 = vsel %vm2395, %v4783, 0.0
  %v5119 = vadd.f32 %v5117, %v5118
  %v5120 = vsel %vm2395, %v4784, 0.0
  %v5121 = vadd.f32 %v5119, %v5120
  %v5122 = vsel %vm2395, %v4785, 0.0
  %v5123 = vadd.f32 %v5121, %v5122
  %v5124 = vsel %vm2395, %v4786, 0.0
  %v5125 = vadd.f32 %v5123, %v5124
  %v5126 = vsel %vm2395, %v4787, 0.0
  %v5127 = vadd.f32 %v5125, %v5126
  %v5128 = vsel %vm2395, %v4788, 0.0
  %v5129 = vadd.f32 %v5127, %v5128
  %v5130 = vrot.slane %v5129, 4
  %v5131 = vadd.f32 %v5129, %v5130
  %v5132 = vrot.slane %v5131, 2
  %v5133 = vadd.f32 %v5131, %v5132
  %v5134 = vrot.slane %v5133, 1
  %v5135 = vadd.f32 %v5133, %v5134
  %v5136 = vsel %vm2395, %v4789, 0.0
  %v5137 = vsel %vm2395, %v4790, 0.0
  %v5138 = vadd.f32 %v5136, %v5137
  %v5139 = vsel %vm2395, %v4791, 0.0
  %v5140 = vadd.f32 %v5138, %v5139
  %v5141 = vsel %vm2395, %v4792, 0.0
  %v5142 = vadd.f32 %v5140, %v5141
  %v5143 = vsel %vm2395, %v4793, 0.0
  %v5144 = vadd.f32 %v5142, %v5143
  %v5145 = vsel %vm2395, %v4794, 0.0
  %v5146 = vadd.f32 %v5144, %v5145
  %v5147 = vsel %vm2395, %v4795, 0.0
  %v5148 = vadd.f32 %v5146, %v5147
  %v5149 = vsel %vm2395, %v4796, 0.0
  %v5150 = vadd.f32 %v5148, %v5149
  %v5151 = vrot.slane %v5150, 4
  %v5152 = vadd.f32 %v5150, %v5151
  %v5153 = vrot.slane %v5152, 2
  %v5154 = vadd.f32 %v5152, %v5153
  %v5155 = vrot.slane %v5154, 1
  %v5156 = vadd.f32 %v5154, %v5155
  %v5157 = vsel %vm2395, %v4797, 0.0
  %v5158 = vsel %vm2395, %v4798, 0.0
  %v5159 = vadd.f32 %v5157, %v5158
  %v5160 = vsel %vm2395, %v4799, 0.0
  %v5161 = vadd.f32 %v5159, %v5160
  %v5162 = vsel %vm2395, %v4800, 0.0
  %v5163 = vadd.f32 %v5161, %v5162
  %v5164 = vsel %vm2395, %v4801, 0.0
  %v5165 = vadd.f32 %v5163, %v5164
  %v5166 = vsel %vm2395, %v4802, 0.0
  %v5167 = vadd.f32 %v5165, %v5166
  %v5168 = vsel %vm2395, %v4803, 0.0
  %v5169 = vadd.f32 %v5167, %v5168
  %v5170 = vsel %vm2395, %v4804, 0.0
  %v5171 = vadd.f32 %v5169, %v5170
  %v5172 = vrot.slane %v5171, 4
  %v5173 = vadd.f32 %v5171, %v5172
  %v5174 = vrot.slane %v5173, 2
  %v5175 = vadd.f32 %v5173, %v5174
  %v5176 = vrot.slane %v5175, 1
  %v5177 = vadd.f32 %v5175, %v5176
  %v5178 = vsel %vm2395, %v4805, 0.0
  %v5179 = vsel %vm2395, %v4806, 0.0
  %v5180 = vadd.f32 %v5178, %v5179
  %v5181 = vsel %vm2395, %v4807, 0.0
  %v5182 = vadd.f32 %v5180, %v5181
  %v5183 = vsel %vm2395, %v4808, 0.0
  %v5184 = vadd.f32 %v5182, %v5183
  %v5185 = vsel %vm2395, %v4809, 0.0
  %v5186 = vadd.f32 %v5184, %v5185
  %v5187 = vsel %vm2395, %v4810, 0.0
  %v5188 = vadd.f32 %v5186, %v5187
  %v5189 = vsel %vm2395, %v4811, 0.0
  %v5190 = vadd.f32 %v5188, %v5189
  %v5191 = vsel %vm2395, %v4812, 0.0
  %v5192 = vadd.f32 %v5190, %v5191
  %v5193 = vrot.slane %v5192, 4
  %v5194 = vadd.f32 %v5192, %v5193
  %v5195 = vrot.slane %v5194, 2
  %v5196 = vadd.f32 %v5194, %v5195
  %v5197 = vrot.slane %v5196, 1
  %v5198 = vadd.f32 %v5196, %v5197
  %v5199 = vsel %vm2395, %v4813, 0.0
  %v5200 = vsel %vm2395, %v4814, 0.0
  %v5201 = vadd.f32 %v5199, %v5200
  %v5202 = vsel %vm2395, %v4815, 0.0
  %v5203 = vadd.f32 %v5201, %v5202
  %v5204 = vsel %vm2395, %v4816, 0.0
  %v5205 = vadd.f32 %v5203, %v5204
  %v5206 = vsel %vm2395, %v4817, 0.0
  %v5207 = vadd.f32 %v5205, %v5206
  %v5208 = vsel %vm2395, %v4818, 0.0
  %v5209 = vadd.f32 %v5207, %v5208
  %v5210 = vsel %vm2395, %v4819, 0.0
  %v5211 = vadd.f32 %v5209, %v5210
  %v5212 = vsel %vm2395, %v4820, 0.0
  %v5213 = vadd.f32 %v5211, %v5212
  %v5214 = vrot.slane %v5213, 4
  %v5215 = vadd.f32 %v5213, %v5214
  %v5216 = vrot.slane %v5215, 2
  %v5217 = vadd.f32 %v5215, %v5216
  %v5218 = vrot.slane %v5217, 1
  %v5219 = vadd.f32 %v5217, %v5218
  %v5220 = vsel %vm2395, %v4821, 0.0
  %v5221 = vsel %vm2395, %v4822, 0.0
  %v5222 = vadd.f32 %v5220, %v5221
  %v5223 = vsel %vm2395, %v4823, 0.0
  %v5224 = vadd.f32 %v5222, %v5223
  %v5225 = vsel %vm2395, %v4824, 0.0
  %v5226 = vadd.f32 %v5224, %v5225
  %v5227 = vsel %vm2395, %v4825, 0.0
  %v5228 = vadd.f32 %v5226, %v5227
  %v5229 = vsel %vm2395, %v4826, 0.0
  %v5230 = vadd.f32 %v5228, %v5229
  %v5231 = vsel %vm2395, %v4827, 0.0
  %v5232 = vadd.f32 %v5230, %v5231
  %v5233 = vsel %vm2395, %v4828, 0.0
  %v5234 = vadd.f32 %v5232, %v5233
  %v5235 = vrot.slane %v5234, 4
  %v5236 = vadd.f32 %v5234, %v5235
  %v5237 = vrot.slane %v5236, 2
  %v5238 = vadd.f32 %v5236, %v5237
  %v5239 = vrot.slane %v5238, 1
  %v5240 = vadd.f32 %v5238, %v5239
  %v5241 = vsel %vm2395, %v4829, 0.0
  %v5242 = vsel %vm2395, %v4830, 0.0
  %v5243 = vadd.f32 %v5241, %v5242
  %v5244 = vsel %vm2395, %v4831, 0.0
  %v5245 = vadd.f32 %v5243, %v5244
  %v5246 = vsel %vm2395, %v4832, 0.0
  %v5247 = vadd.f32 %v5245, %v5246
  %v5248 = vsel %vm2395, %v4833, 0.0
  %v5249 = vadd.f32 %v5247, %v5248
  %v5250 = vsel %vm2395, %v4834, 0.0
  %v5251 = vadd.f32 %v5249, %v5250
  %v5252 = vsel %vm2395, %v4835, 0.0
  %v5253 = vadd.f32 %v5251, %v5252
  %v5254 = vsel %vm2395, %v4836, 0.0
  %v5255 = vadd.f32 %v5253, %v5254
  %v5256 = vrot.slane %v5255, 4
  %v5257 = vadd.f32 %v5255, %v5256
  %v5258 = vrot.slane %v5257, 2
  %v5259 = vadd.f32 %v5257, %v5258
  %v5260 = vrot.slane %v5259, 1
  %v5261 = vadd.f32 %v5259, %v5260
  %v5262 = vsel %vm2395, %v4837, 0.0
  %v5263 = vsel %vm2395, %v4838, 0.0
  %v5264 = vadd.f32 %v5262, %v5263
  %v5265 = vsel %vm2395, %v4839, 0.0
  %v5266 = vadd.f32 %v5264, %v5265
  %v5267 = vsel %vm2395, %v4840, 0.0
  %v5268 = vadd.f32 %v5266, %v5267
  %v5269 = vsel %vm2395, %v4841, 0.0
  %v5270 = vadd.f32 %v5268, %v5269
  %v5271 = vsel %vm2395, %v4842, 0.0
  %v5272 = vadd.f32 %v5270, %v5271
  %v5273 = vsel %vm2395, %v4843, 0.0
  %v5274 = vadd.f32 %v5272, %v5273
  %v5275 = vsel %vm2395, %v4844, 0.0
  %v5276 = vadd.f32 %v5274, %v5275
  %v5277 = vrot.slane %v5276, 4
  %v5278 = vadd.f32 %v5276, %v5277
  %v5279 = vrot.slane %v5278, 2
  %v5280 = vadd.f32 %v5278, %v5279
  %v5281 = vrot.slane %v5280, 1
  %v5282 = vadd.f32 %v5280, %v5281
  %v5283 = vsel %vm2395, %v4845, 0.0
  %v5284 = vsel %vm2395, %v4846, 0.0
  %v5285 = vadd.f32 %v5283, %v5284
  %v5286 = vsel %vm2395, %v4847, 0.0
  %v5287 = vadd.f32 %v5285, %v5286
  %v5288 = vsel %vm2395, %v4848, 0.0
  %v5289 = vadd.f32 %v5287, %v5288
  %v5290 = vsel %vm2395, %v4849, 0.0
  %v5291 = vadd.f32 %v5289, %v5290
  %v5292 = vsel %vm2395, %v4850, 0.0
  %v5293 = vadd.f32 %v5291, %v5292
  %v5294 = vsel %vm2395, %v4851, 0.0
  %v5295 = vadd.f32 %v5293, %v5294
  %v5296 = vsel %vm2395, %v4852, 0.0
  %v5297 = vadd.f32 %v5295, %v5296
  %v5298 = vrot.slane %v5297, 4
  %v5299 = vadd.f32 %v5297, %v5298
  %v5300 = vrot.slane %v5299, 2
  %v5301 = vadd.f32 %v5299, %v5300
  %v5302 = vrot.slane %v5301, 1
  %v5303 = vadd.f32 %v5301, %v5302
  %v5304 = vsel %vm2395, %v4853, 0.0
  %v5305 = vsel %vm2395, %v4854, 0.0
  %v5306 = vadd.f32 %v5304, %v5305
  %v5307 = vsel %vm2395, %v4855, 0.0
  %v5308 = vadd.f32 %v5306, %v5307
  %v5309 = vsel %vm2395, %v4856, 0.0
  %v5310 = vadd.f32 %v5308, %v5309
  %v5311 = vsel %vm2395, %v4857, 0.0
  %v5312 = vadd.f32 %v5310, %v5311
  %v5313 = vsel %vm2395, %v4858, 0.0
  %v5314 = vadd.f32 %v5312, %v5313
  %v5315 = vsel %vm2395, %v4859, 0.0
  %v5316 = vadd.f32 %v5314, %v5315
  %v5317 = vsel %vm2395, %v4860, 0.0
  %v5318 = vadd.f32 %v5316, %v5317
  %v5319 = vrot.slane %v5318, 4
  %v5320 = vadd.f32 %v5318, %v5319
  %v5321 = vrot.slane %v5320, 2
  %v5322 = vadd.f32 %v5320, %v5321
  %v5323 = vrot.slane %v5322, 1
  %v5324 = vadd.f32 %v5322, %v5323
  %v5325 = vsel %vm2395, %v4861, 0.0
  %v5326 = vsel %vm2395, %v4862, 0.0
  %v5327 = vadd.f32 %v5325, %v5326
  %v5328 = vsel %vm2395, %v4863, 0.0
  %v5329 = vadd.f32 %v5327, %v5328
  %v5330 = vsel %vm2395, %v4864, 0.0
  %v5331 = vadd.f32 %v5329, %v5330
  %v5332 = vsel %vm2395, %v4865, 0.0
  %v5333 = vadd.f32 %v5331, %v5332
  %v5334 = vsel %vm2395, %v4866, 0.0
  %v5335 = vadd.f32 %v5333, %v5334
  %v5336 = vsel %vm2395, %v4867, 0.0
  %v5337 = vadd.f32 %v5335, %v5336
  %v5338 = vsel %vm2395, %v4868, 0.0
  %v5339 = vadd.f32 %v5337, %v5338
  %v5340 = vrot.slane %v5339, 4
  %v5341 = vadd.f32 %v5339, %v5340
  %v5342 = vrot.slane %v5341, 2
  %v5343 = vadd.f32 %v5341, %v5342
  %v5344 = vrot.slane %v5343, 1
  %v5345 = vadd.f32 %v5343, %v5344
  %v5346 = vsel %vm2395, %v4869, 0.0
  %v5347 = vsel %vm2395, %v4870, 0.0
  %v5348 = vadd.f32 %v5346, %v5347
  %v5349 = vsel %vm2395, %v4871, 0.0
  %v5350 = vadd.f32 %v5348, %v5349
  %v5351 = vsel %vm2395, %v4872, 0.0
  %v5352 = vadd.f32 %v5350, %v5351
  %v5353 = vsel %vm2395, %v4873, 0.0
  %v5354 = vadd.f32 %v5352, %v5353
  %v5355 = vsel %vm2395, %v4874, 0.0
  %v5356 = vadd.f32 %v5354, %v5355
  %v5357 = vsel %vm2395, %v4875, 0.0
  %v5358 = vadd.f32 %v5356, %v5357
  %v5359 = vsel %vm2395, %v4876, 0.0
  %v5360 = vadd.f32 %v5358, %v5359
  %v5361 = vrot.slane %v5360, 4
  %v5362 = vadd.f32 %v5360, %v5361
  %v5363 = vrot.slane %v5362, 2
  %v5364 = vadd.f32 %v5362, %v5363
  %v5365 = vrot.slane %v5364, 1
  %v5366 = vadd.f32 %v5364, %v5365
  %v5367 = vsel %vm2395, %v4877, 0.0
  %v5368 = vsel %vm2395, %v4878, 0.0
  %v5369 = vadd.f32 %v5367, %v5368
  %v5370 = vsel %vm2395, %v4879, 0.0
  %v5371 = vadd.f32 %v5369, %v5370
  %v5372 = vsel %vm2395, %v4880, 0.0
  %v5373 = vadd.f32 %v5371, %v5372
  %v5374 = vsel %vm2395, %v4881, 0.0
  %v5375 = vadd.f32 %v5373, %v5374
  %v5376 = vsel %vm2395, %v4882, 0.0
  %v5377 = vadd.f32 %v5375, %v5376
  %v5378 = vsel %vm2395, %v4883, 0.0
  %v5379 = vadd.f32 %v5377, %v5378
  %v5380 = vsel %vm2395, %v4884, 0.0
  %v5381 = vadd.f32 %v5379, %v5380
  %v5382 = vrot.slane %v5381, 4
  %v5383 = vadd.f32 %v5381, %v5382
  %v5384 = vrot.slane %v5383, 2
  %v5385 = vadd.f32 %v5383, %v5384
  %v5386 = vrot.slane %v5385, 1
  %v5387 = vadd.f32 %v5385, %v5386
  %v5388 = vsel %vm2395, %v4885, 0.0
  %v5389 = vsel %vm2395, %v4886, 0.0
  %v5390 = vadd.f32 %v5388, %v5389
  %v5391 = vsel %vm2395, %v4887, 0.0
  %v5392 = vadd.f32 %v5390, %v5391
  %v5393 = vsel %vm2395, %v4888, 0.0
  %v5394 = vadd.f32 %v5392, %v5393
  %v5395 = vsel %vm2395, %v4889, 0.0
  %v5396 = vadd.f32 %v5394, %v5395
  %v5397 = vsel %vm2395, %v4890, 0.0
  %v5398 = vadd.f32 %v5396, %v5397
  %v5399 = vsel %vm2395, %v4891, 0.0
  %v5400 = vadd.f32 %v5398, %v5399
  %v5401 = vsel %vm2395, %v4892, 0.0
  %v5402 = vadd.f32 %v5400, %v5401
  %v5403 = vrot.slane %v5402, 4
  %v5404 = vadd.f32 %v5402, %v5403
  %v5405 = vrot.slane %v5404, 2
  %v5406 = vadd.f32 %v5404, %v5405
  %v5407 = vrot.slane %v5406, 1
  %v5408 = vadd.f32 %v5406, %v5407
  %v5409 = vsel %vm2395, %v4893, 0.0
  %v5410 = vsel %vm2395, %v4894, 0.0
  %v5411 = vadd.f32 %v5409, %v5410
  %v5412 = vsel %vm2395, %v4895, 0.0
  %v5413 = vadd.f32 %v5411, %v5412
  %v5414 = vsel %vm2395, %v4896, 0.0
  %v5415 = vadd.f32 %v5413, %v5414
  %v5416 = vsel %vm2395, %v4897, 0.0
  %v5417 = vadd.f32 %v5415, %v5416
  %v5418 = vsel %vm2395, %v4898, 0.0
  %v5419 = vadd.f32 %v5417, %v5418
  %v5420 = vsel %vm2395, %v4899, 0.0
  %v5421 = vadd.f32 %v5419, %v5420
  %v5422 = vsel %vm2395, %v4900, 0.0
  %v5423 = vadd.f32 %v5421, %v5422
  %v5424 = vrot.slane %v5423, 4
  %v5425 = vadd.f32 %v5423, %v5424
  %v5426 = vrot.slane %v5425, 2
  %v5427 = vadd.f32 %v5425, %v5426
  %v5428 = vrot.slane %v5427, 1
  %v5429 = vadd.f32 %v5427, %v5428
  %v5430 = vsel %vm2395, %v4901, 0.0
  %v5431 = vsel %vm2395, %v4902, 0.0
  %v5432 = vadd.f32 %v5430, %v5431
  %v5433 = vsel %vm2395, %v4903, 0.0
  %v5434 = vadd.f32 %v5432, %v5433
  %v5435 = vsel %vm2395, %v4904, 0.0
  %v5436 = vadd.f32 %v5434, %v5435
  %v5437 = vsel %vm2395, %v4905, 0.0
  %v5438 = vadd.f32 %v5436, %v5437
  %v5439 = vsel %vm2395, %v4906, 0.0
  %v5440 = vadd.f32 %v5438, %v5439
  %v5441 = vsel %vm2395, %v4907, 0.0
  %v5442 = vadd.f32 %v5440, %v5441
  %v5443 = vsel %vm2395, %v4908, 0.0
  %v5444 = vadd.f32 %v5442, %v5443
  %v5445 = vrot.slane %v5444, 4
  %v5446 = vadd.f32 %v5444, %v5445
  %v5447 = vrot.slane %v5446, 2
  %v5448 = vadd.f32 %v5446, %v5447
  %v5449 = vrot.slane %v5448, 1
  %v5450 = vadd.f32 %v5448, %v5449
  %v5451 = vsel %vm2395, %v4909, 0.0
  %v5452 = vsel %vm2395, %v4910, 0.0
  %v5453 = vadd.f32 %v5451, %v5452
  %v5454 = vsel %vm2395, %v4911, 0.0
  %v5455 = vadd.f32 %v5453, %v5454
  %v5456 = vsel %vm2395, %v4912, 0.0
  %v5457 = vadd.f32 %v5455, %v5456
  %v5458 = vsel %vm2395, %v4913, 0.0
  %v5459 = vadd.f32 %v5457, %v5458
  %v5460 = vsel %vm2395, %v4914, 0.0
  %v5461 = vadd.f32 %v5459, %v5460
  %v5462 = vsel %vm2395, %v4915, 0.0
  %v5463 = vadd.f32 %v5461, %v5462
  %v5464 = vsel %vm2395, %v4916, 0.0
  %v5465 = vadd.f32 %v5463, %v5464
  %v5466 = vrot.slane %v5465, 4
  %v5467 = vadd.f32 %v5465, %v5466
  %v5468 = vrot.slane %v5467, 2
  %v5469 = vadd.f32 %v5467, %v5468
  %v5470 = vrot.slane %v5469, 1
  %v5471 = vadd.f32 %v5469, %v5470
  %v5472 = vsel %vm2395, %v4917, 0.0
  %v5473 = vsel %vm2395, %v4918, 0.0
  %v5474 = vadd.f32 %v5472, %v5473
  %v5475 = vsel %vm2395, %v4919, 0.0
  %v5476 = vadd.f32 %v5474, %v5475
  %v5477 = vsel %vm2395, %v4920, 0.0
  %v5478 = vadd.f32 %v5476, %v5477
  %v5479 = vsel %vm2395, %v4921, 0.0
  %v5480 = vadd.f32 %v5478, %v5479
  %v5481 = vsel %vm2395, %v4922, 0.0
  %v5482 = vadd.f32 %v5480, %v5481
  %v5483 = vsel %vm2395, %v4923, 0.0
  %v5484 = vadd.f32 %v5482, %v5483
  %v5485 = vsel %vm2395, %v4924, 0.0
  %v5486 = vadd.f32 %v5484, %v5485
  %v5487 = vrot.slane %v5486, 4
  %v5488 = vadd.f32 %v5486, %v5487
  %v5489 = vrot.slane %v5488, 2
  %v5490 = vadd.f32 %v5488, %v5489
  %v5491 = vrot.slane %v5490, 1
  %v5492 = vadd.f32 %v5490, %v5491
  %v5493 = vsel %vm2395, %v4925, 0.0
  %v5494 = vsel %vm2395, %v4926, 0.0
  %v5495 = vadd.f32 %v5493, %v5494
  %v5496 = vsel %vm2395, %v4927, 0.0
  %v5497 = vadd.f32 %v5495, %v5496
  %v5498 = vsel %vm2395, %v4928, 0.0
  %v5499 = vadd.f32 %v5497, %v5498
  %v5500 = vsel %vm2395, %v4929, 0.0
  %v5501 = vadd.f32 %v5499, %v5500
  %v5502 = vsel %vm2395, %v4930, 0.0
  %v5503 = vadd.f32 %v5501, %v5502
  %v5504 = vsel %vm2395, %v4931, 0.0
  %v5505 = vadd.f32 %v5503, %v5504
  %v5506 = vsel %vm2395, %v4932, 0.0
  %v5507 = vadd.f32 %v5505, %v5506
  %v5508 = vrot.slane %v5507, 4
  %v5509 = vadd.f32 %v5507, %v5508
  %v5510 = vrot.slane %v5509, 2
  %v5511 = vadd.f32 %v5509, %v5510
  %v5512 = vrot.slane %v5511, 1
  %v5513 = vadd.f32 %v5511, %v5512
  %v5514 = vsel %vm2395, %v4933, 0.0
  %v5515 = vsel %vm2395, %v4934, 0.0
  %v5516 = vadd.f32 %v5514, %v5515
  %v5517 = vsel %vm2395, %v4935, 0.0
  %v5518 = vadd.f32 %v5516, %v5517
  %v5519 = vsel %vm2395, %v4936, 0.0
  %v5520 = vadd.f32 %v5518, %v5519
  %v5521 = vsel %vm2395, %v4937, 0.0
  %v5522 = vadd.f32 %v5520, %v5521
  %v5523 = vsel %vm2395, %v4938, 0.0
  %v5524 = vadd.f32 %v5522, %v5523
  %v5525 = vsel %vm2395, %v4939, 0.0
  %v5526 = vadd.f32 %v5524, %v5525
  %v5527 = vsel %vm2395, %v4940, 0.0
  %v5528 = vadd.f32 %v5526, %v5527
  %v5529 = vrot.slane %v5528, 4
  %v5530 = vadd.f32 %v5528, %v5529
  %v5531 = vrot.slane %v5530, 2
  %v5532 = vadd.f32 %v5530, %v5531
  %v5533 = vrot.slane %v5532, 1
  %v5534 = vadd.f32 %v5532, %v5533
  %v5535 = vsel %vm2395, %v4941, 0.0
  %v5536 = vsel %vm2395, %v4942, 0.0
  %v5537 = vadd.f32 %v5535, %v5536
  %v5538 = vsel %vm2395, %v4943, 0.0
  %v5539 = vadd.f32 %v5537, %v5538
  %v5540 = vsel %vm2395, %v4944, 0.0
  %v5541 = vadd.f32 %v5539, %v5540
  %v5542 = vsel %vm2395, %v4945, 0.0
  %v5543 = vadd.f32 %v5541, %v5542
  %v5544 = vsel %vm2395, %v4946, 0.0
  %v5545 = vadd.f32 %v5543, %v5544
  %v5546 = vsel %vm2395, %v4947, 0.0
  %v5547 = vadd.f32 %v5545, %v5546
  %v5548 = vsel %vm2395, %v4948, 0.0
  %v5549 = vadd.f32 %v5547, %v5548
  %v5550 = vrot.slane %v5549, 4
  %v5551 = vadd.f32 %v5549, %v5550
  %v5552 = vrot.slane %v5551, 2
  %v5553 = vadd.f32 %v5551, %v5552
  %v5554 = vrot.slane %v5553, 1
  %v5555 = vadd.f32 %v5553, %v5554
  %v5556 = vsel %vm2395, %v4949, 0.0
  %v5557 = vsel %vm2395, %v4950, 0.0
  %v5558 = vadd.f32 %v5556, %v5557
  %v5559 = vsel %vm2395, %v4951, 0.0
  %v5560 = vadd.f32 %v5558, %v5559
  %v5561 = vsel %vm2395, %v4952, 0.0
  %v5562 = vadd.f32 %v5560, %v5561
  %v5563 = vsel %vm2395, %v4953, 0.0
  %v5564 = vadd.f32 %v5562, %v5563
  %v5565 = vsel %vm2395, %v4954, 0.0
  %v5566 = vadd.f32 %v5564, %v5565
  %v5567 = vsel %vm2395, %v4955, 0.0
  %v5568 = vadd.f32 %v5566, %v5567
  %v5569 = vsel %vm2395, %v4956, 0.0
  %v5570 = vadd.f32 %v5568, %v5569
  %v5571 = vrot.slane %v5570, 4
  %v5572 = vadd.f32 %v5570, %v5571
  %v5573 = vrot.slane %v5572, 2
  %v5574 = vadd.f32 %v5572, %v5573
  %v5575 = vrot.slane %v5574, 1
  %v5576 = vadd.f32 %v5574, %v5575
  %v5577 = vsel %vm2395, %v4957, 0.0
  %v5578 = vsel %vm2395, %v4958, 0.0
  %v5579 = vadd.f32 %v5577, %v5578
  %v5580 = vsel %vm2395, %v4959, 0.0
  %v5581 = vadd.f32 %v5579, %v5580
  %v5582 = vsel %vm2395, %v4960, 0.0
  %v5583 = vadd.f32 %v5581, %v5582
  %v5584 = vsel %vm2395, %v4961, 0.0
  %v5585 = vadd.f32 %v5583, %v5584
  %v5586 = vsel %vm2395, %v4962, 0.0
  %v5587 = vadd.f32 %v5585, %v5586
  %v5588 = vsel %vm2395, %v4963, 0.0
  %v5589 = vadd.f32 %v5587, %v5588
  %v5590 = vsel %vm2395, %v4964, 0.0
  %v5591 = vadd.f32 %v5589, %v5590
  %v5592 = vrot.slane %v5591, 4
  %v5593 = vadd.f32 %v5591, %v5592
  %v5594 = vrot.slane %v5593, 2
  %v5595 = vadd.f32 %v5593, %v5594
  %v5596 = vrot.slane %v5595, 1
  %v5597 = vadd.f32 %v5595, %v5596
  %v5598 = vsel %vm2395, %v4965, 0.0
  %v5599 = vsel %vm2395, %v4966, 0.0
  %v5600 = vadd.f32 %v5598, %v5599
  %v5601 = vsel %vm2395, %v4967, 0.0
  %v5602 = vadd.f32 %v5600, %v5601
  %v5603 = vsel %vm2395, %v4968, 0.0
  %v5604 = vadd.f32 %v5602, %v5603
  %v5605 = vsel %vm2395, %v4969, 0.0
  %v5606 = vadd.f32 %v5604, %v5605
  %v5607 = vsel %vm2395, %v4970, 0.0
  %v5608 = vadd.f32 %v5606, %v5607
  %v5609 = vsel %vm2395, %v4971, 0.0
  %v5610 = vadd.f32 %v5608, %v5609
  %v5611 = vsel %vm2395, %v4972, 0.0
  %v5612 = vadd.f32 %v5610, %v5611
  %v5613 = vrot.slane %v5612, 4
  %v5614 = vadd.f32 %v5612, %v5613
  %v5615 = vrot.slane %v5614, 2
  %v5616 = vadd.f32 %v5614, %v5615
  %v5617 = vrot.slane %v5616, 1
  %v5618 = vadd.f32 %v5616, %v5617
  %v5619 = vsel %vm2395, %v4973, 0.0
  %v5620 = vsel %vm2395, %v4974, 0.0
  %v5621 = vadd.f32 %v5619, %v5620
  %v5622 = vsel %vm2395, %v4975, 0.0
  %v5623 = vadd.f32 %v5621, %v5622
  %v5624 = vsel %vm2395, %v4976, 0.0
  %v5625 = vadd.f32 %v5623, %v5624
  %v5626 = vsel %vm2395, %v4977, 0.0
  %v5627 = vadd.f32 %v5625, %v5626
  %v5628 = vsel %vm2395, %v4978, 0.0
  %v5629 = vadd.f32 %v5627, %v5628
  %v5630 = vsel %vm2395, %v4979, 0.0
  %v5631 = vadd.f32 %v5629, %v5630
  %v5632 = vsel %vm2395, %v4980, 0.0
  %v5633 = vadd.f32 %v5631, %v5632
  %v5634 = vrot.slane %v5633, 4
  %v5635 = vadd.f32 %v5633, %v5634
  %v5636 = vrot.slane %v5635, 2
  %v5637 = vadd.f32 %v5635, %v5636
  %v5638 = vrot.slane %v5637, 1
  %v5639 = vadd.f32 %v5637, %v5638
  %v5640 = vsel %vm2395, %v4981, 0.0
  %v5641 = vsel %vm2395, %v4982, 0.0
  %v5642 = vadd.f32 %v5640, %v5641
  %v5643 = vsel %vm2395, %v4983, 0.0
  %v5644 = vadd.f32 %v5642, %v5643
  %v5645 = vsel %vm2395, %v4984, 0.0
  %v5646 = vadd.f32 %v5644, %v5645
  %v5647 = vsel %vm2395, %v4985, 0.0
  %v5648 = vadd.f32 %v5646, %v5647
  %v5649 = vsel %vm2395, %v4986, 0.0
  %v5650 = vadd.f32 %v5648, %v5649
  %v5651 = vsel %vm2395, %v4987, 0.0
  %v5652 = vadd.f32 %v5650, %v5651
  %v5653 = vsel %vm2395, %v4988, 0.0
  %v5654 = vadd.f32 %v5652, %v5653
  %v5655 = vrot.slane %v5654, 4
  %v5656 = vadd.f32 %v5654, %v5655
  %v5657 = vrot.slane %v5656, 2
  %v5658 = vadd.f32 %v5656, %v5657
  %v5659 = vrot.slane %v5658, 1
  %v5660 = vadd.f32 %v5658, %v5659
  %v5661 = vmul.f32 %v5009, %v3068
  %v5662 = vmul.f32 %v5030, %v3068
  %v5663 = vmul.f32 %v5051, %v3068
  %v5664 = vmul.f32 %v5072, %v3068
  %v5665 = vmul.f32 %v5093, %v3068
  %v5666 = vmul.f32 %v5114, %v3068
  %v5667 = vmul.f32 %v5135, %v3068
  %v5668 = vmul.f32 %v5156, %v3068
  %v5669 = vmul.f32 %v5177, %v3068
  %v5670 = vmul.f32 %v5198, %v3068
  %v5671 = vmul.f32 %v5219, %v3068
  %v5672 = vmul.f32 %v5240, %v3068
  %v5673 = vmul.f32 %v5261, %v3068
  %v5674 = vmul.f32 %v5282, %v3068
  %v5675 = vmul.f32 %v5303, %v3068
  %v5676 = vmul.f32 %v5324, %v3068
  %v5677 = vmul.f32 %v5345, %v3068
  %v5678 = vmul.f32 %v5366, %v3068
  %v5679 = vmul.f32 %v5387, %v3068
  %v5680 = vmul.f32 %v5408, %v3068
  %v5681 = vmul.f32 %v5429, %v3068
  %v5682 = vmul.f32 %v5450, %v3068
  %v5683 = vmul.f32 %v5471, %v3068
  %v5684 = vmul.f32 %v5492, %v3068
  %v5685 = vmul.f32 %v5513, %v3068
  %v5686 = vmul.f32 %v5534, %v3068
  %v5687 = vmul.f32 %v5555, %v3068
  %v5688 = vmul.f32 %v5576, %v3068
  %v5689 = vmul.f32 %v5597, %v3068
  %v5690 = vmul.f32 %v5618, %v3068
  %v5691 = vmul.f32 %v5639, %v3068
  %v5692 = vmul.f32 %v5660, %v3068
  %v5693 = vld [vmem:[%s2] sm:$0xff]
  %v5694 = vld [vmem:[%s2 + $0x8] sm:$0xff]
  %v5695 = vld [vmem:[%s2 + $0x10] sm:$0xff]
  %v5696 = vld [vmem:[%s2 + $0x18] sm:$0xff]
  %v5697 = vld [vmem:[%s2 + $0x20] sm:$0xff]
  %v5698 = vld [vmem:[%s2 + $0x28] sm:$0xff]
  %v5699 = vld [vmem:[%s2 + $0x30] sm:$0xff]
  %v5700 = vld [vmem:[%s2 + $0x38] sm:$0xff]
  %v5701 = vld [vmem:[%s3] sm:$0x1]
  %v5703 = vlaneseq
  %v5704 = vshrl.u32 %v5703, 7
  %v5705 = vsub.s32 0, %v5704
  %v5706 = vrot.slane %v5701, %v5705
  %vm5740 = vcmask 1041409
  %v5741 = vsel %vm5740, %v5662, %v5661
  %vm5742 = vcmask 1042434
  %v5743 = vsel %vm5742, %v5663, %v5741
  %vm5744 = vcmask 1043459
  %v5745 = vsel %vm5744, %v5664, %v5743
  %vm5746 = vcmask 1044484
  %v5747 = vsel %vm5746, %v5665, %v5745
  %vm5748 = vcmask 1045509
  %v5749 = vsel %vm5748, %v5666, %v5747
  %vm5750 = vcmask 1046534
  %v5751 = vsel %vm5750, %v5667, %v5749
  %vm5752 = vcmask 1047559
  %v5753 = vsel %vm5752, %v5668, %v5751
  %v5754 = vsel %vm5740, %v5670, %v5669
  %v5755 = vsel %vm5742, %v5671, %v5754
  %v5756 = vsel %vm5744, %v5672, %v5755
  %v5757 = vsel %vm5746, %v5673, %v5756
  %v5758 = vsel %vm5748, %v5674, %v5757
  %v5759 = vsel %vm5750, %v5675, %v5758
  %v5760 = vsel %vm5752, %v5676, %v5759
  %v5761 = vsel %vm5740, %v5678, %v5677
  %v5762 = vsel %vm5742, %v5679, %v5761
  %v5763 = vsel %vm5744, %v5680, %v5762
  %v5764 = vsel %vm5746, %v5681, %v5763
  %v5765 = vsel %vm5748, %v5682, %v5764
  %v5766 = vsel %vm5750, %v5683, %v5765
  %v5767 = vsel %vm5752, %v5684, %v5766
  %v5768 = vsel %vm5740, %v5686, %v5685
  %v5769 = vsel %vm5742, %v5687, %v5768
  %v5770 = vsel %vm5744, %v5688, %v5769
  %v5771 = vsel %vm5746, %v5689, %v5770
  %v5772 = vsel %vm5748, %v5690, %v5771
  %v5773 = vsel %vm5750, %v5691, %v5772
  %v5774 = vsel %vm5752, %v5692, %v5773
  %v5775 = vsel %vm2395, %v5753, 0
  %v5777 = vsel %vm2395, %v5760, 0
  %v5779 = vsel %vm2395, %v5767, 0
  %v5781 = vsel %vm2395, %v5774, 0
  %5783 = vmatprep.subr.mxu0 0.0
  %5784 = vmatpush1.msra.mxu0 %v5693
  %5785 = vmatprep.subr.mxu0 0.0
  %5786 = vmatpush1.msra.mxu0 %v5694
  %5787 = vmatprep.subr.mxu0 0.0
  %5788 = vmatpush1.msra.mxu0 %v5695
  %5789 = vmatprep.subr.mxu0 0.0
  %5790 = vmatpush1.msra.mxu0 %v5696
  %5791 = vmatprep.subr.mxu0 0.0
  %5792 = vmatpush1.msra.mxu0 %v5697
  %5793 = vmatprep.subr.mxu0 0.0
  %5794 = vmatpush1.msra.mxu0 %v5698
  %5795 = vmatprep.subr.mxu0 0.0
  %5796 = vmatpush1.msra.mxu0 %v5699
  %5797 = vmatprep.subr.mxu0 0.0
  %5798 = vmatpush1.msra.mxu0 %v5700
  %5799 = vmatprep.subr.mxu0 0.0
  %5800 = vmatpush1.msra.mxu0 0.0
  %5801 = vmatprep.subr.mxu0 0.0
  %5802 = vmatpush1.msra.mxu0 0.0
  %5803 = vmatprep.subr.mxu0 0.0
  %5804 = vmatpush1.msra.mxu0 0.0
  %5805 = vmatprep.subr.mxu0 0.0
  %5806 = vmatpush1.msra.mxu0 0.0
  %5807 = vmatprep.subr.mxu0 0.0
  %5808 = vmatpush1.msra.mxu0 0.0
  %5809 = vmatprep.subr.mxu0 0.0
  %5810 = vmatpush1.msra.mxu0 0.0
  %5811 = vmatprep.subr.mxu0 0.0
  %5812 = vmatpush1.msra.mxu0 0.0
  %5813 = vmatprep.subr.mxu0 0.0
  %5814 = vmatpush1.msra.mxu0 0.0
  %5815 = vmatprep.subr.mxu0 0.0
  %5816 = vmatpush1.msra.mxu0 0.0
  %5817 = vmatprep.subr.mxu0 0.0
  %5818 = vmatpush1.msra.mxu0 0.0
  %5819 = vmatprep.subr.mxu0 0.0
  %5820 = vmatpush1.msra.mxu0 0.0
  %5821 = vmatprep.subr.mxu0 0.0
  %5822 = vmatpush1.msra.mxu0 0.0
  %5823 = vmatprep.subr.mxu0 0.0
  %5824 = vmatpush1.msra.mxu0 0.0
  %5825 = vmatprep.subr.mxu0 0.0
  %5826 = vmatpush1.msra.mxu0 0.0
  %5827 = vmatprep.subr.mxu0 0.0
  %5828 = vmatpush1.msra.mxu0 0.0
  %5829 = vmatprep.subr.mxu0 0.0
  %5830 = vmatpush1.msra.mxu0 0.0
  %5831 = vmatprep.subr.mxu0 0.0
  %5832 = vmatpush1.msra.mxu0 0.0
  %5833 = vmatprep.subr.mxu0 0.0
  %5834 = vmatpush1.msra.mxu0 0.0
  %5835 = vmatprep.subr.mxu0 0.0
  %5836 = vmatpush1.msra.mxu0 0.0
  %5837 = vmatprep.subr.mxu0 0.0
  %5838 = vmatpush1.msra.mxu0 0.0
  %5839 = vmatprep.subr.mxu0 0.0
  %5840 = vmatpush1.msra.mxu0 0.0
  %5841 = vmatprep.subr.mxu0 0.0
  %5842 = vmatpush1.msra.mxu0 0.0
  %5843 = vmatprep.subr.mxu0 0.0
  %5844 = vmatpush1.msra.mxu0 0.0
  %5845 = vmatprep.subr.mxu0 0.0
  %5846 = vmatpush1.msra.mxu0 0.0
  %5847 = vmatprep.mubr.f32.mxu0 0.0
  %5848 = vmatmul.mubr.f32.gmra.mrb[0].mxu0 %v5775
  %v5849 = vpop.f32.mrb[0].mxu0
  %v5850 = vadd.f32 %v5706, %v5849
  %v5851 = vpop.f32.mrb[0].mxu0
  %5852 = vmatprep.mubr.f32.mxu0 0.0
  %5853 = vmatmul.mubr.f32.gmra.mrb[0].mxu0 %v5777
  %v5854 = vpop.f32.mrb[0].mxu0
  %v5855 = vadd.f32 %v5706, %v5854
  %v5856 = vpop.f32.mrb[0].mxu0
  %5857 = vmatprep.mubr.f32.mxu0 0.0
  %5858 = vmatmul.mubr.f32.gmra.mrb[0].mxu0 %v5779
  %v5859 = vpop.f32.mrb[0].mxu0
  %v5860 = vadd.f32 %v5706, %v5859
  %v5861 = vpop.f32.mrb[0].mxu0
  %5862 = vmatprep.mubr.f32.mxu0 0.0
  %5863 = vmatmul.mubr.f32.gmra.mrb[0].mxu0 %v5781
  %v5864 = vpop.f32.mrb[0].mxu0
  %v5865 = vadd.f32 %v5706, %v5864
  %v5866 = vpop.f32.mrb[0].mxu0
  %5867 = vdwg.mxu0
  %5868 = vst [vmem:[%s4] sm:$0xff] %v5850
  %5869 = vst [vmem:[%s4 + $0x8] sm:$0xff] %v5855
  %5870 = vst [vmem:[%s4 + $0x10] sm:$0xff] %v5860
  %5871 = vst [vmem:[%s4 + $0x18] sm:$0xff] %v5865
  // Predicated region
  $region18: #{wtii_preact_resnet_forward.1} parent=0 // pred_check
    _
  $region19: #{wtii_preact_resnet_forward.1} parent=0 // pred_check_branch
    %5873 = sbr.rel (0) target = $region21
  $region20: #{wtii_preact_resnet_forward.1} parent=0 // pred_region
    _
  $region21: #{wtii_preact_resnet_forward.1} parent=0 // pred_fallthru
    _
  // Predicated region
  $region22: #{wtii_preact_resnet_forward.1} parent=0 // pred_check
    _
  $region23: #{wtii_preact_resnet_forward.1} parent=0 // pred_check_branch
    %5875 = sbr.rel (0) target = $region25
  $region24: #{wtii_preact_resnet_forward.1} parent=0 // pred_region
    _
  $region25: #{wtii_preact_resnet_forward.1} parent=0 // pred_fallthru
    _

</llo_original>
